<compile_context>
chip_gen: v6e
topology: v6e:2x2x1
jax: 0.10.0
libtpu: 0.0.40
codegen_flags: <defaults>
</compile_context>

<pallas_src>
import functools

import numpy as np
import jax
import jax.numpy as jnp
from jax import lax
from jax.experimental import pallas as pl
from jax.experimental.pallas import tpu as pltpu


# --------------------------------- kernel ---------------------------------- #

def _gating_kernel(x_ref, w1_ref, b1_ref, w2_ref, b2_ref, w1d_ref, b1d_ref,
                   mask_ref, pool_ref, o_ref, vol_ref, cols_ref, *,
                   C, T, WP, SP, VP, G):
    """Fused Gating forward for one batch element.

    x_ref   : (1, C, VP)        zero-padded, flattened input volume (padded on host)
    w1_ref  : (C, 27*C)         conv1 weights folded tap-major / ci-minor
    b1_ref  : (C, 1)
    w2_ref  : (C, 27*C)         conv2 weights (same folding)
    b2_ref  : (C, 1)
    w1d_ref : (E, 3*C)          conv1d weights folded tap-major / ci-minor
    b1d_ref : (E, 1)
    mask_ref: (1, VP)           1.0 at interior positions of the padded flat grid, else 0
    pool_ref: (VP, T)           GAP pooling matrix (1/(H*W) at interior positions of frame t)
    o_ref   : (1, E, T)         softmax gating output
    vol_ref : (C, VP + 2*G)     VMEM scratch: padded flat volume (+ guard lanes)
    cols_ref: (27*C, VP)        VMEM scratch: im2col block
    """
    # ---- 1. stage the padded flat volume into the guarded scratch -----------------
    # Guards are zeroed every step (cheap: 2 stores) so the kernel is megacore-safe.
    vol_ref[:, 0:G] = jnp.zeros((C, G), jnp.float32)
    vol_ref[:, G + VP:G + VP + G] = jnp.zeros((C, G), jnp.float32)
    vol_ref[:, G:G + VP] = x_ref[0]                         # one lane-dense copy

    def conv3x3x3_relu(w_ref, b_ref):
        # im2col: row block (tap*C .. tap*C+C) = volume shifted by the tap offset.
        # All 27 shifts are contiguous lane slices of the flat padded grid.
        for tap in range(27):
            kd, rem = divmod(tap, 9)
            kh, kw = divmod(rem, 3)
            off = (kd - 1) * SP + (kh - 1) * WP + (kw - 1)
            cols_ref[tap * C:(tap + 1) * C, :] = vol_ref[:, G + off:G + off + VP]
        # Single MXU matmul: (C, 27C) x (27C, VP) -> (C, VP), f32 accumulate.
        acc = jnp.dot(w_ref[...], cols_ref[...], preferred_element_type=jnp.float32)
        return jnp.maximum(acc + b_ref[...], 0.0)

    # ---- 2. conv1 + ReLU; mask zeroes the padded-border positions so the result can
    #         directly serve as the zero-padded input of conv2 (stays in VMEM). -----
    vol_ref[:, G:G + VP] = conv3x3x3_relu(w1_ref, b1_ref) * mask_ref[...]

    # ---- 3. conv2 + ReLU (no border mask needed: the pooling matrix ignores them) --
    feat = conv3x3x3_relu(w2_ref, b2_ref)                   # (C, VP)

    # ---- 4. global average pool over (H, W): one MXU matmul with the pooling matrix
    g = jnp.dot(feat, pool_ref[...], preferred_element_type=jnp.float32)   # (C, T)

    # ---- 5. Conv1d(C -> E, k=3, pad=1) folded into one (E, 3C) x (3C, T) matmul ----
    zcol = jnp.zeros((C, 1), jnp.float32)
    xcat = jnp.concatenate([
        jnp.concatenate([zcol, g[:, :T - 1]], axis=1),   # tap k = 0 (left neighbor)
        g,                                               # tap k = 1 (center)
        jnp.concatenate([g[:, 1:], zcol], axis=1),       # tap k = 2 (right neighbor)
    ], axis=0)                                           # (3C, T)
    y = jnp.dot(w1d_ref[...], xcat, preferred_element_type=jnp.float32) + b1d_ref[...]

    # ---- 6. softmax over the expert axis (dim=1 of the NCHW-style output) ----------
    m = jnp.max(y, axis=0, keepdims=True)
    e = jnp.exp(y - m)
    s = jnp.sum(e, axis=0, keepdims=True)
    r = pl.reciprocal(s, approx=True)
    r = r * (2.0 - s * r)            # one Newton step: full f32 accuracy, EUP-based
    o_ref[0] = e * r


# ------------------------------ host wrapper -------------------------------- #

def gating_forward(x, params):
    """Pallas implementation of Gating.forward. x: (N, C, T, H, W) -> (N, 4, T)."""
    N, C, T, H, W = x.shape
    E = params["w1d"].shape[0]
    WP, HP, TP = W + 2, H + 2, T + 2
    SP = HP * WP                 # flattened padded frame size
    VP = TP * SP                 # flattened padded volume size
    G = 128                      # lane-aligned guard so every tap slice stays in-bounds
    L = VP + 2 * G

    # Zero-pad + flatten the input on host (tiny, pure layout plumbing): (N, C, VP).
    x_pad = jnp.pad(x, ((0, 0), (0, 0), (1, 1), (1, 1), (1, 1))).reshape(N, C, VP)

    # Fold conv3d weights (Cout, Cin, 3,3,3) -> (Cout, 27*Cin), tap-major / ci-minor,
    # matching the im2col row order built inside the kernel.
    w1f = jnp.transpose(params["w1"], (0, 2, 3, 4, 1)).reshape(C, 27 * C)
    w2f = jnp.transpose(params["w2"], (0, 2, 3, 4, 1)).reshape(C, 27 * C)
    b1 = params["b1"].reshape(C, 1)
    b2 = params["b2"].reshape(C, 1)
    # Fold conv1d weights (E, C, 3) -> (E, 3*C), tap-major / ci-minor.
    w1df = jnp.transpose(params["w1d"], (0, 2, 1)).reshape(E, 3 * C)
    b1d = params["b1d"].reshape(E, 1)

    # Interior mask + GAP pooling matrix of the padded flat grid (tiny host constants).
    v = np.arange(VP)
    tp, rem = v // SP, v % SP
    hp, wp = rem // WP, rem % WP
    interior = ((tp >= 1) & (tp <= T) & (hp >= 1) & (hp <= H) & (wp >= 1) & (wp <= W))
    mask = jnp.asarray(interior.astype(np.float32)[None, :])               # (1, VP)
    pool_np = np.zeros((VP, T), np.float32)
    for t in range(T):
        pool_np[:, t] = (interior & (tp == t + 1)).astype(np.float32) / float(H * W)
    pool = jnp.asarray(pool_np)                                            # (VP, T)

    kernel = functools.partial(_gating_kernel, C=C, T=T,
                               WP=WP, SP=SP, VP=VP, G=G)
    const2 = lambda n: (0, 0)

    return pl.pallas_call(
        kernel,
        out_shape=jax.ShapeDtypeStruct((N, E, T), jnp.float32),
        grid=(N,),
        in_specs=[
            pl.BlockSpec((1, C, VP), lambda n: (n, 0, 0)),
            pl.BlockSpec((C, 27 * C), const2),
            pl.BlockSpec((C, 1), const2),
            pl.BlockSpec((C, 27 * C), const2),
            pl.BlockSpec((C, 1), const2),
            pl.BlockSpec((E, 3 * C), const2),
            pl.BlockSpec((E, 1), const2),
            pl.BlockSpec((1, VP), const2),
            pl.BlockSpec((VP, T), const2),
        ],
        out_specs=pl.BlockSpec((1, E, T), lambda n: (n, 0, 0)),
        scratch_shapes=[
            pltpu.VMEM((C, L), jnp.float32),          # padded flat volume (reused by both convs)
            pltpu.VMEM((27 * C, VP), jnp.float32),    # im2col block
        ],
        compiler_params=pltpu.CompilerParams(dimension_semantics=("parallel",)),
    )(x_pad, w1f, b1, w2f, b2, w1df, b1d, mask, pool)


# --------------------------- pure-JAX reference ----------------------------- #

def gating_reference(x, p):
    dn3 = ("NCDHW", "OIDHW", "NCDHW")
    f = lax.conv_general_dilated(x, p["w1"], (1, 1, 1), ((1, 1), (1, 1), (1, 1)),
                                 dimension_numbers=dn3, precision=lax.Precision.HIGHEST)
    f = jax.nn.relu(f + p["b1"][None, :, None, None, None])
    f = lax.conv_general_dilated(f, p["w2"], (1, 1, 1), ((1, 1), (1, 1), (1, 1)),
                                 dimension_numbers=dn3, precision=lax.Precision.HIGHEST)
    f = jax.nn.relu(f + p["b2"][None, :, None, None, None])
    g = jnp.mean(f, axis=(3, 4))                               # AdaptiveAvgPool3d((T,1,1)) + squeeze
    dn1 = ("NCH", "OIH", "NCH")
    y = lax.conv_general_dilated(g, p["w1d"], (1,), ((1, 1),),
                                 dimension_numbers=dn1, precision=lax.Precision.HIGHEST)
    y = y + p["b1d"][None, :, None]
    return jax.nn.softmax(y, axis=1)


# ----------------------------------- main ----------------------------------- #

if __name__ == "__main__":
    # base_filter=4, video_length=8 (num_expert is unused by forward: the PyTorch module
    # hard-codes 4 output channels in cov1d).
    N, C, T, H, W = 2, 4, 8, 8, 8

    key = jax.random.PRNGKey(0)
    kx, k1, k2, k3, k4, k5, k6 = jax.random.split(key, 7)
    x = jax.random.normal(kx, (N, C, T, H, W), jnp.float32)
    params = {
        "w1": jax.random.normal(k1, (C, C, 3, 3, 3), jnp.float32) / (C * 27) ** 0.5,
        "b1": 0.1 * jax.random.normal(k2, (C,), jnp.float32),
        "w2": jax.random.normal(k3, (C, C, 3, 3, 3), jnp.float32) / (C * 27) ** 0.5,
        "b2": 0.1 * jax.random.normal(k4, (C,), jnp.float32),
        "w1d": jax.random.normal(k5, (4, C, 3), jnp.float32) / (C * 3) ** 0.5,
        "b1d": 0.1 * jax.random.normal(k6, (4,), jnp.float32),
    }

    out = jax.block_until_ready(gating_forward(x, params))
    ref = jax.block_until_ready(gating_reference(x, params))

    assert out.shape == (N, 4, T), out.shape
    # Tolerance leaves headroom for reduced-precision f32 MXU passes on some generations;
    # any layout / weight-folding bug would produce errors orders of magnitude larger.
    if not jnp.allclose(out, ref, atol=2e-3, rtol=2e-3):
        raise AssertionError(f"mismatch, max abs err = {float(jnp.max(jnp.abs(out - ref)))}")
    print("KERNEL_OK")
</pallas_src>

<mosaic_0001>
module attributes {stable_mosaic.version = 11 : i64} {
  func.func @_gating_kernel(%arg0: i32, %arg1: memref<1x4x1000xf32, #tpu.memory_space<vmem>>, %arg2: memref<4x108xf32, #tpu.memory_space<vmem>>, %arg3: memref<4x1xf32, #tpu.memory_space<vmem>>, %arg4: memref<4x108xf32, #tpu.memory_space<vmem>>, %arg5: memref<4x1xf32, #tpu.memory_space<vmem>>, %arg6: memref<4x12xf32, #tpu.memory_space<vmem>>, %arg7: memref<4x1xf32, #tpu.memory_space<vmem>>, %arg8: memref<1x1000xf32, #tpu.memory_space<vmem>>, %arg9: memref<1000x8xf32, #tpu.memory_space<vmem>>, %arg10: memref<1x4x8xf32, #tpu.memory_space<vmem>>, %arg11: memref<4x1256xf32, #tpu.memory_space<vmem>>, %arg12: memref<108x1000xf32, #tpu.memory_space<vmem>>) attributes {dimension_semantics = [#tpu.dimension_semantics<parallel>], iteration_bounds = array<i64: 2>, scalar_prefetch = 0 : i64, scratch_operands = 2 : i64, tpu.core_type = #tpu.core_type<tc>, window_params = [{transform_indices = @transform_0, window_bounds = array<i64: 1, 4, 1000>}, {pipeline_mode = #tpu.pipeline_mode<synchronous>, transform_indices = @transform_1, window_bounds = array<i64: 4, 108>}, {pipeline_mode = #tpu.pipeline_mode<synchronous>, transform_indices = @transform_2, window_bounds = array<i64: 4, 1>}, {pipeline_mode = #tpu.pipeline_mode<synchronous>, transform_indices = @transform_3, window_bounds = array<i64: 4, 108>}, {pipeline_mode = #tpu.pipeline_mode<synchronous>, transform_indices = @transform_4, window_bounds = array<i64: 4, 1>}, {pipeline_mode = #tpu.pipeline_mode<synchronous>, transform_indices = @transform_5, window_bounds = array<i64: 4, 12>}, {pipeline_mode = #tpu.pipeline_mode<synchronous>, transform_indices = @transform_6, window_bounds = array<i64: 4, 1>}, {pipeline_mode = #tpu.pipeline_mode<synchronous>, transform_indices = @transform_7, window_bounds = array<i64: 1, 1000>}, {pipeline_mode = #tpu.pipeline_mode<synchronous>, transform_indices = @transform_8, window_bounds = array<i64: 1000, 8>}, {transform_indices = @transform_9, window_bounds = array<i64: 1, 4, 8>}]} {
    %cst = arith.constant 0.000000e+00 : f32
    %0 = vector.broadcast %cst : f32 to vector<4x128xf32>
    %c0 = arith.constant 0 : index
    %c0_0 = arith.constant 0 : index
    %1 = vector.load %arg11[%c0, %c0_0] : memref<4x1256xf32, #tpu.memory_space<vmem>>, vector<4x128xf32>
    tpu.vector_store %arg11[%c0, %c0_0], %0 {strides = array<i32>} : memref<4x1256xf32, #tpu.memory_space<vmem>>, vector<4x128xf32>,
    %cst_1 = arith.constant 0.000000e+00 : f32
    %2 = vector.broadcast %cst_1 : f32 to vector<4x128xf32>
    %c0_2 = arith.constant 0 : index
    %c1128 = arith.constant 1128 : index
    %3 = vector.load %arg11[%c0_2, %c1128] : memref<4x1256xf32, #tpu.memory_space<vmem>>, vector<4x128xf32>
    tpu.vector_store %arg11[%c0_2, %c1128], %2 {strides = array<i32>} : memref<4x1256xf32, #tpu.memory_space<vmem>>, vector<4x128xf32>,
    %c0_3 = arith.constant 0 : index
    %c0_4 = arith.constant 0 : index
    %c0_5 = arith.constant 0 : index
    %4 = vector.load %arg1[%c0_3, %c0_4, %c0_5] : memref<1x4x1000xf32, #tpu.memory_space<vmem>>, vector<1x4x1000xf32>
    %5 = vector.shape_cast %4 : vector<1x4x1000xf32> to vector<4x1000xf32>
    %c0_6 = arith.constant 0 : index
    %c128 = arith.constant 128 : index
    %6 = vector.load %arg11[%c0_6, %c128] : memref<4x1256xf32, #tpu.memory_space<vmem>>, vector<4x1000xf32>
    tpu.vector_store %arg11[%c0_6, %c128], %5 {strides = array<i32>} : memref<4x1256xf32, #tpu.memory_space<vmem>>, vector<4x1000xf32>,
    %c0_7 = arith.constant 0 : index
    %c17 = arith.constant 17 : index
    %7 = vector.load %arg11[%c0_7, %c17] : memref<4x1256xf32, #tpu.memory_space<vmem>>, vector<4x1000xf32>
    %c0_8 = arith.constant 0 : index
    %c0_9 = arith.constant 0 : index
    %8 = vector.load %arg12[%c0_8, %c0_9] : memref<108x1000xf32, #tpu.memory_space<vmem>>, vector<4x1000xf32>
    tpu.vector_store %arg12[%c0_8, %c0_9], %7 {strides = array<i32>} : memref<108x1000xf32, #tpu.memory_space<vmem>>, vector<4x1000xf32>,
    %c0_10 = arith.constant 0 : index
    %c18 = arith.constant 18 : index
    %9 = vector.load %arg11[%c0_10, %c18] : memref<4x1256xf32, #tpu.memory_space<vmem>>, vector<4x1000xf32>
    %c4 = arith.constant 4 : index
    %c0_11 = arith.constant 0 : index
    %10 = vector.load %arg12[%c4, %c0_11] : memref<108x1000xf32, #tpu.memory_space<vmem>>, vector<4x1000xf32>
    tpu.vector_store %arg12[%c4, %c0_11], %9 {strides = array<i32>} : memref<108x1000xf32, #tpu.memory_space<vmem>>, vector<4x1000xf32>,
    %c0_12 = arith.constant 0 : index
    %c19 = arith.constant 19 : index
    %11 = vector.load %arg11[%c0_12, %c19] : memref<4x1256xf32, #tpu.memory_space<vmem>>, vector<4x1000xf32>
    %c8 = arith.constant 8 : index
    %c0_13 = arith.constant 0 : index
    %12 = vector.load %arg12[%c8, %c0_13] : memref<108x1000xf32, #tpu.memory_space<vmem>>, vector<4x1000xf32>
    tpu.vector_store %arg12[%c8, %c0_13], %11 {strides = array<i32>} : memref<108x1000xf32, #tpu.memory_space<vmem>>, vector<4x1000xf32>,
    %c0_14 = arith.constant 0 : index
    %c27 = arith.constant 27 : index
    %13 = vector.load %arg11[%c0_14, %c27] : memref<4x1256xf32, #tpu.memory_space<vmem>>, vector<4x1000xf32>
    %c12 = arith.constant 12 : index
    %c0_15 = arith.constant 0 : index
    %14 = vector.load %arg12[%c12, %c0_15] : memref<108x1000xf32, #tpu.memory_space<vmem>>, vector<4x1000xf32>
    tpu.vector_store %arg12[%c12, %c0_15], %13 {strides = array<i32>} : memref<108x1000xf32, #tpu.memory_space<vmem>>, vector<4x1000xf32>,
    %c0_16 = arith.constant 0 : index
    %c28 = arith.constant 28 : index
    %15 = vector.load %arg11[%c0_16, %c28] : memref<4x1256xf32, #tpu.memory_space<vmem>>, vector<4x1000xf32>
    %c16 = arith.constant 16 : index
    %c0_17 = arith.constant 0 : index
    %16 = vector.load %arg12[%c16, %c0_17] : memref<108x1000xf32, #tpu.memory_space<vmem>>, vector<4x1000xf32>
    tpu.vector_store %arg12[%c16, %c0_17], %15 {strides = array<i32>} : memref<108x1000xf32, #tpu.memory_space<vmem>>, vector<4x1000xf32>,
    %c0_18 = arith.constant 0 : index
    %c29 = arith.constant 29 : index
    %17 = vector.load %arg11[%c0_18, %c29] : memref<4x1256xf32, #tpu.memory_space<vmem>>, vector<4x1000xf32>
    %c20 = arith.constant 20 : index
    %c0_19 = arith.constant 0 : index
    %18 = vector.load %arg12[%c20, %c0_19] : memref<108x1000xf32, #tpu.memory_space<vmem>>, vector<4x1000xf32>
    tpu.vector_store %arg12[%c20, %c0_19], %17 {strides = array<i32>} : memref<108x1000xf32, #tpu.memory_space<vmem>>, vector<4x1000xf32>,
    %c0_20 = arith.constant 0 : index
    %c37 = arith.constant 37 : index
    %19 = vector.load %arg11[%c0_20, %c37] : memref<4x1256xf32, #tpu.memory_space<vmem>>, vector<4x1000xf32>
    %c24 = arith.constant 24 : index
    %c0_21 = arith.constant 0 : index
    %20 = vector.load %arg12[%c24, %c0_21] : memref<108x1000xf32, #tpu.memory_space<vmem>>, vector<4x1000xf32>
    tpu.vector_store %arg12[%c24, %c0_21], %19 {strides = array<i32>} : memref<108x1000xf32, #tpu.memory_space<vmem>>, vector<4x1000xf32>,
    %c0_22 = arith.constant 0 : index
    %c38 = arith.constant 38 : index
    %21 = vector.load %arg11[%c0_22, %c38] : memref<4x1256xf32, #tpu.memory_space<vmem>>, vector<4x1000xf32>
    %c28_23 = arith.constant 28 : index
    %c0_24 = arith.constant 0 : index
    %22 = vector.load %arg12[%c28_23, %c0_24] : memref<108x1000xf32, #tpu.memory_space<vmem>>, vector<4x1000xf32>
    tpu.vector_store %arg12[%c28_23, %c0_24], %21 {strides = array<i32>} : memref<108x1000xf32, #tpu.memory_space<vmem>>, vector<4x1000xf32>,
    %c0_25 = arith.constant 0 : index
    %c39 = arith.constant 39 : index
    %23 = vector.load %arg11[%c0_25, %c39] : memref<4x1256xf32, #tpu.memory_space<vmem>>, vector<4x1000xf32>
    %c32 = arith.constant 32 : index
    %c0_26 = arith.constant 0 : index
    %24 = vector.load %arg12[%c32, %c0_26] : memref<108x1000xf32, #tpu.memory_space<vmem>>, vector<4x1000xf32>
    tpu.vector_store %arg12[%c32, %c0_26], %23 {strides = array<i32>} : memref<108x1000xf32, #tpu.memory_space<vmem>>, vector<4x1000xf32>,
    %c0_27 = arith.constant 0 : index
    %c117 = arith.constant 117 : index
    %25 = vector.load %arg11[%c0_27, %c117] : memref<4x1256xf32, #tpu.memory_space<vmem>>, vector<4x1000xf32>
    %c36 = arith.constant 36 : index
    %c0_28 = arith.constant 0 : index
    %26 = vector.load %arg12[%c36, %c0_28] : memref<108x1000xf32, #tpu.memory_space<vmem>>, vector<4x1000xf32>
    tpu.vector_store %arg12[%c36, %c0_28], %25 {strides = array<i32>} : memref<108x1000xf32, #tpu.memory_space<vmem>>, vector<4x1000xf32>,
    %c0_29 = arith.constant 0 : index
    %c118 = arith.constant 118 : index
    %27 = vector.load %arg11[%c0_29, %c118] : memref<4x1256xf32, #tpu.memory_space<vmem>>, vector<4x1000xf32>
    %c40 = arith.constant 40 : index
    %c0_30 = arith.constant 0 : index
    %28 = vector.load %arg12[%c40, %c0_30] : memref<108x1000xf32, #tpu.memory_space<vmem>>, vector<4x1000xf32>
    tpu.vector_store %arg12[%c40, %c0_30], %27 {strides = array<i32>} : memref<108x1000xf32, #tpu.memory_space<vmem>>, vector<4x1000xf32>,
    %c0_31 = arith.constant 0 : index
    %c119 = arith.constant 119 : index
    %29 = vector.load %arg11[%c0_31, %c119] : memref<4x1256xf32, #tpu.memory_space<vmem>>, vector<4x1000xf32>
    %c44 = arith.constant 44 : index
    %c0_32 = arith.constant 0 : index
    %30 = vector.load %arg12[%c44, %c0_32] : memref<108x1000xf32, #tpu.memory_space<vmem>>, vector<4x1000xf32>
    tpu.vector_store %arg12[%c44, %c0_32], %29 {strides = array<i32>} : memref<108x1000xf32, #tpu.memory_space<vmem>>, vector<4x1000xf32>,
    %c0_33 = arith.constant 0 : index
    %c127 = arith.constant 127 : index
    %31 = vector.load %arg11[%c0_33, %c127] : memref<4x1256xf32, #tpu.memory_space<vmem>>, vector<4x1000xf32>
    %c48 = arith.constant 48 : index
    %c0_34 = arith.constant 0 : index
    %32 = vector.load %arg12[%c48, %c0_34] : memref<108x1000xf32, #tpu.memory_space<vmem>>, vector<4x1000xf32>
    tpu.vector_store %arg12[%c48, %c0_34], %31 {strides = array<i32>} : memref<108x1000xf32, #tpu.memory_space<vmem>>, vector<4x1000xf32>,
    %c0_35 = arith.constant 0 : index
    %c128_36 = arith.constant 128 : index
    %33 = vector.load %arg11[%c0_35, %c128_36] : memref<4x1256xf32, #tpu.memory_space<vmem>>, vector<4x1000xf32>
    %c52 = arith.constant 52 : index
    %c0_37 = arith.constant 0 : index
    %34 = vector.load %arg12[%c52, %c0_37] : memref<108x1000xf32, #tpu.memory_space<vmem>>, vector<4x1000xf32>
    tpu.vector_store %arg12[%c52, %c0_37], %33 {strides = array<i32>} : memref<108x1000xf32, #tpu.memory_space<vmem>>, vector<4x1000xf32>,
    %c0_38 = arith.constant 0 : index
    %c129 = arith.constant 129 : index
    %35 = vector.load %arg11[%c0_38, %c129] : memref<4x1256xf32, #tpu.memory_space<vmem>>, vector<4x1000xf32>
    %c56 = arith.constant 56 : index
    %c0_39 = arith.constant 0 : index
    %36 = vector.load %arg12[%c56, %c0_39] : memref<108x1000xf32, #tpu.memory_space<vmem>>, vector<4x1000xf32>
    tpu.vector_store %arg12[%c56, %c0_39], %35 {strides = array<i32>} : memref<108x1000xf32, #tpu.memory_space<vmem>>, vector<4x1000xf32>,
    %c0_40 = arith.constant 0 : index
    %c137 = arith.constant 137 : index
    %37 = vector.load %arg11[%c0_40, %c137] : memref<4x1256xf32, #tpu.memory_space<vmem>>, vector<4x1000xf32>
    %c60 = arith.constant 60 : index
    %c0_41 = arith.constant 0 : index
    %38 = vector.load %arg12[%c60, %c0_41] : memref<108x1000xf32, #tpu.memory_space<vmem>>, vector<4x1000xf32>
    tpu.vector_store %arg12[%c60, %c0_41], %37 {strides = array<i32>} : memref<108x1000xf32, #tpu.memory_space<vmem>>, vector<4x1000xf32>,
    %c0_42 = arith.constant 0 : index
    %c138 = arith.constant 138 : index
    %39 = vector.load %arg11[%c0_42, %c138] : memref<4x1256xf32, #tpu.memory_space<vmem>>, vector<4x1000xf32>
    %c64 = arith.constant 64 : index
    %c0_43 = arith.constant 0 : index
    %40 = vector.load %arg12[%c64, %c0_43] : memref<108x1000xf32, #tpu.memory_space<vmem>>, vector<4x1000xf32>
    tpu.vector_store %arg12[%c64, %c0_43], %39 {strides = array<i32>} : memref<108x1000xf32, #tpu.memory_space<vmem>>, vector<4x1000xf32>,
    %c0_44 = arith.constant 0 : index
    %c139 = arith.constant 139 : index
    %41 = vector.load %arg11[%c0_44, %c139] : memref<4x1256xf32, #tpu.memory_space<vmem>>, vector<4x1000xf32>
    %c68 = arith.constant 68 : index
    %c0_45 = arith.constant 0 : index
    %42 = vector.load %arg12[%c68, %c0_45] : memref<108x1000xf32, #tpu.memory_space<vmem>>, vector<4x1000xf32>
    tpu.vector_store %arg12[%c68, %c0_45], %41 {strides = array<i32>} : memref<108x1000xf32, #tpu.memory_space<vmem>>, vector<4x1000xf32>,
    %c0_46 = arith.constant 0 : index
    %c217 = arith.constant 217 : index
    %43 = vector.load %arg11[%c0_46, %c217] : memref<4x1256xf32, #tpu.memory_space<vmem>>, vector<4x1000xf32>
    %c72 = arith.constant 72 : index
    %c0_47 = arith.constant 0 : index
    %44 = vector.load %arg12[%c72, %c0_47] : memref<108x1000xf32, #tpu.memory_space<vmem>>, vector<4x1000xf32>
    tpu.vector_store %arg12[%c72, %c0_47], %43 {strides = array<i32>} : memref<108x1000xf32, #tpu.memory_space<vmem>>, vector<4x1000xf32>,
    %c0_48 = arith.constant 0 : index
    %c218 = arith.constant 218 : index
    %45 = vector.load %arg11[%c0_48, %c218] : memref<4x1256xf32, #tpu.memory_space<vmem>>, vector<4x1000xf32>
    %c76 = arith.constant 76 : index
    %c0_49 = arith.constant 0 : index
    %46 = vector.load %arg12[%c76, %c0_49] : memref<108x1000xf32, #tpu.memory_space<vmem>>, vector<4x1000xf32>
    tpu.vector_store %arg12[%c76, %c0_49], %45 {strides = array<i32>} : memref<108x1000xf32, #tpu.memory_space<vmem>>, vector<4x1000xf32>,
    %c0_50 = arith.constant 0 : index
    %c219 = arith.constant 219 : index
    %47 = vector.load %arg11[%c0_50, %c219] : memref<4x1256xf32, #tpu.memory_space<vmem>>, vector<4x1000xf32>
    %c80 = arith.constant 80 : index
    %c0_51 = arith.constant 0 : index
    %48 = vector.load %arg12[%c80, %c0_51] : memref<108x1000xf32, #tpu.memory_space<vmem>>, vector<4x1000xf32>
    tpu.vector_store %arg12[%c80, %c0_51], %47 {strides = array<i32>} : memref<108x1000xf32, #tpu.memory_space<vmem>>, vector<4x1000xf32>,
    %c0_52 = arith.constant 0 : index
    %c227 = arith.constant 227 : index
    %49 = vector.load %arg11[%c0_52, %c227] : memref<4x1256xf32, #tpu.memory_space<vmem>>, vector<4x1000xf32>
    %c84 = arith.constant 84 : index
    %c0_53 = arith.constant 0 : index
    %50 = vector.load %arg12[%c84, %c0_53] : memref<108x1000xf32, #tpu.memory_space<vmem>>, vector<4x1000xf32>
    tpu.vector_store %arg12[%c84, %c0_53], %49 {strides = array<i32>} : memref<108x1000xf32, #tpu.memory_space<vmem>>, vector<4x1000xf32>,
    %c0_54 = arith.constant 0 : index
    %c228 = arith.constant 228 : index
    %51 = vector.load %arg11[%c0_54, %c228] : memref<4x1256xf32, #tpu.memory_space<vmem>>, vector<4x1000xf32>
    %c88 = arith.constant 88 : index
    %c0_55 = arith.constant 0 : index
    %52 = vector.load %arg12[%c88, %c0_55] : memref<108x1000xf32, #tpu.memory_space<vmem>>, vector<4x1000xf32>
    tpu.vector_store %arg12[%c88, %c0_55], %51 {strides = array<i32>} : memref<108x1000xf32, #tpu.memory_space<vmem>>, vector<4x1000xf32>,
    %c0_56 = arith.constant 0 : index
    %c229 = arith.constant 229 : index
    %53 = vector.load %arg11[%c0_56, %c229] : memref<4x1256xf32, #tpu.memory_space<vmem>>, vector<4x1000xf32>
    %c92 = arith.constant 92 : index
    %c0_57 = arith.constant 0 : index
    %54 = vector.load %arg12[%c92, %c0_57] : memref<108x1000xf32, #tpu.memory_space<vmem>>, vector<4x1000xf32>
    tpu.vector_store %arg12[%c92, %c0_57], %53 {strides = array<i32>} : memref<108x1000xf32, #tpu.memory_space<vmem>>, vector<4x1000xf32>,
    %c0_58 = arith.constant 0 : index
    %c237 = arith.constant 237 : index
    %55 = vector.load %arg11[%c0_58, %c237] : memref<4x1256xf32, #tpu.memory_space<vmem>>, vector<4x1000xf32>
    %c96 = arith.constant 96 : index
    %c0_59 = arith.constant 0 : index
    %56 = vector.load %arg12[%c96, %c0_59] : memref<108x1000xf32, #tpu.memory_space<vmem>>, vector<4x1000xf32>
    tpu.vector_store %arg12[%c96, %c0_59], %55 {strides = array<i32>} : memref<108x1000xf32, #tpu.memory_space<vmem>>, vector<4x1000xf32>,
    %c0_60 = arith.constant 0 : index
    %c238 = arith.constant 238 : index
    %57 = vector.load %arg11[%c0_60, %c238] : memref<4x1256xf32, #tpu.memory_space<vmem>>, vector<4x1000xf32>
    %c100 = arith.constant 100 : index
    %c0_61 = arith.constant 0 : index
    %58 = vector.load %arg12[%c100, %c0_61] : memref<108x1000xf32, #tpu.memory_space<vmem>>, vector<4x1000xf32>
    tpu.vector_store %arg12[%c100, %c0_61], %57 {strides = array<i32>} : memref<108x1000xf32, #tpu.memory_space<vmem>>, vector<4x1000xf32>,
    %c0_62 = arith.constant 0 : index
    %c239 = arith.constant 239 : index
    %59 = vector.load %arg11[%c0_62, %c239] : memref<4x1256xf32, #tpu.memory_space<vmem>>, vector<4x1000xf32>
    %c104 = arith.constant 104 : index
    %c0_63 = arith.constant 0 : index
    %60 = vector.load %arg12[%c104, %c0_63] : memref<108x1000xf32, #tpu.memory_space<vmem>>, vector<4x1000xf32>
    tpu.vector_store %arg12[%c104, %c0_63], %59 {strides = array<i32>} : memref<108x1000xf32, #tpu.memory_space<vmem>>, vector<4x1000xf32>,
    %c0_64 = arith.constant 0 : index
    %c0_65 = arith.constant 0 : index
    %61 = vector.load %arg2[%c0_64, %c0_65] : memref<4x108xf32, #tpu.memory_space<vmem>>, vector<4x108xf32>
    %c0_66 = arith.constant 0 : index
    %c0_67 = arith.constant 0 : index
    %62 = vector.load %arg12[%c0_66, %c0_67] : memref<108x1000xf32, #tpu.memory_space<vmem>>, vector<108x1000xf32>
    %cst_68 = arith.constant dense<0.000000e+00> : vector<4x1000xf32>
    %63 = tpu.matmul %61, %62, %cst_68 {dimension_numbers = #tpu.dot_dimension_numbers<[1], [0], [0], [1], [0, 0, 1, 1], [], []>} : vector<4x108xf32>, vector<108x1000xf32>, vector<4x1000xf32> -> vector<4x1000xf32>
    %c0_69 = arith.constant 0 : index
    %c0_70 = arith.constant 0 : index
    %64 = vector.load %arg3[%c0_69, %c0_70] : memref<4x1xf32, #tpu.memory_space<vmem>>, vector<4x1xf32>
    %65 = vector.broadcast %64 : vector<4x1xf32> to vector<4x1000xf32>
    %66 = arith.addf %63, %65 : vector<4x1000xf32>
    %cst_71 = arith.constant 0.000000e+00 : f32
    %67 = vector.broadcast %cst_71 : f32 to vector<4x1000xf32>
    %68 = arith.maximumf %66, %67 : vector<4x1000xf32>
    %c0_72 = arith.constant 0 : index
    %c0_73 = arith.constant 0 : index
    %69 = vector.load %arg8[%c0_72, %c0_73] : memref<1x1000xf32, #tpu.memory_space<vmem>>, vector<1x1000xf32>
    %70 = vector.broadcast %69 : vector<1x1000xf32> to vector<4x1000xf32>
    %71 = arith.mulf %68, %70 : vector<4x1000xf32>
    %c0_74 = arith.constant 0 : index
    %c128_75 = arith.constant 128 : index
    %72 = vector.load %arg11[%c0_74, %c128_75] : memref<4x1256xf32, #tpu.memory_space<vmem>>, vector<4x1000xf32>
    tpu.vector_store %arg11[%c0_74, %c128_75], %71 {strides = array<i32>} : memref<4x1256xf32, #tpu.memory_space<vmem>>, vector<4x1000xf32>,
    %c0_76 = arith.constant 0 : index
    %c17_77 = arith.constant 17 : index
    %73 = vector.load %arg11[%c0_76, %c17_77] : memref<4x1256xf32, #tpu.memory_space<vmem>>, vector<4x1000xf32>
    %c0_78 = arith.constant 0 : index
    %c0_79 = arith.constant 0 : index
    %74 = vector.load %arg12[%c0_78, %c0_79] : memref<108x1000xf32, #tpu.memory_space<vmem>>, vector<4x1000xf32>
    tpu.vector_store %arg12[%c0_78, %c0_79], %73 {strides = array<i32>} : memref<108x1000xf32, #tpu.memory_space<vmem>>, vector<4x1000xf32>,
    %c0_80 = arith.constant 0 : index
    %c18_81 = arith.constant 18 : index
    %75 = vector.load %arg11[%c0_80, %c18_81] : memref<4x1256xf32, #tpu.memory_space<vmem>>, vector<4x1000xf32>
    %c4_82 = arith.constant 4 : index
    %c0_83 = arith.constant 0 : index
    %76 = vector.load %arg12[%c4_82, %c0_83] : memref<108x1000xf32, #tpu.memory_space<vmem>>, vector<4x1000xf32>
    tpu.vector_store %arg12[%c4_82, %c0_83], %75 {strides = array<i32>} : memref<108x1000xf32, #tpu.memory_space<vmem>>, vector<4x1000xf32>,
    %c0_84 = arith.constant 0 : index
    %c19_85 = arith.constant 19 : index
    %77 = vector.load %arg11[%c0_84, %c19_85] : memref<4x1256xf32, #tpu.memory_space<vmem>>, vector<4x1000xf32>
    %c8_86 = arith.constant 8 : index
    %c0_87 = arith.constant 0 : index
    %78 = vector.load %arg12[%c8_86, %c0_87] : memref<108x1000xf32, #tpu.memory_space<vmem>>, vector<4x1000xf32>
    tpu.vector_store %arg12[%c8_86, %c0_87], %77 {strides = array<i32>} : memref<108x1000xf32, #tpu.memory_space<vmem>>, vector<4x1000xf32>,
    %c0_88 = arith.constant 0 : index
    %c27_89 = arith.constant 27 : index
    %79 = vector.load %arg11[%c0_88, %c27_89] : memref<4x1256xf32, #tpu.memory_space<vmem>>, vector<4x1000xf32>
    %c12_90 = arith.constant 12 : index
    %c0_91 = arith.constant 0 : index
    %80 = vector.load %arg12[%c12_90, %c0_91] : memref<108x1000xf32, #tpu.memory_space<vmem>>, vector<4x1000xf32>
    tpu.vector_store %arg12[%c12_90, %c0_91], %79 {strides = array<i32>} : memref<108x1000xf32, #tpu.memory_space<vmem>>, vector<4x1000xf32>,
    %c0_92 = arith.constant 0 : index
    %c28_93 = arith.constant 28 : index
    %81 = vector.load %arg11[%c0_92, %c28_93] : memref<4x1256xf32, #tpu.memory_space<vmem>>, vector<4x1000xf32>
    %c16_94 = arith.constant 16 : index
    %c0_95 = arith.constant 0 : index
    %82 = vector.load %arg12[%c16_94, %c0_95] : memref<108x1000xf32, #tpu.memory_space<vmem>>, vector<4x1000xf32>
    tpu.vector_store %arg12[%c16_94, %c0_95], %81 {strides = array<i32>} : memref<108x1000xf32, #tpu.memory_space<vmem>>, vector<4x1000xf32>,
    %c0_96 = arith.constant 0 : index
    %c29_97 = arith.constant 29 : index
    %83 = vector.load %arg11[%c0_96, %c29_97] : memref<4x1256xf32, #tpu.memory_space<vmem>>, vector<4x1000xf32>
    %c20_98 = arith.constant 20 : index
    %c0_99 = arith.constant 0 : index
    %84 = vector.load %arg12[%c20_98, %c0_99] : memref<108x1000xf32, #tpu.memory_space<vmem>>, vector<4x1000xf32>
    tpu.vector_store %arg12[%c20_98, %c0_99], %83 {strides = array<i32>} : memref<108x1000xf32, #tpu.memory_space<vmem>>, vector<4x1000xf32>,
    %c0_100 = arith.constant 0 : index
    %c37_101 = arith.constant 37 : index
    %85 = vector.load %arg11[%c0_100, %c37_101] : memref<4x1256xf32, #tpu.memory_space<vmem>>, vector<4x1000xf32>
    %c24_102 = arith.constant 24 : index
    %c0_103 = arith.constant 0 : index
    %86 = vector.load %arg12[%c24_102, %c0_103] : memref<108x1000xf32, #tpu.memory_space<vmem>>, vector<4x1000xf32>
    tpu.vector_store %arg12[%c24_102, %c0_103], %85 {strides = array<i32>} : memref<108x1000xf32, #tpu.memory_space<vmem>>, vector<4x1000xf32>,
    %c0_104 = arith.constant 0 : index
    %c38_105 = arith.constant 38 : index
    %87 = vector.load %arg11[%c0_104, %c38_105] : memref<4x1256xf32, #tpu.memory_space<vmem>>, vector<4x1000xf32>
    %c28_106 = arith.constant 28 : index
    %c0_107 = arith.constant 0 : index
    %88 = vector.load %arg12[%c28_106, %c0_107] : memref<108x1000xf32, #tpu.memory_space<vmem>>, vector<4x1000xf32>
    tpu.vector_store %arg12[%c28_106, %c0_107], %87 {strides = array<i32>} : memref<108x1000xf32, #tpu.memory_space<vmem>>, vector<4x1000xf32>,
    %c0_108 = arith.constant 0 : index
    %c39_109 = arith.constant 39 : index
    %89 = vector.load %arg11[%c0_108, %c39_109] : memref<4x1256xf32, #tpu.memory_space<vmem>>, vector<4x1000xf32>
    %c32_110 = arith.constant 32 : index
    %c0_111 = arith.constant 0 : index
    %90 = vector.load %arg12[%c32_110, %c0_111] : memref<108x1000xf32, #tpu.memory_space<vmem>>, vector<4x1000xf32>
    tpu.vector_store %arg12[%c32_110, %c0_111], %89 {strides = array<i32>} : memref<108x1000xf32, #tpu.memory_space<vmem>>, vector<4x1000xf32>,
    %c0_112 = arith.constant 0 : index
    %c117_113 = arith.constant 117 : index
    %91 = vector.load %arg11[%c0_112, %c117_113] : memref<4x1256xf32, #tpu.memory_space<vmem>>, vector<4x1000xf32>
    %c36_114 = arith.constant 36 : index
    %c0_115 = arith.constant 0 : index
    %92 = vector.load %arg12[%c36_114, %c0_115] : memref<108x1000xf32, #tpu.memory_space<vmem>>, vector<4x1000xf32>
    tpu.vector_store %arg12[%c36_114, %c0_115], %91 {strides = array<i32>} : memref<108x1000xf32, #tpu.memory_space<vmem>>, vector<4x1000xf32>,
    %c0_116 = arith.constant 0 : index
    %c118_117 = arith.constant 118 : index
    %93 = vector.load %arg11[%c0_116, %c118_117] : memref<4x1256xf32, #tpu.memory_space<vmem>>, vector<4x1000xf32>
    %c40_118 = arith.constant 40 : index
    %c0_119 = arith.constant 0 : index
    %94 = vector.load %arg12[%c40_118, %c0_119] : memref<108x1000xf32, #tpu.memory_space<vmem>>, vector<4x1000xf32>
    tpu.vector_store %arg12[%c40_118, %c0_119], %93 {strides = array<i32>} : memref<108x1000xf32, #tpu.memory_space<vmem>>, vector<4x1000xf32>,
    %c0_120 = arith.constant 0 : index
    %c119_121 = arith.constant 119 : index
    %95 = vector.load %arg11[%c0_120, %c119_121] : memref<4x1256xf32, #tpu.memory_space<vmem>>, vector<4x1000xf32>
    %c44_122 = arith.constant 44 : index
    %c0_123 = arith.constant 0 : index
    %96 = vector.load %arg12[%c44_122, %c0_123] : memref<108x1000xf32, #tpu.memory_space<vmem>>, vector<4x1000xf32>
    tpu.vector_store %arg12[%c44_122, %c0_123], %95 {strides = array<i32>} : memref<108x1000xf32, #tpu.memory_space<vmem>>, vector<4x1000xf32>,
    %c0_124 = arith.constant 0 : index
    %c127_125 = arith.constant 127 : index
    %97 = vector.load %arg11[%c0_124, %c127_125] : memref<4x1256xf32, #tpu.memory_space<vmem>>, vector<4x1000xf32>
    %c48_126 = arith.constant 48 : index
    %c0_127 = arith.constant 0 : index
    %98 = vector.load %arg12[%c48_126, %c0_127] : memref<108x1000xf32, #tpu.memory_space<vmem>>, vector<4x1000xf32>
    tpu.vector_store %arg12[%c48_126, %c0_127], %97 {strides = array<i32>} : memref<108x1000xf32, #tpu.memory_space<vmem>>, vector<4x1000xf32>,
    %c0_128 = arith.constant 0 : index
    %c128_129 = arith.constant 128 : index
    %99 = vector.load %arg11[%c0_128, %c128_129] : memref<4x1256xf32, #tpu.memory_space<vmem>>, vector<4x1000xf32>
    %c52_130 = arith.constant 52 : index
    %c0_131 = arith.constant 0 : index
    %100 = vector.load %arg12[%c52_130, %c0_131] : memref<108x1000xf32, #tpu.memory_space<vmem>>, vector<4x1000xf32>
    tpu.vector_store %arg12[%c52_130, %c0_131], %99 {strides = array<i32>} : memref<108x1000xf32, #tpu.memory_space<vmem>>, vector<4x1000xf32>,
    %c0_132 = arith.constant 0 : index
    %c129_133 = arith.constant 129 : index
    %101 = vector.load %arg11[%c0_132, %c129_133] : memref<4x1256xf32, #tpu.memory_space<vmem>>, vector<4x1000xf32>
    %c56_134 = arith.constant 56 : index
    %c0_135 = arith.constant 0 : index
    %102 = vector.load %arg12[%c56_134, %c0_135] : memref<108x1000xf32, #tpu.memory_space<vmem>>, vector<4x1000xf32>
    tpu.vector_store %arg12[%c56_134, %c0_135], %101 {strides = array<i32>} : memref<108x1000xf32, #tpu.memory_space<vmem>>, vector<4x1000xf32>,
    %c0_136 = arith.constant 0 : index
    %c137_137 = arith.constant 137 : index
    %103 = vector.load %arg11[%c0_136, %c137_137] : memref<4x1256xf32, #tpu.memory_space<vmem>>, vector<4x1000xf32>
    %c60_138 = arith.constant 60 : index
    %c0_139 = arith.constant 0 : index
    %104 = vector.load %arg12[%c60_138, %c0_139] : memref<108x1000xf32, #tpu.memory_space<vmem>>, vector<4x1000xf32>
    tpu.vector_store %arg12[%c60_138, %c0_139], %103 {strides = array<i32>} : memref<108x1000xf32, #tpu.memory_space<vmem>>, vector<4x1000xf32>,
    %c0_140 = arith.constant 0 : index
    %c138_141 = arith.constant 138 : index
    %105 = vector.load %arg11[%c0_140, %c138_141] : memref<4x1256xf32, #tpu.memory_space<vmem>>, vector<4x1000xf32>
    %c64_142 = arith.constant 64 : index
    %c0_143 = arith.constant 0 : index
    %106 = vector.load %arg12[%c64_142, %c0_143] : memref<108x1000xf32, #tpu.memory_space<vmem>>, vector<4x1000xf32>
    tpu.vector_store %arg12[%c64_142, %c0_143], %105 {strides = array<i32>} : memref<108x1000xf32, #tpu.memory_space<vmem>>, vector<4x1000xf32>,
    %c0_144 = arith.constant 0 : index
    %c139_145 = arith.constant 139 : index
    %107 = vector.load %arg11[%c0_144, %c139_145] : memref<4x1256xf32, #tpu.memory_space<vmem>>, vector<4x1000xf32>
    %c68_146 = arith.constant 68 : index
    %c0_147 = arith.constant 0 : index
    %108 = vector.load %arg12[%c68_146, %c0_147] : memref<108x1000xf32, #tpu.memory_space<vmem>>, vector<4x1000xf32>
    tpu.vector_store %arg12[%c68_146, %c0_147], %107 {strides = array<i32>} : memref<108x1000xf32, #tpu.memory_space<vmem>>, vector<4x1000xf32>,
    %c0_148 = arith.constant 0 : index
    %c217_149 = arith.constant 217 : index
    %109 = vector.load %arg11[%c0_148, %c217_149] : memref<4x1256xf32, #tpu.memory_space<vmem>>, vector<4x1000xf32>
    %c72_150 = arith.constant 72 : index
    %c0_151 = arith.constant 0 : index
    %110 = vector.load %arg12[%c72_150, %c0_151] : memref<108x1000xf32, #tpu.memory_space<vmem>>, vector<4x1000xf32>
    tpu.vector_store %arg12[%c72_150, %c0_151], %109 {strides = array<i32>} : memref<108x1000xf32, #tpu.memory_space<vmem>>, vector<4x1000xf32>,
    %c0_152 = arith.constant 0 : index
    %c218_153 = arith.constant 218 : index
    %111 = vector.load %arg11[%c0_152, %c218_153] : memref<4x1256xf32, #tpu.memory_space<vmem>>, vector<4x1000xf32>
    %c76_154 = arith.constant 76 : index
    %c0_155 = arith.constant 0 : index
    %112 = vector.load %arg12[%c76_154, %c0_155] : memref<108x1000xf32, #tpu.memory_space<vmem>>, vector<4x1000xf32>
    tpu.vector_store %arg12[%c76_154, %c0_155], %111 {strides = array<i32>} : memref<108x1000xf32, #tpu.memory_space<vmem>>, vector<4x1000xf32>,
    %c0_156 = arith.constant 0 : index
    %c219_157 = arith.constant 219 : index
    %113 = vector.load %arg11[%c0_156, %c219_157] : memref<4x1256xf32, #tpu.memory_space<vmem>>, vector<4x1000xf32>
    %c80_158 = arith.constant 80 : index
    %c0_159 = arith.constant 0 : index
    %114 = vector.load %arg12[%c80_158, %c0_159] : memref<108x1000xf32, #tpu.memory_space<vmem>>, vector<4x1000xf32>
    tpu.vector_store %arg12[%c80_158, %c0_159], %113 {strides = array<i32>} : memref<108x1000xf32, #tpu.memory_space<vmem>>, vector<4x1000xf32>,
    %c0_160 = arith.constant 0 : index
    %c227_161 = arith.constant 227 : index
    %115 = vector.load %arg11[%c0_160, %c227_161] : memref<4x1256xf32, #tpu.memory_space<vmem>>, vector<4x1000xf32>
    %c84_162 = arith.constant 84 : index
    %c0_163 = arith.constant 0 : index
    %116 = vector.load %arg12[%c84_162, %c0_163] : memref<108x1000xf32, #tpu.memory_space<vmem>>, vector<4x1000xf32>
    tpu.vector_store %arg12[%c84_162, %c0_163], %115 {strides = array<i32>} : memref<108x1000xf32, #tpu.memory_space<vmem>>, vector<4x1000xf32>,
    %c0_164 = arith.constant 0 : index
    %c228_165 = arith.constant 228 : index
    %117 = vector.load %arg11[%c0_164, %c228_165] : memref<4x1256xf32, #tpu.memory_space<vmem>>, vector<4x1000xf32>
    %c88_166 = arith.constant 88 : index
    %c0_167 = arith.constant 0 : index
    %118 = vector.load %arg12[%c88_166, %c0_167] : memref<108x1000xf32, #tpu.memory_space<vmem>>, vector<4x1000xf32>
    tpu.vector_store %arg12[%c88_166, %c0_167], %117 {strides = array<i32>} : memref<108x1000xf32, #tpu.memory_space<vmem>>, vector<4x1000xf32>,
    %c0_168 = arith.constant 0 : index
    %c229_169 = arith.constant 229 : index
    %119 = vector.load %arg11[%c0_168, %c229_169] : memref<4x1256xf32, #tpu.memory_space<vmem>>, vector<4x1000xf32>
    %c92_170 = arith.constant 92 : index
    %c0_171 = arith.constant 0 : index
    %120 = vector.load %arg12[%c92_170, %c0_171] : memref<108x1000xf32, #tpu.memory_space<vmem>>, vector<4x1000xf32>
    tpu.vector_store %arg12[%c92_170, %c0_171], %119 {strides = array<i32>} : memref<108x1000xf32, #tpu.memory_space<vmem>>, vector<4x1000xf32>,
    %c0_172 = arith.constant 0 : index
    %c237_173 = arith.constant 237 : index
    %121 = vector.load %arg11[%c0_172, %c237_173] : memref<4x1256xf32, #tpu.memory_space<vmem>>, vector<4x1000xf32>
    %c96_174 = arith.constant 96 : index
    %c0_175 = arith.constant 0 : index
    %122 = vector.load %arg12[%c96_174, %c0_175] : memref<108x1000xf32, #tpu.memory_space<vmem>>, vector<4x1000xf32>
    tpu.vector_store %arg12[%c96_174, %c0_175], %121 {strides = array<i32>} : memref<108x1000xf32, #tpu.memory_space<vmem>>, vector<4x1000xf32>,
    %c0_176 = arith.constant 0 : index
    %c238_177 = arith.constant 238 : index
    %123 = vector.load %arg11[%c0_176, %c238_177] : memref<4x1256xf32, #tpu.memory_space<vmem>>, vector<4x1000xf32>
    %c100_178 = arith.constant 100 : index
    %c0_179 = arith.constant 0 : index
    %124 = vector.load %arg12[%c100_178, %c0_179] : memref<108x1000xf32, #tpu.memory_space<vmem>>, vector<4x1000xf32>
    tpu.vector_store %arg12[%c100_178, %c0_179], %123 {strides = array<i32>} : memref<108x1000xf32, #tpu.memory_space<vmem>>, vector<4x1000xf32>,
    %c0_180 = arith.constant 0 : index
    %c239_181 = arith.constant 239 : index
    %125 = vector.load %arg11[%c0_180, %c239_181] : memref<4x1256xf32, #tpu.memory_space<vmem>>, vector<4x1000xf32>
    %c104_182 = arith.constant 104 : index
    %c0_183 = arith.constant 0 : index
    %126 = vector.load %arg12[%c104_182, %c0_183] : memref<108x1000xf32, #tpu.memory_space<vmem>>, vector<4x1000xf32>
    tpu.vector_store %arg12[%c104_182, %c0_183], %125 {strides = array<i32>} : memref<108x1000xf32, #tpu.memory_space<vmem>>, vector<4x1000xf32>,
    %c0_184 = arith.constant 0 : index
    %c0_185 = arith.constant 0 : index
    %127 = vector.load %arg4[%c0_184, %c0_185] : memref<4x108xf32, #tpu.memory_space<vmem>>, vector<4x108xf32>
    %c0_186 = arith.constant 0 : index
    %c0_187 = arith.constant 0 : index
    %128 = vector.load %arg12[%c0_186, %c0_187] : memref<108x1000xf32, #tpu.memory_space<vmem>>, vector<108x1000xf32>
    %cst_188 = arith.constant dense<0.000000e+00> : vector<4x1000xf32>
    %129 = tpu.matmul %127, %128, %cst_188 {dimension_numbers = #tpu.dot_dimension_numbers<[1], [0], [0], [1], [0, 0, 1, 1], [], []>} : vector<4x108xf32>, vector<108x1000xf32>, vector<4x1000xf32> -> vector<4x1000xf32>
    %c0_189 = arith.constant 0 : index
    %c0_190 = arith.constant 0 : index
    %130 = vector.load %arg5[%c0_189, %c0_190] : memref<4x1xf32, #tpu.memory_space<vmem>>, vector<4x1xf32>
    %131 = vector.broadcast %130 : vector<4x1xf32> to vector<4x1000xf32>
    %132 = arith.addf %129, %131 : vector<4x1000xf32>
    %cst_191 = arith.constant 0.000000e+00 : f32
    %133 = vector.broadcast %cst_191 : f32 to vector<4x1000xf32>
    %134 = arith.maximumf %132, %133 : vector<4x1000xf32>
    %c0_192 = arith.constant 0 : index
    %c0_193 = arith.constant 0 : index
    %135 = vector.load %arg9[%c0_192, %c0_193] : memref<1000x8xf32, #tpu.memory_space<vmem>>, vector<1000x8xf32>
    %cst_194 = arith.constant dense<0.000000e+00> : vector<4x8xf32>
    %136 = tpu.matmul %134, %135, %cst_194 {dimension_numbers = #tpu.dot_dimension_numbers<[1], [0], [0], [1], [0, 0, 1, 1], [], []>} : vector<4x1000xf32>, vector<1000x8xf32>, vector<4x8xf32> -> vector<4x8xf32>
    %cst_195 = arith.constant 0.000000e+00 : f32
    %137 = vector.broadcast %cst_195 : f32 to vector<4x1xf32>
    %138 = vector.extract_strided_slice %136 {offsets = [0, 0], sizes = [4, 7], strides = [1, 1]} : vector<4x8xf32> to vector<4x7xf32>
    %139 = tpu.concatenate %137, %138 in 1 : vector<4x1xf32>, vector<4x7xf32> -> vector<4x8xf32>
    %140 = vector.extract_strided_slice %136 {offsets = [0, 1], sizes = [4, 7], strides = [1, 1]} : vector<4x8xf32> to vector<4x7xf32>
    %141 = tpu.concatenate %140, %137 in 1 : vector<4x7xf32>, vector<4x1xf32> -> vector<4x8xf32>
    %142 = tpu.concatenate %139, %136, %141 in 0 : vector<4x8xf32>, vector<4x8xf32>, vector<4x8xf32> -> vector<12x8xf32>
    %c0_196 = arith.constant 0 : index
    %c0_197 = arith.constant 0 : index
    %143 = vector.load %arg6[%c0_196, %c0_197] : memref<4x12xf32, #tpu.memory_space<vmem>>, vector<4x12xf32>
    %cst_198 = arith.constant dense<0.000000e+00> : vector<4x8xf32>
    %144 = tpu.matmul %143, %142, %cst_198 {dimension_numbers = #tpu.dot_dimension_numbers<[1], [0], [0], [1], [0, 0, 1, 1], [], []>} : vector<4x12xf32>, vector<12x8xf32>, vector<4x8xf32> -> vector<4x8xf32>
    %c0_199 = arith.constant 0 : index
    %c0_200 = arith.constant 0 : index
    %145 = vector.load %arg7[%c0_199, %c0_200] : memref<4x1xf32, #tpu.memory_space<vmem>>, vector<4x1xf32>
    %146 = vector.broadcast %145 : vector<4x1xf32> to vector<4x8xf32>
    %147 = arith.addf %144, %146 : vector<4x8xf32>
    %cst_201 = arith.constant dense<0xFF800000> : vector<8xf32>
    %148 = vector.multi_reduction <maximumf>, %147, %cst_201 [0] : vector<4x8xf32> to vector<8xf32>
    %149 = vector.shape_cast %148 : vector<8xf32> to vector<1x8xf32>
    %150 = vector.broadcast %149 : vector<1x8xf32> to vector<4x8xf32>
    %151 = arith.subf %147, %150 : vector<4x8xf32>
    %152 = math.exp %151 : vector<4x8xf32>
    %cst_202 = arith.constant dense<0.000000e+00> : vector<8xf32>
    %153 = vector.multi_reduction <add>, %152, %cst_202 [0] : vector<4x8xf32> to vector<8xf32>
    %154 = vector.shape_cast %153 : vector<8xf32> to vector<1x8xf32>
    %155 = tpu.reciprocal %154 {approx = true} : vector<1x8xf32> -> vector<1x8xf32>
    %156 = arith.mulf %154, %155 : vector<1x8xf32>
    %cst_203 = arith.constant 2.000000e+00 : f32
    %157 = vector.broadcast %cst_203 : f32 to vector<1x8xf32>
    %158 = arith.subf %157, %156 : vector<1x8xf32>
    %159 = arith.mulf %155, %158 : vector<1x8xf32>
    %160 = vector.broadcast %159 : vector<1x8xf32> to vector<4x8xf32>
    %161 = arith.mulf %152, %160 : vector<4x8xf32>
    %c0_204 = arith.constant 0 : index
    %c0_205 = arith.constant 0 : index
    %c0_206 = arith.constant 0 : index
    %162 = vector.load %arg10[%c0_204, %c0_205, %c0_206] : memref<1x4x8xf32, #tpu.memory_space<vmem>>, vector<1x4x8xf32>
    %163 = vector.shape_cast %162 : vector<1x4x8xf32> to vector<4x8xf32>
    %164 = vector.shape_cast %161 : vector<4x8xf32> to vector<1x4x8xf32>
    tpu.vector_store %arg10[%c0_204, %c0_205, %c0_206], %164 {strides = array<i32>} : memref<1x4x8xf32, #tpu.memory_space<vmem>>, vector<1x4x8xf32>,
    return
  }
  func.func @transform_0(%arg0: i32) -> (i32, i32, i32) {
    %c0_i32 = arith.constant 0 : i32
    %c0_i32_0 = arith.constant 0 : i32
    %c0_i32_1 = arith.constant 0 : i32
    return %arg0, %c0_i32, %c0_i32_0 : i32, i32, i32
  }
  func.func @transform_1(%arg0: i32) -> (i32, i32) {
    %c0_i32 = arith.constant 0 : i32
    %c0_i32_0 = arith.constant 0 : i32
    %c0_i32_1 = arith.constant 0 : i32
    return %c0_i32, %c0_i32_0 : i32, i32
  }
  func.func @transform_2(%arg0: i32) -> (i32, i32) {
    %c0_i32 = arith.constant 0 : i32
    %c0_i32_0 = arith.constant 0 : i32
    %c0_i32_1 = arith.constant 0 : i32
    return %c0_i32, %c0_i32_0 : i32, i32
  }
  func.func @transform_3(%arg0: i32) -> (i32, i32) {
    %c0_i32 = arith.constant 0 : i32
    %c0_i32_0 = arith.constant 0 : i32
    %c0_i32_1 = arith.constant 0 : i32
    return %c0_i32, %c0_i32_0 : i32, i32
  }
  func.func @transform_4(%arg0: i32) -> (i32, i32) {
    %c0_i32 = arith.constant 0 : i32
    %c0_i32_0 = arith.constant 0 : i32
    %c0_i32_1 = arith.constant 0 : i32
    return %c0_i32, %c0_i32_0 : i32, i32
  }
  func.func @transform_5(%arg0: i32) -> (i32, i32) {
    %c0_i32 = arith.constant 0 : i32
    %c0_i32_0 = arith.constant 0 : i32
    %c0_i32_1 = arith.constant 0 : i32
    return %c0_i32, %c0_i32_0 : i32, i32
  }
  func.func @transform_6(%arg0: i32) -> (i32, i32) {
    %c0_i32 = arith.constant 0 : i32
    %c0_i32_0 = arith.constant 0 : i32
    %c0_i32_1 = arith.constant 0 : i32
    return %c0_i32, %c0_i32_0 : i32, i32
  }
  func.func @transform_7(%arg0: i32) -> (i32, i32) {
    %c0_i32 = arith.constant 0 : i32
    %c0_i32_0 = arith.constant 0 : i32
    %c0_i32_1 = arith.constant 0 : i32
    return %c0_i32, %c0_i32_0 : i32, i32
  }
  func.func @transform_8(%arg0: i32) -> (i32, i32) {
    %c0_i32 = arith.constant 0 : i32
    %c0_i32_0 = arith.constant 0 : i32
    %c0_i32_1 = arith.constant 0 : i32
    return %c0_i32, %c0_i32_0 : i32, i32
  }
  func.func @transform_9(%arg0: i32) -> (i32, i32, i32) {
    %c0_i32 = arith.constant 0 : i32
    %c0_i32_0 = arith.constant 0 : i32
    %c0_i32_1 = arith.constant 0 : i32
    return %arg0, %c0_i32, %c0_i32_0 : i32, i32, i32
  }
}

</mosaic_0001>

<llo_original>
// kernel: tpu_custom_call.1
$region0: #{tpu_custom_call.1}
  #allocation0 [shape = 'u32[]', space=smem, size = 0x4, offset = 0x4, fixed_abs, tag = 'smem constant byte address 0x4 - core index']
  #allocation1 [shape = 'u32[144,128]{1,0:T(1,128)}', space=vmem, size = 0x12000, scoped, tag = 'internal scratch']
  #allocation2 [shape = 'f32[4,1256]{1,0:T(4,128)}', space=vmem, size = 0x5000, scoped, tag = 'scratch operand']
  #allocation3 [shape = 'f32[108,1000]{1,0:T(8,128)}', space=vmem, size = 0x70000, scoped, tag = 'scratch operand']
  %s0 = inlined_call_operand.vmem [shape: f32[2,4,1000], index: 0, kind: input, shape index: {}]
  %s1 = inlined_call_operand.vmem [shape: f32[4,108], index: 1, kind: input, shape index: {}]
  %s2 = inlined_call_operand.vmem [shape: f32[4,1], index: 2, kind: input, shape index: {}]
  %s3 = inlined_call_operand.vmem [shape: f32[4,108], index: 3, kind: input, shape index: {}]
  %s4 = inlined_call_operand.vmem [shape: f32[4,1], index: 4, kind: input, shape index: {}]
  %s5 = inlined_call_operand.vmem [shape: f32[4,12], index: 5, kind: input, shape index: {}]
  %s6 = inlined_call_operand.vmem [shape: f32[4,1], index: 6, kind: input, shape index: {}]
  %s7 = inlined_call_operand.vmem [shape: f32[1,1000], index: 7, kind: input, shape index: {}]
  %s8 = inlined_call_operand.vmem [shape: f32[1000,8], index: 8, kind: input, shape index: {}]
  %s9 = inlined_call_operand.hbm [shape: f32[2,4,8], index: 9, kind: output, shape index: {}]
  %s10 = sld [smem:[#allocation0]]
  $region69: #{tpu_custom_call.1} parent=0
    _
  %s12 = ssub.s32 1, %s10
  %s13 = scalar_select 0, %s12, %s10
  $region1: #{tpu_custom_call.1} parent=0
    #allocation4 [shape = 'u8[4096]{0}', space=vmem, size = 0x1000, scoped, tag = 'output window, operand 0']
    #allocation5 [shape = 's32[2]{0}', space=sflag, size = 0x8, scoped, tag = 'scoped memory for tpu_custom_call.1']
    %14 = vsyncpa [#allocation5], 0
    %s15 = scalar_lea.sflag [#allocation5], 1
    %16 = vsyncpa %s15, 0
    loop: start=0, step=1, limit=4
    $region2: #{tpu_custom_call.1} parent=1 // loop_pre_header
      _
    $region3: #{tpu_custom_call.1} parent=1 // loop_header
      %s18 = sphi 0, %s22
      %p19 = scmp.ge.s32.totalorder %s18, 4
      %s28 = sphi 0, %s30
      %s31 = sphi 0, %s28
      %s32 = sphi 0, %s31
      %s48 = sphi 0, %s32
      %s52 = sphi 0, %s52
      %s54 = sphi 0, %s52
      %s55 = sphi 0, %s54
      %s69 = sphi 0, %s55
      %s73 = sphi 0, %s73
      %s75 = sphi 0, %s73
      %s76 = sphi 0, %s75
      %s90 = sphi 0, %s76
      %s94 = sphi 0, %s94
      %s96 = sphi 0, %s94
      %s97 = sphi 0, %s96
      %s111 = sphi 0, %s97
      %s115 = sphi 0, %s115
      %s117 = sphi 0, %s115
      %s118 = sphi 0, %s117
      %s132 = sphi 0, %s118
      %s136 = sphi 0, %s136
      %s138 = sphi 0, %s136
      %s139 = sphi 0, %s138
      %s153 = sphi 0, %s139
      %s157 = sphi 0, %s157
      %s159 = sphi 0, %s157
      %s160 = sphi 0, %s159
      %s174 = sphi 0, %s160
      %s178 = sphi 0, %s178
      %s180 = sphi 0, %s178
      %s181 = sphi 0, %s180
      %s195 = sphi 0, %s181
      %s199 = sphi 0, %s199
      %s201 = sphi 0, %s199
      %s202 = sphi 0, %s201
      %s216 = sphi 0, %s202
      %s222 = sphi 0, %s224
      %s225 = sphi 0, %s222
      %s226 = sphi 0, %s225
      %s242 = sphi 0, %s226
    $region4: #{tpu_custom_call.1} parent=1 // loop_header_branch
      %21 = sbr.rel (%p19) target = $region8
    $region5: #{tpu_custom_call.1} parent=1 // loop_body
      %s23 = ssub.s32 %s18, 1
      %s24 = ssub.s32 %s18, 2
      %s25 = sadd.s32 %s18, 1
      %s26 = ssub.s32 %s18, %s25
      %p27 = scmp.eq.s32.totalorder %s26, 0
      %s29 = sadd.s32 %s28, 1
      %s30 = scalar_select %p27, %s28, %s29
      %p33 = pneg %p27
      %p34 = scmp.eq.s32.totalorder %s18, 1
      %p35 = por %p33, %p34
      %p36 = scmp.ne.s32.totalorder %s28, %s31
      %p37 = scmp.eq.s32.totalorder %s18, 0
      %p38 = por %p36, %p37
      %p39 = scmp.ne.s32.totalorder %s28, %s31
      %p40 = scmp.eq.s32.totalorder %s23, 1
      %p41 = por %p39, %p40
      %p42 = scmp.ne.s32.totalorder %s31, %s32
      %p43 = scmp.eq.s32.totalorder %s23, 0
      %p44 = por %p42, %p43
      %p45 = scmp.ne.s32.totalorder %s31, %s32
      %p46 = scmp.eq.s32.totalorder %s24, 1
      %p47 = por %p45, %p46
      %p49 = scmp.ne.s32.totalorder %s32, %s48
      %p50 = scmp.eq.s32.totalorder %s24, 0
      %p51 = por %p49, %p50
      %s53 = sadd.s32 %s52, 1
      %p56 = scmp.eq.s32.totalorder %s18, 1
      %p57 = scmp.ne.s32.totalorder %s52, %s54
      %p58 = scmp.eq.s32.totalorder %s18, 0
      %p59 = por %p57, %p58
      %p60 = scmp.ne.s32.totalorder %s52, %s54
      %p61 = scmp.eq.s32.totalorder %s23, 1
      %p62 = por %p60, %p61
      %p63 = scmp.ne.s32.totalorder %s54, %s55
      %p64 = scmp.eq.s32.totalorder %s23, 0
      %p65 = por %p63, %p64
      %p66 = scmp.ne.s32.totalorder %s54, %s55
      %p67 = scmp.eq.s32.totalorder %s24, 1
      %p68 = por %p66, %p67
      %p70 = scmp.ne.s32.totalorder %s55, %s69
      %p71 = scmp.eq.s32.totalorder %s24, 0
      %p72 = por %p70, %p71
      %s74 = sadd.s32 %s73, 1
      %p77 = scmp.eq.s32.totalorder %s18, 1
      %p78 = scmp.ne.s32.totalorder %s73, %s75
      %p79 = scmp.eq.s32.totalorder %s18, 0
      %p80 = por %p78, %p79
      %p81 = scmp.ne.s32.totalorder %s73, %s75
      %p82 = scmp.eq.s32.totalorder %s23, 1
      %p83 = por %p81, %p82
      %p84 = scmp.ne.s32.totalorder %s75, %s76
      %p85 = scmp.eq.s32.totalorder %s23, 0
      %p86 = por %p84, %p85
      %p87 = scmp.ne.s32.totalorder %s75, %s76
      %p88 = scmp.eq.s32.totalorder %s24, 1
      %p89 = por %p87, %p88
      %p91 = scmp.ne.s32.totalorder %s76, %s90
      %p92 = scmp.eq.s32.totalorder %s24, 0
      %p93 = por %p91, %p92
      %s95 = sadd.s32 %s94, 1
      %p98 = scmp.eq.s32.totalorder %s18, 1
      %p99 = scmp.ne.s32.totalorder %s94, %s96
      %p100 = scmp.eq.s32.totalorder %s18, 0
      %p101 = por %p99, %p100
      %p102 = scmp.ne.s32.totalorder %s94, %s96
      %p103 = scmp.eq.s32.totalorder %s23, 1
      %p104 = por %p102, %p103
      %p105 = scmp.ne.s32.totalorder %s96, %s97
      %p106 = scmp.eq.s32.totalorder %s23, 0
      %p107 = por %p105, %p106
      %p108 = scmp.ne.s32.totalorder %s96, %s97
      %p109 = scmp.eq.s32.totalorder %s24, 1
      %p110 = por %p108, %p109
      %p112 = scmp.ne.s32.totalorder %s97, %s111
      %p113 = scmp.eq.s32.totalorder %s24, 0
      %p114 = por %p112, %p113
      %s116 = sadd.s32 %s115, 1
      %p119 = scmp.eq.s32.totalorder %s18, 1
      %p120 = scmp.ne.s32.totalorder %s115, %s117
      %p121 = scmp.eq.s32.totalorder %s18, 0
      %p122 = por %p120, %p121
      %p123 = scmp.ne.s32.totalorder %s115, %s117
      %p124 = scmp.eq.s32.totalorder %s23, 1
      %p125 = por %p123, %p124
      %p126 = scmp.ne.s32.totalorder %s117, %s118
      %p127 = scmp.eq.s32.totalorder %s23, 0
      %p128 = por %p126, %p127
      %p129 = scmp.ne.s32.totalorder %s117, %s118
      %p130 = scmp.eq.s32.totalorder %s24, 1
      %p131 = por %p129, %p130
      %p133 = scmp.ne.s32.totalorder %s118, %s132
      %p134 = scmp.eq.s32.totalorder %s24, 0
      %p135 = por %p133, %p134
      %s137 = sadd.s32 %s136, 1
      %p140 = scmp.eq.s32.totalorder %s18, 1
      %p141 = scmp.ne.s32.totalorder %s136, %s138
      %p142 = scmp.eq.s32.totalorder %s18, 0
      %p143 = por %p141, %p142
      %p144 = scmp.ne.s32.totalorder %s136, %s138
      %p145 = scmp.eq.s32.totalorder %s23, 1
      %p146 = por %p144, %p145
      %p147 = scmp.ne.s32.totalorder %s138, %s139
      %p148 = scmp.eq.s32.totalorder %s23, 0
      %p149 = por %p147, %p148
      %p150 = scmp.ne.s32.totalorder %s138, %s139
      %p151 = scmp.eq.s32.totalorder %s24, 1
      %p152 = por %p150, %p151
      %p154 = scmp.ne.s32.totalorder %s139, %s153
      %p155 = scmp.eq.s32.totalorder %s24, 0
      %p156 = por %p154, %p155
      %s158 = sadd.s32 %s157, 1
      %p161 = scmp.eq.s32.totalorder %s18, 1
      %p162 = scmp.ne.s32.totalorder %s157, %s159
      %p163 = scmp.eq.s32.totalorder %s18, 0
      %p164 = por %p162, %p163
      %p165 = scmp.ne.s32.totalorder %s157, %s159
      %p166 = scmp.eq.s32.totalorder %s23, 1
      %p167 = por %p165, %p166
      %p168 = scmp.ne.s32.totalorder %s159, %s160
      %p169 = scmp.eq.s32.totalorder %s23, 0
      %p170 = por %p168, %p169
      %p171 = scmp.ne.s32.totalorder %s159, %s160
      %p172 = scmp.eq.s32.totalorder %s24, 1
      %p173 = por %p171, %p172
      %p175 = scmp.ne.s32.totalorder %s160, %s174
      %p176 = scmp.eq.s32.totalorder %s24, 0
      %p177 = por %p175, %p176
      %s179 = sadd.s32 %s178, 1
      %p182 = scmp.eq.s32.totalorder %s18, 1
      %p183 = scmp.ne.s32.totalorder %s178, %s180
      %p184 = scmp.eq.s32.totalorder %s18, 0
      %p185 = por %p183, %p184
      %p186 = scmp.ne.s32.totalorder %s178, %s180
      %p187 = scmp.eq.s32.totalorder %s23, 1
      %p188 = por %p186, %p187
      %p189 = scmp.ne.s32.totalorder %s180, %s181
      %p190 = scmp.eq.s32.totalorder %s23, 0
      %p191 = por %p189, %p190
      %p192 = scmp.ne.s32.totalorder %s180, %s181
      %p193 = scmp.eq.s32.totalorder %s24, 1
      %p194 = por %p192, %p193
      %p196 = scmp.ne.s32.totalorder %s181, %s195
      %p197 = scmp.eq.s32.totalorder %s24, 0
      %p198 = por %p196, %p197
      %s200 = sadd.s32 %s199, 1
      %p203 = scmp.eq.s32.totalorder %s18, 1
      %p204 = scmp.ne.s32.totalorder %s199, %s201
      %p205 = scmp.eq.s32.totalorder %s18, 0
      %p206 = por %p204, %p205
      %p207 = scmp.ne.s32.totalorder %s199, %s201
      %p208 = scmp.eq.s32.totalorder %s23, 1
      %p209 = por %p207, %p208
      %p210 = scmp.ne.s32.totalorder %s201, %s202
      %p211 = scmp.eq.s32.totalorder %s23, 0
      %p212 = por %p210, %p211
      %p213 = scmp.ne.s32.totalorder %s201, %s202
      %p214 = scmp.eq.s32.totalorder %s24, 1
      %p215 = por %p213, %p214
      %p217 = scmp.ne.s32.totalorder %s202, %s216
      %p218 = scmp.eq.s32.totalorder %s24, 0
      %p219 = por %p217, %p218
      %s220 = ssub.s32 %s18, %s25
      %p221 = scmp.eq.s32.totalorder %s220, 0
      %s223 = sadd.s32 %s222, 1
      %s224 = scalar_select %p221, %s222, %s223
      %p227 = pneg %p221
      %p228 = scmp.eq.s32.totalorder %s18, 1
      %p229 = por %p227, %p228
      %p230 = scmp.ne.s32.totalorder %s222, %s225
      %p231 = scmp.eq.s32.totalorder %s18, 0
      %p232 = por %p230, %p231
      %p233 = scmp.ne.s32.totalorder %s222, %s225
      %p234 = scmp.eq.s32.totalorder %s23, 1
      %p235 = por %p233, %p234
      %p236 = scmp.ne.s32.totalorder %s225, %s226
      %p237 = scmp.eq.s32.totalorder %s23, 0
      %p238 = por %p236, %p237
      %p239 = scmp.ne.s32.totalorder %s225, %s226
      %p240 = scmp.eq.s32.totalorder %s24, 1
      %p241 = por %p239, %p240
      %p243 = scmp.ne.s32.totalorder %s226, %s242
      %p244 = scmp.eq.s32.totalorder %s24, 0
      %p245 = por %p243, %p244
      %p246 = scmp.le.s32.totalorder 1, %s18
      %p247 = scmp.lt.s32.totalorder %s18, 3
      %p248 = pnand %p246, %p247
      %p249 = pneg %p248
      // Predicated region
      $region9: #{tpu_custom_call.1} parent=5 // pred_check
        _
      $region10: #{tpu_custom_call.1} parent=5 // pred_check_branch
        %251 = sbr.rel (%p248) target = $region12
      $region11: #{tpu_custom_call.1} parent=5 // pred_region
        %s252 = ssub.s32 %s18, 1
        // Predicated region
        $region13: #{tpu_custom_call.1} parent=11 // pred_check
          %p253 = pneg %p65
        $region14: #{tpu_custom_call.1} parent=11 // pred_check_branch
          %255 = sbr.rel (%p253) target = $region16
        $region15: #{tpu_custom_call.1} parent=11 // pred_region
          _
        $region16: #{tpu_custom_call.1} parent=11 // pred_fallthru
          _
        // Predicated region
        $region17: #{tpu_custom_call.1} parent=11 // pred_check
          %p256 = pneg %p86
        $region18: #{tpu_custom_call.1} parent=11 // pred_check_branch
          %258 = sbr.rel (%p256) target = $region20
        $region19: #{tpu_custom_call.1} parent=11 // pred_region
          _
        $region20: #{tpu_custom_call.1} parent=11 // pred_fallthru
          _
        // Predicated region
        $region21: #{tpu_custom_call.1} parent=11 // pred_check
          %p259 = pneg %p107
        $region22: #{tpu_custom_call.1} parent=11 // pred_check_branch
          %261 = sbr.rel (%p259) target = $region24
        $region23: #{tpu_custom_call.1} parent=11 // pred_region
          _
        $region24: #{tpu_custom_call.1} parent=11 // pred_fallthru
          _
        // Predicated region
        $region25: #{tpu_custom_call.1} parent=11 // pred_check
          %p262 = pneg %p128
        $region26: #{tpu_custom_call.1} parent=11 // pred_check_branch
          %264 = sbr.rel (%p262) target = $region28
        $region27: #{tpu_custom_call.1} parent=11 // pred_region
          _
        $region28: #{tpu_custom_call.1} parent=11 // pred_fallthru
          _
        // Predicated region
        $region29: #{tpu_custom_call.1} parent=11 // pred_check
          %p265 = pneg %p149
        $region30: #{tpu_custom_call.1} parent=11 // pred_check_branch
          %267 = sbr.rel (%p265) target = $region32
        $region31: #{tpu_custom_call.1} parent=11 // pred_region
          _
        $region32: #{tpu_custom_call.1} parent=11 // pred_fallthru
          _
        // Predicated region
        $region33: #{tpu_custom_call.1} parent=11 // pred_check
          %p268 = pneg %p170
        $region34: #{tpu_custom_call.1} parent=11 // pred_check_branch
          %270 = sbr.rel (%p268) target = $region36
        $region35: #{tpu_custom_call.1} parent=11 // pred_region
          _
        $region36: #{tpu_custom_call.1} parent=11 // pred_fallthru
          _
        // Predicated region
        $region37: #{tpu_custom_call.1} parent=11 // pred_check
          %p271 = pneg %p191
        $region38: #{tpu_custom_call.1} parent=11 // pred_check_branch
          %273 = sbr.rel (%p271) target = $region40
        $region39: #{tpu_custom_call.1} parent=11 // pred_region
          _
        $region40: #{tpu_custom_call.1} parent=11 // pred_fallthru
          _
        // Predicated region
        $region41: #{tpu_custom_call.1} parent=11 // pred_check
          %p274 = pneg %p212
        $region42: #{tpu_custom_call.1} parent=11 // pred_check_branch
          %276 = sbr.rel (%p274) target = $region44
        $region43: #{tpu_custom_call.1} parent=11 // pred_region
          _
        $region44: #{tpu_custom_call.1} parent=11 // pred_fallthru
          _
      $region12: #{tpu_custom_call.1} parent=5 // pred_fallthru
        _
      %p277 = scmp.lt.s32.totalorder %s18, 2
      // Predicated region
      $region45: #{tpu_custom_call.1} parent=5 // pred_check
        %p278 = pneg %p277
      $region46: #{tpu_custom_call.1} parent=5 // pred_check_branch
        %280 = sbr.rel (%p278) target = $region48
      $region47: #{tpu_custom_call.1} parent=5 // pred_region
        // Predicated region
        $region49: #{tpu_custom_call.1} parent=47 // pred_check
          %p281 = pneg %p38
        $region50: #{tpu_custom_call.1} parent=47 // pred_check_branch
          %283 = sbr.rel (%p281) target = $region52
        $region51: #{tpu_custom_call.1} parent=47 // pred_region
          %p284 = scmp.lt.s32.totalorder %s18, 1
          %s285 = scalar_select %p284, %s18, 1
          %s286 = smul.addr %s285, 8
          %s287 = smul.addr %s286, 4
          %s288 = scalar_lea.vmem %s0, %s287
        $region52: #{tpu_custom_call.1} parent=47 // pred_fallthru
          _
      $region48: #{tpu_custom_call.1} parent=5 // pred_fallthru
        _
      %p289 = scmp.le.s32.totalorder 1, %s18
      %p290 = scmp.lt.s32.totalorder %s18, 3
      %p291 = pnand %p289, %p290
      %p292 = pneg %p291
      // Predicated region
      $region53: #{tpu_custom_call.1} parent=5 // pred_check
        _
      $region54: #{tpu_custom_call.1} parent=5 // pred_check_branch
        %294 = sbr.rel (%p291) target = $region56
      $region55: #{tpu_custom_call.1} parent=5 // pred_region
        %s295 = ssub.s32 %s18, 1
        %p296 = scmp.lt.s32.totalorder %s23, 1
        %s297 = scalar_select %p296, %s23, 1
        %s298 = smul.addr %s297, 8
        %s299 = smul.addr %s298, 4
        %s300 = scalar_lea.vmem %s0, %s299
        %p301 = pneg %p44
        %p302 = pneg %p41
        %p303 = pneg %p65
        %p304 = pneg %p62
        %p305 = pneg %p86
        %p306 = pneg %p83
        %p307 = pneg %p107
        %p308 = pneg %p104
        %p309 = pneg %p128
        %p310 = pneg %p125
        %p311 = pneg %p149
        %p312 = pneg %p146
        %p313 = pneg %p170
        %p314 = pneg %p167
        %p315 = pneg %p191
        %p316 = pneg %p188
        %p317 = pneg %p212
        %p318 = pneg %p209
        %p319 = pneg %p238
        %p320 = pneg %p235
        %s321 = sand.u32 %s225, 1
        %s322 = scalar_lea.sflag [#allocation5], %s321
        %s323 = sand.u32 %s225, 1
        %s324 = smul.addr %s323, 4
        %s325 = scalar_lea.vmem [#allocation4], %s324
        %p326 = scmp.lt.s32.totalorder %s23, 1
        %s327 = scalar_select %p326, %s23, 1
        %s328 = smul.addr %s327, 8
        %s329 = smul.addr %s328, 4
        %s330 = scalar_lea.vmem %s0, %s329
        %331 = vst [vmem:[#allocation2] sm:$0xf] 0.0
        %vm332 = vcmask 1044288
        %vm333 = vcmask 850948
        %vm334 = vmor %vm333, %vm332
        %335 = vst.msk [vmem:[#allocation2 + $0x20] sm:$0xff] %vm334, 0.0
        %v336 = vld [vmem:[%s330] sm:$0xff]
        %v337 = vld [vmem:[%s330 + $0x8] sm:$0xff]
        %v338 = vld [vmem:[%s330 + $0x10] sm:$0xff]
        %v339 = vld [vmem:[%s330 + $0x18] sm:$0xff]
        %340 = vst [vmem:[#allocation2 + $0x4] sm:$0xff] %v336
        %341 = vst [vmem:[#allocation2 + $0xc] sm:$0xff] %v337
        %342 = vst [vmem:[#allocation2 + $0x14] sm:$0xff] %v338
        %vm343 = vcmask 1043456
        %vm344 = vmor %vm333, %vm343
        %345 = vst.msk [vmem:[#allocation2 + $0x1c] sm:$0xff] %vm344, %v339
        %v346 = vld [vmem:[#allocation2] sm:$0xff]
        %v347 = vld [vmem:[#allocation2 + $0x8] sm:$0xff]
        %v348 = vld [vmem:[#allocation2 + $0x10] sm:$0xff]
        %v349 = vld [vmem:[#allocation2 + $0x18] sm:$0xff]
        %v354 = vcombine.high %v346, %v346
        %v355 = vcombine.high %v347, %v347
        %v356 = vcombine.high %v348, %v348
        %v357 = vcombine.high %v349, %v349
        %358 = vrot.lane.b32.xlu0 %v346, 111
        %v359 = vpop.permute.xlu0 %358
        %360 = vrot.lane.b32.xlu0 %v354, 111
        %v361 = vpop.permute.xlu0 %360
        %362 = vrot.lane.b32.xlu0 %v347, 111
        %v363 = vpop.permute.xlu0 %362
        %364 = vrot.lane.b32.xlu0 %v355, 111
        %v365 = vpop.permute.xlu0 %364
        %366 = vrot.lane.b32.xlu0 %v348, 111
        %v367 = vpop.permute.xlu0 %366
        %368 = vrot.lane.b32.xlu0 %v356, 111
        %v369 = vpop.permute.xlu0 %368
        %370 = vrot.lane.b32.xlu0 %v349, 111
        %v371 = vpop.permute.xlu0 %370
        %372 = vrot.lane.b32.xlu0 %v357, 111
        %v373 = vpop.permute.xlu0 %372
        %vm374 = vcmask 908288
        %v375 = vsel %vm374, %v359, %v361
        %v376 = vsel %vm374, %v361, %v363
        %v377 = vsel %vm374, %v363, %v365
        %v378 = vsel %vm374, %v365, %v367
        %v379 = vsel %vm374, %v367, %v369
        %v380 = vsel %vm374, %v369, %v371
        %v381 = vsel %vm374, %v371, %v373
        %390 = vst [vmem:[#allocation3] sm:$0xf] %v375
        %391 = vst [vmem:[#allocation3 + $0x8] sm:$0xf] %v376
        %392 = vst [vmem:[#allocation3 + $0x10] sm:$0xf] %v377
        %393 = vst [vmem:[#allocation3 + $0x18] sm:$0xf] %v378
        %394 = vst [vmem:[#allocation3 + $0x20] sm:$0xf] %v379
        %395 = vst [vmem:[#allocation3 + $0x28] sm:$0xf] %v380
        %396 = vst [vmem:[#allocation3 + $0x30] sm:$0xf] %v381
        %vm397 = vcmask 846848
        %398 = vst.msk [vmem:[#allocation3 + $0x38] sm:$0xf] %vm397, %v373
        %v399 = vld [vmem:[#allocation2] sm:$0xff]
        %v400 = vld [vmem:[#allocation2 + $0x8] sm:$0xff]
        %v401 = vld [vmem:[#allocation2 + $0x10] sm:$0xff]
        %v402 = vld [vmem:[#allocation2 + $0x18] sm:$0xff]
        %v407 = vcombine.low %v399, %v399
        %v408 = vcombine.low %v400, %v400
        %v409 = vcombine.low %v401, %v401
        %v410 = vcombine.low %v402, %v402
        %411 = vrot.lane.b32.xlu0 %v407, 110
        %v412 = vpop.permute.xlu0 %411
        %413 = vrot.lane.b32.xlu0 %v399, 110
        %v414 = vpop.permute.xlu0 %413
        %415 = vrot.lane.b32.xlu0 %v408, 110
        %v416 = vpop.permute.xlu0 %415
        %417 = vrot.lane.b32.xlu0 %v400, 110
        %v418 = vpop.permute.xlu0 %417
        %419 = vrot.lane.b32.xlu0 %v409, 110
        %v420 = vpop.permute.xlu0 %419
        %421 = vrot.lane.b32.xlu0 %v401, 110
        %v422 = vpop.permute.xlu0 %421
        %423 = vrot.lane.b32.xlu0 %v410, 110
        %v424 = vpop.permute.xlu0 %423
        %425 = vrot.lane.b32.xlu0 %v402, 110
        %v426 = vpop.permute.xlu0 %425
        %vm427 = vcmask 900096
        %v428 = vsel %vm427, %v412, %v414
        %v429 = vsel %vm427, %v414, %v416
        %v430 = vsel %vm427, %v416, %v418
        %v431 = vsel %vm427, %v418, %v420
        %v432 = vsel %vm427, %v420, %v422
        %v433 = vsel %vm427, %v422, %v424
        %v434 = vsel %vm427, %v424, %v426
        %443 = vst [vmem:[#allocation3] sm:$0xf0] %v428
        %444 = vst [vmem:[#allocation3 + $0x8] sm:$0xf0] %v429
        %445 = vst [vmem:[#allocation3 + $0x10] sm:$0xf0] %v430
        %446 = vst [vmem:[#allocation3 + $0x18] sm:$0xf0] %v431
        %447 = vst [vmem:[#allocation3 + $0x20] sm:$0xf0] %v432
        %448 = vst [vmem:[#allocation3 + $0x28] sm:$0xf0] %v433
        %449 = vst [vmem:[#allocation3 + $0x30] sm:$0xf0] %v434
        %450 = vst.msk [vmem:[#allocation3 + $0x38] sm:$0xf0] %vm333, %v426
        %v451 = vld [vmem:[#allocation2] sm:$0xff]
        %v452 = vld [vmem:[#allocation2 + $0x8] sm:$0xff]
        %v453 = vld [vmem:[#allocation2 + $0x10] sm:$0xff]
        %v454 = vld [vmem:[#allocation2 + $0x18] sm:$0xff]
        %v459 = vcombine.high %v451, %v451
        %v460 = vcombine.high %v452, %v452
        %v461 = vcombine.high %v453, %v453
        %v462 = vcombine.high %v454, %v454
        %463 = vrot.lane.b32.xlu0 %v451, 109
        %v464 = vpop.permute.xlu0 %463
        %465 = vrot.lane.b32.xlu0 %v459, 109
        %v466 = vpop.permute.xlu0 %465
        %467 = vrot.lane.b32.xlu0 %v452, 109
        %v468 = vpop.permute.xlu0 %467
        %469 = vrot.lane.b32.xlu0 %v460, 109
        %v470 = vpop.permute.xlu0 %469
        %471 = vrot.lane.b32.xlu0 %v453, 109
        %v472 = vpop.permute.xlu0 %471
        %473 = vrot.lane.b32.xlu0 %v461, 109
        %v474 = vpop.permute.xlu0 %473
        %475 = vrot.lane.b32.xlu0 %v454, 109
        %v476 = vpop.permute.xlu0 %475
        %477 = vrot.lane.b32.xlu0 %v462, 109
        %v478 = vpop.permute.xlu0 %477
        %vm479 = vcmask 891904
        %v480 = vsel %vm479, %v464, %v466
        %v481 = vsel %vm479, %v466, %v468
        %v482 = vsel %vm479, %v468, %v470
        %v483 = vsel %vm479, %v470, %v472
        %v484 = vsel %vm479, %v472, %v474
        %v485 = vsel %vm479, %v474, %v476
        %v486 = vsel %vm479, %v476, %v478
        %495 = vst [vmem:[#allocation3 + $0x40] sm:$0xf] %v480
        %496 = vst [vmem:[#allocation3 + $0x48] sm:$0xf] %v481
        %497 = vst [vmem:[#allocation3 + $0x50] sm:$0xf] %v482
        %498 = vst [vmem:[#allocation3 + $0x58] sm:$0xf] %v483
        %499 = vst [vmem:[#allocation3 + $0x60] sm:$0xf] %v484
        %500 = vst [vmem:[#allocation3 + $0x68] sm:$0xf] %v485
        %501 = vst [vmem:[#allocation3 + $0x70] sm:$0xf] %v486
        %502 = vst.msk [vmem:[#allocation3 + $0x78] sm:$0xf] %vm397, %v478
        %v503 = vld [vmem:[#allocation2] sm:$0xff]
        %v504 = vld [vmem:[#allocation2 + $0x8] sm:$0xff]
        %v505 = vld [vmem:[#allocation2 + $0x10] sm:$0xff]
        %v506 = vld [vmem:[#allocation2 + $0x18] sm:$0xff]
        %v507 = vld [vmem:[#allocation2 + $0x20] sm:$0xf]
        %v513 = vcombine.low %v503, %v503
        %v514 = vcombine.low %v504, %v504
        %v515 = vcombine.low %v505, %v505
        %v516 = vcombine.low %v506, %v506
        %v517 = vcombine.low %v507, %v507
        %518 = vrot.lane.b32.xlu0 %v513, 101
        %v519 = vpop.permute.xlu0 %518
        %520 = vrot.lane.b32.xlu0 %v503, 101
        %v521 = vpop.permute.xlu0 %520
        %522 = vrot.lane.b32.xlu0 %v514, 101
        %v523 = vpop.permute.xlu0 %522
        %524 = vrot.lane.b32.xlu0 %v504, 101
        %v525 = vpop.permute.xlu0 %524
        %526 = vrot.lane.b32.xlu0 %v515, 101
        %v527 = vpop.permute.xlu0 %526
        %528 = vrot.lane.b32.xlu0 %v505, 101
        %v529 = vpop.permute.xlu0 %528
        %530 = vrot.lane.b32.xlu0 %v516, 101
        %v531 = vpop.permute.xlu0 %530
        %532 = vrot.lane.b32.xlu0 %v506, 101
        %v533 = vpop.permute.xlu0 %532
        %534 = vrot.lane.b32.xlu0 %v517, 101
        %v535 = vpop.permute.xlu0 %534
        %vm536 = vcmask 826368
        %v537 = vsel %vm536, %v519, %v521
        %v538 = vsel %vm536, %v521, %v523
        %v539 = vsel %vm536, %v523, %v525
        %v540 = vsel %vm536, %v525, %v527
        %v541 = vsel %vm536, %v527, %v529
        %v542 = vsel %vm536, %v529, %v531
        %v543 = vsel %vm536, %v531, %v533
        %v544 = vsel %vm536, %v533, %v535
        %553 = vst [vmem:[#allocation3 + $0x40] sm:$0xf0] %v537
        %554 = vst [vmem:[#allocation3 + $0x48] sm:$0xf0] %v538
        %555 = vst [vmem:[#allocation3 + $0x50] sm:$0xf0] %v539
        %556 = vst [vmem:[#allocation3 + $0x58] sm:$0xf0] %v540
        %557 = vst [vmem:[#allocation3 + $0x60] sm:$0xf0] %v541
        %558 = vst [vmem:[#allocation3 + $0x68] sm:$0xf0] %v542
        %559 = vst [vmem:[#allocation3 + $0x70] sm:$0xf0] %v543
        %560 = vst.msk [vmem:[#allocation3 + $0x78] sm:$0xf0] %vm333, %v544
        %v561 = vld [vmem:[#allocation2] sm:$0xff]
        %v562 = vld [vmem:[#allocation2 + $0x8] sm:$0xff]
        %v563 = vld [vmem:[#allocation2 + $0x10] sm:$0xff]
        %v564 = vld [vmem:[#allocation2 + $0x18] sm:$0xff]
        %v565 = vld [vmem:[#allocation2 + $0x20] sm:$0xf]
        %v571 = vcombine.high %v561, %v561
        %v572 = vcombine.high %v562, %v562
        %v573 = vcombine.high %v563, %v563
        %v574 = vcombine.high %v564, %v564
        %575 = vrot.lane.b32.xlu0 %v561, 100
        %v576 = vpop.permute.xlu0 %575
        %577 = vrot.lane.b32.xlu0 %v571, 100
        %v578 = vpop.permute.xlu0 %577
        %579 = vrot.lane.b32.xlu0 %v562, 100
        %v580 = vpop.permute.xlu0 %579
        %581 = vrot.lane.b32.xlu0 %v572, 100
        %v582 = vpop.permute.xlu0 %581
        %583 = vrot.lane.b32.xlu0 %v563, 100
        %v584 = vpop.permute.xlu0 %583
        %585 = vrot.lane.b32.xlu0 %v573, 100
        %v586 = vpop.permute.xlu0 %585
        %587 = vrot.lane.b32.xlu0 %v564, 100
        %v588 = vpop.permute.xlu0 %587
        %589 = vrot.lane.b32.xlu0 %v574, 100
        %v590 = vpop.permute.xlu0 %589
        %591 = vrot.lane.b32.xlu0 %v565, 100
        %v592 = vpop.permute.xlu0 %591
        %vm593 = vcmask 818176
        %v594 = vsel %vm593, %v576, %v578
        %v595 = vsel %vm593, %v578, %v580
        %v596 = vsel %vm593, %v580, %v582
        %v597 = vsel %vm593, %v582, %v584
        %v598 = vsel %vm593, %v584, %v586
        %v599 = vsel %vm593, %v586, %v588
        %v600 = vsel %vm593, %v588, %v590
        %v601 = vsel %vm593, %v590, %v592
        %610 = vst [vmem:[#allocation3 + $0x80] sm:$0xf] %v594
        %611 = vst [vmem:[#allocation3 + $0x88] sm:$0xf] %v595
        %612 = vst [vmem:[#allocation3 + $0x90] sm:$0xf] %v596
        %613 = vst [vmem:[#allocation3 + $0x98] sm:$0xf] %v597
        %614 = vst [vmem:[#allocation3 + $0xa0] sm:$0xf] %v598
        %615 = vst [vmem:[#allocation3 + $0xa8] sm:$0xf] %v599
        %616 = vst [vmem:[#allocation3 + $0xb0] sm:$0xf] %v600
        %617 = vst.msk [vmem:[#allocation3 + $0xb8] sm:$0xf] %vm397, %v601
        %v618 = vld [vmem:[#allocation2] sm:$0xff]
        %v619 = vld [vmem:[#allocation2 + $0x8] sm:$0xff]
        %v620 = vld [vmem:[#allocation2 + $0x10] sm:$0xff]
        %v621 = vld [vmem:[#allocation2 + $0x18] sm:$0xff]
        %v622 = vld [vmem:[#allocation2 + $0x20] sm:$0xf]
        %v628 = vcombine.low %v618, %v618
        %v629 = vcombine.low %v619, %v619
        %v630 = vcombine.low %v620, %v620
        %v631 = vcombine.low %v621, %v621
        %v632 = vcombine.low %v622, %v622
        %633 = vrot.lane.b32.xlu0 %v628, 99
        %v634 = vpop.permute.xlu0 %633
        %635 = vrot.lane.b32.xlu0 %v618, 99
        %v636 = vpop.permute.xlu0 %635
        %637 = vrot.lane.b32.xlu0 %v629, 99
        %v638 = vpop.permute.xlu0 %637
        %639 = vrot.lane.b32.xlu0 %v619, 99
        %v640 = vpop.permute.xlu0 %639
        %641 = vrot.lane.b32.xlu0 %v630, 99
        %v642 = vpop.permute.xlu0 %641
        %643 = vrot.lane.b32.xlu0 %v620, 99
        %v644 = vpop.permute.xlu0 %643
        %645 = vrot.lane.b32.xlu0 %v631, 99
        %v646 = vpop.permute.xlu0 %645
        %647 = vrot.lane.b32.xlu0 %v621, 99
        %v648 = vpop.permute.xlu0 %647
        %649 = vrot.lane.b32.xlu0 %v632, 99
        %v650 = vpop.permute.xlu0 %649
        %vm651 = vcmask 809984
        %v652 = vsel %vm651, %v634, %v636
        %v653 = vsel %vm651, %v636, %v638
        %v654 = vsel %vm651, %v638, %v640
        %v655 = vsel %vm651, %v640, %v642
        %v656 = vsel %vm651, %v642, %v644
        %v657 = vsel %vm651, %v644, %v646
        %v658 = vsel %vm651, %v646, %v648
        %v659 = vsel %vm651, %v648, %v650
        %668 = vst [vmem:[#allocation3 + $0x80] sm:$0xf0] %v652
        %669 = vst [vmem:[#allocation3 + $0x88] sm:$0xf0] %v653
        %670 = vst [vmem:[#allocation3 + $0x90] sm:$0xf0] %v654
        %671 = vst [vmem:[#allocation3 + $0x98] sm:$0xf0] %v655
        %672 = vst [vmem:[#allocation3 + $0xa0] sm:$0xf0] %v656
        %673 = vst [vmem:[#allocation3 + $0xa8] sm:$0xf0] %v657
        %674 = vst [vmem:[#allocation3 + $0xb0] sm:$0xf0] %v658
        %675 = vst.msk [vmem:[#allocation3 + $0xb8] sm:$0xf0] %vm333, %v659
        %v676 = vld [vmem:[#allocation2] sm:$0xff]
        %v677 = vld [vmem:[#allocation2 + $0x8] sm:$0xff]
        %v678 = vld [vmem:[#allocation2 + $0x10] sm:$0xff]
        %v679 = vld [vmem:[#allocation2 + $0x18] sm:$0xff]
        %v680 = vld [vmem:[#allocation2 + $0x20] sm:$0xf]
        %v686 = vcombine.high %v676, %v676
        %v687 = vcombine.high %v677, %v677
        %v688 = vcombine.high %v678, %v678
        %v689 = vcombine.high %v679, %v679
        %690 = vrot.lane.b32.xlu0 %v676, 91
        %v691 = vpop.permute.xlu0 %690
        %692 = vrot.lane.b32.xlu0 %v686, 91
        %v693 = vpop.permute.xlu0 %692
        %694 = vrot.lane.b32.xlu0 %v677, 91
        %v695 = vpop.permute.xlu0 %694
        %696 = vrot.lane.b32.xlu0 %v687, 91
        %v697 = vpop.permute.xlu0 %696
        %698 = vrot.lane.b32.xlu0 %v678, 91
        %v699 = vpop.permute.xlu0 %698
        %700 = vrot.lane.b32.xlu0 %v688, 91
        %v701 = vpop.permute.xlu0 %700
        %702 = vrot.lane.b32.xlu0 %v679, 91
        %v703 = vpop.permute.xlu0 %702
        %704 = vrot.lane.b32.xlu0 %v689, 91
        %v705 = vpop.permute.xlu0 %704
        %706 = vrot.lane.b32.xlu0 %v680, 91
        %v707 = vpop.permute.xlu0 %706
        %vm708 = vcmask 744448
        %v709 = vsel %vm708, %v691, %v693
        %v710 = vsel %vm708, %v693, %v695
        %v711 = vsel %vm708, %v695, %v697
        %v712 = vsel %vm708, %v697, %v699
        %v713 = vsel %vm708, %v699, %v701
        %v714 = vsel %vm708, %v701, %v703
        %v715 = vsel %vm708, %v703, %v705
        %v716 = vsel %vm708, %v705, %v707
        %725 = vst [vmem:[#allocation3 + $0xc0] sm:$0xf] %v709
        %726 = vst [vmem:[#allocation3 + $0xc8] sm:$0xf] %v710
        %727 = vst [vmem:[#allocation3 + $0xd0] sm:$0xf] %v711
        %728 = vst [vmem:[#allocation3 + $0xd8] sm:$0xf] %v712
        %729 = vst [vmem:[#allocation3 + $0xe0] sm:$0xf] %v713
        %730 = vst [vmem:[#allocation3 + $0xe8] sm:$0xf] %v714
        %731 = vst [vmem:[#allocation3 + $0xf0] sm:$0xf] %v715
        %732 = vst.msk [vmem:[#allocation3 + $0xf8] sm:$0xf] %vm397, %v716
        %v733 = vld [vmem:[#allocation2] sm:$0xff]
        %v734 = vld [vmem:[#allocation2 + $0x8] sm:$0xff]
        %v735 = vld [vmem:[#allocation2 + $0x10] sm:$0xff]
        %v736 = vld [vmem:[#allocation2 + $0x18] sm:$0xff]
        %v737 = vld [vmem:[#allocation2 + $0x20] sm:$0xf]
        %v743 = vcombine.low %v733, %v733
        %v744 = vcombine.low %v734, %v734
        %v745 = vcombine.low %v735, %v735
        %v746 = vcombine.low %v736, %v736
        %v747 = vcombine.low %v737, %v737
        %748 = vrot.lane.b32.xlu0 %v743, 90
        %v749 = vpop.permute.xlu0 %748
        %750 = vrot.lane.b32.xlu0 %v733, 90
        %v751 = vpop.permute.xlu0 %750
        %752 = vrot.lane.b32.xlu0 %v744, 90
        %v753 = vpop.permute.xlu0 %752
        %754 = vrot.lane.b32.xlu0 %v734, 90
        %v755 = vpop.permute.xlu0 %754
        %756 = vrot.lane.b32.xlu0 %v745, 90
        %v757 = vpop.permute.xlu0 %756
        %758 = vrot.lane.b32.xlu0 %v735, 90
        %v759 = vpop.permute.xlu0 %758
        %760 = vrot.lane.b32.xlu0 %v746, 90
        %v761 = vpop.permute.xlu0 %760
        %762 = vrot.lane.b32.xlu0 %v736, 90
        %v763 = vpop.permute.xlu0 %762
        %764 = vrot.lane.b32.xlu0 %v747, 90
        %v765 = vpop.permute.xlu0 %764
        %vm766 = vcmask 736256
        %v767 = vsel %vm766, %v749, %v751
        %v768 = vsel %vm766, %v751, %v753
        %v769 = vsel %vm766, %v753, %v755
        %v770 = vsel %vm766, %v755, %v757
        %v771 = vsel %vm766, %v757, %v759
        %v772 = vsel %vm766, %v759, %v761
        %v773 = vsel %vm766, %v761, %v763
        %v774 = vsel %vm766, %v763, %v765
        %783 = vst [vmem:[#allocation3 + $0xc0] sm:$0xf0] %v767
        %784 = vst [vmem:[#allocation3 + $0xc8] sm:$0xf0] %v768
        %785 = vst [vmem:[#allocation3 + $0xd0] sm:$0xf0] %v769
        %786 = vst [vmem:[#allocation3 + $0xd8] sm:$0xf0] %v770
        %787 = vst [vmem:[#allocation3 + $0xe0] sm:$0xf0] %v771
        %788 = vst [vmem:[#allocation3 + $0xe8] sm:$0xf0] %v772
        %789 = vst [vmem:[#allocation3 + $0xf0] sm:$0xf0] %v773
        %790 = vst.msk [vmem:[#allocation3 + $0xf8] sm:$0xf0] %vm333, %v774
        %v791 = vld [vmem:[#allocation2] sm:$0xff]
        %v792 = vld [vmem:[#allocation2 + $0x8] sm:$0xff]
        %v793 = vld [vmem:[#allocation2 + $0x10] sm:$0xff]
        %v794 = vld [vmem:[#allocation2 + $0x18] sm:$0xff]
        %v795 = vld [vmem:[#allocation2 + $0x20] sm:$0xf]
        %v801 = vcombine.high %v791, %v791
        %v802 = vcombine.high %v792, %v792
        %v803 = vcombine.high %v793, %v793
        %v804 = vcombine.high %v794, %v794
        %805 = vrot.lane.b32.xlu0 %v791, 89
        %v806 = vpop.permute.xlu0 %805
        %807 = vrot.lane.b32.xlu0 %v801, 89
        %v808 = vpop.permute.xlu0 %807
        %809 = vrot.lane.b32.xlu0 %v792, 89
        %v810 = vpop.permute.xlu0 %809
        %811 = vrot.lane.b32.xlu0 %v802, 89
        %v812 = vpop.permute.xlu0 %811
        %813 = vrot.lane.b32.xlu0 %v793, 89
        %v814 = vpop.permute.xlu0 %813
        %815 = vrot.lane.b32.xlu0 %v803, 89
        %v816 = vpop.permute.xlu0 %815
        %817 = vrot.lane.b32.xlu0 %v794, 89
        %v818 = vpop.permute.xlu0 %817
        %819 = vrot.lane.b32.xlu0 %v804, 89
        %v820 = vpop.permute.xlu0 %819
        %821 = vrot.lane.b32.xlu0 %v795, 89
        %v822 = vpop.permute.xlu0 %821
        %vm823 = vcmask 728064
        %v824 = vsel %vm823, %v806, %v808
        %v825 = vsel %vm823, %v808, %v810
        %v826 = vsel %vm823, %v810, %v812
        %v827 = vsel %vm823, %v812, %v814
        %v828 = vsel %vm823, %v814, %v816
        %v829 = vsel %vm823, %v816, %v818
        %v830 = vsel %vm823, %v818, %v820
        %v831 = vsel %vm823, %v820, %v822
        %840 = vst [vmem:[#allocation3 + $0x100] sm:$0xf] %v824
        %841 = vst [vmem:[#allocation3 + $0x108] sm:$0xf] %v825
        %842 = vst [vmem:[#allocation3 + $0x110] sm:$0xf] %v826
        %843 = vst [vmem:[#allocation3 + $0x118] sm:$0xf] %v827
        %844 = vst [vmem:[#allocation3 + $0x120] sm:$0xf] %v828
        %845 = vst [vmem:[#allocation3 + $0x128] sm:$0xf] %v829
        %846 = vst [vmem:[#allocation3 + $0x130] sm:$0xf] %v830
        %847 = vst.msk [vmem:[#allocation3 + $0x138] sm:$0xf] %vm397, %v831
        %v848 = vld [vmem:[#allocation2] sm:$0xff]
        %v849 = vld [vmem:[#allocation2 + $0x8] sm:$0xff]
        %v850 = vld [vmem:[#allocation2 + $0x10] sm:$0xff]
        %v851 = vld [vmem:[#allocation2 + $0x18] sm:$0xff]
        %v852 = vld [vmem:[#allocation2 + $0x20] sm:$0xf]
        %v858 = vcombine.low %v848, %v848
        %v859 = vcombine.low %v849, %v849
        %v860 = vcombine.low %v850, %v850
        %v861 = vcombine.low %v851, %v851
        %v862 = vcombine.low %v852, %v852
        %863 = vrot.lane.b32.xlu0 %v858, 11
        %v864 = vpop.permute.xlu0 %863
        %865 = vrot.lane.b32.xlu0 %v848, 11
        %v866 = vpop.permute.xlu0 %865
        %867 = vrot.lane.b32.xlu0 %v859, 11
        %v868 = vpop.permute.xlu0 %867
        %869 = vrot.lane.b32.xlu0 %v849, 11
        %v870 = vpop.permute.xlu0 %869
        %871 = vrot.lane.b32.xlu0 %v860, 11
        %v872 = vpop.permute.xlu0 %871
        %873 = vrot.lane.b32.xlu0 %v850, 11
        %v874 = vpop.permute.xlu0 %873
        %875 = vrot.lane.b32.xlu0 %v861, 11
        %v876 = vpop.permute.xlu0 %875
        %877 = vrot.lane.b32.xlu0 %v851, 11
        %v878 = vpop.permute.xlu0 %877
        %879 = vrot.lane.b32.xlu0 %v862, 11
        %v880 = vpop.permute.xlu0 %879
        %vm881 = vcmask 89088
        %v882 = vsel %vm881, %v864, %v866
        %v883 = vsel %vm881, %v866, %v868
        %v884 = vsel %vm881, %v868, %v870
        %v885 = vsel %vm881, %v870, %v872
        %v886 = vsel %vm881, %v872, %v874
        %v887 = vsel %vm881, %v874, %v876
        %v888 = vsel %vm881, %v876, %v878
        %v889 = vsel %vm881, %v878, %v880
        %898 = vst [vmem:[#allocation3 + $0x100] sm:$0xf0] %v882
        %899 = vst [vmem:[#allocation3 + $0x108] sm:$0xf0] %v883
        %900 = vst [vmem:[#allocation3 + $0x110] sm:$0xf0] %v884
        %901 = vst [vmem:[#allocation3 + $0x118] sm:$0xf0] %v885
        %902 = vst [vmem:[#allocation3 + $0x120] sm:$0xf0] %v886
        %903 = vst [vmem:[#allocation3 + $0x128] sm:$0xf0] %v887
        %904 = vst [vmem:[#allocation3 + $0x130] sm:$0xf0] %v888
        %905 = vst.msk [vmem:[#allocation3 + $0x138] sm:$0xf0] %vm333, %v889
        %v906 = vld [vmem:[#allocation2] sm:$0xff]
        %v907 = vld [vmem:[#allocation2 + $0x8] sm:$0xff]
        %v908 = vld [vmem:[#allocation2 + $0x10] sm:$0xff]
        %v909 = vld [vmem:[#allocation2 + $0x18] sm:$0xff]
        %v910 = vld [vmem:[#allocation2 + $0x20] sm:$0xf]
        %v916 = vcombine.high %v906, %v906
        %v917 = vcombine.high %v907, %v907
        %v918 = vcombine.high %v908, %v908
        %v919 = vcombine.high %v909, %v909
        %920 = vrot.lane.b32.xlu0 %v906, 10
        %v921 = vpop.permute.xlu0 %920
        %922 = vrot.lane.b32.xlu0 %v916, 10
        %v923 = vpop.permute.xlu0 %922
        %924 = vrot.lane.b32.xlu0 %v907, 10
        %v925 = vpop.permute.xlu0 %924
        %926 = vrot.lane.b32.xlu0 %v917, 10
        %v927 = vpop.permute.xlu0 %926
        %928 = vrot.lane.b32.xlu0 %v908, 10
        %v929 = vpop.permute.xlu0 %928
        %930 = vrot.lane.b32.xlu0 %v918, 10
        %v931 = vpop.permute.xlu0 %930
        %932 = vrot.lane.b32.xlu0 %v909, 10
        %v933 = vpop.permute.xlu0 %932
        %934 = vrot.lane.b32.xlu0 %v919, 10
        %v935 = vpop.permute.xlu0 %934
        %936 = vrot.lane.b32.xlu0 %v910, 10
        %v937 = vpop.permute.xlu0 %936
        %vm938 = vcmask 80896
        %v939 = vsel %vm938, %v921, %v923
        %v940 = vsel %vm938, %v923, %v925
        %v941 = vsel %vm938, %v925, %v927
        %v942 = vsel %vm938, %v927, %v929
        %v943 = vsel %vm938, %v929, %v931
        %v944 = vsel %vm938, %v931, %v933
        %v945 = vsel %vm938, %v933, %v935
        %v946 = vsel %vm938, %v935, %v937
        %955 = vst [vmem:[#allocation3 + $0x140] sm:$0xf] %v939
        %956 = vst [vmem:[#allocation3 + $0x148] sm:$0xf] %v940
        %957 = vst [vmem:[#allocation3 + $0x150] sm:$0xf] %v941
        %958 = vst [vmem:[#allocation3 + $0x158] sm:$0xf] %v942
        %959 = vst [vmem:[#allocation3 + $0x160] sm:$0xf] %v943
        %960 = vst [vmem:[#allocation3 + $0x168] sm:$0xf] %v944
        %961 = vst [vmem:[#allocation3 + $0x170] sm:$0xf] %v945
        %962 = vst.msk [vmem:[#allocation3 + $0x178] sm:$0xf] %vm397, %v946
        %v963 = vld [vmem:[#allocation2] sm:$0xff]
        %v964 = vld [vmem:[#allocation2 + $0x8] sm:$0xff]
        %v965 = vld [vmem:[#allocation2 + $0x10] sm:$0xff]
        %v966 = vld [vmem:[#allocation2 + $0x18] sm:$0xff]
        %v967 = vld [vmem:[#allocation2 + $0x20] sm:$0xf]
        %v973 = vcombine.low %v963, %v963
        %v974 = vcombine.low %v964, %v964
        %v975 = vcombine.low %v965, %v965
        %v976 = vcombine.low %v966, %v966
        %v977 = vcombine.low %v967, %v967
        %978 = vrot.lane.b32.xlu0 %v973, 9
        %v979 = vpop.permute.xlu0 %978
        %980 = vrot.lane.b32.xlu0 %v963, 9
        %v981 = vpop.permute.xlu0 %980
        %982 = vrot.lane.b32.xlu0 %v974, 9
        %v983 = vpop.permute.xlu0 %982
        %984 = vrot.lane.b32.xlu0 %v964, 9
        %v985 = vpop.permute.xlu0 %984
        %986 = vrot.lane.b32.xlu0 %v975, 9
        %v987 = vpop.permute.xlu0 %986
        %988 = vrot.lane.b32.xlu0 %v965, 9
        %v989 = vpop.permute.xlu0 %988
        %990 = vrot.lane.b32.xlu0 %v976, 9
        %v991 = vpop.permute.xlu0 %990
        %992 = vrot.lane.b32.xlu0 %v966, 9
        %v993 = vpop.permute.xlu0 %992
        %994 = vrot.lane.b32.xlu0 %v977, 9
        %v995 = vpop.permute.xlu0 %994
        %vm996 = vcmask 72704
        %v997 = vsel %vm996, %v979, %v981
        %v998 = vsel %vm996, %v981, %v983
        %v999 = vsel %vm996, %v983, %v985
        %v1000 = vsel %vm996, %v985, %v987
        %v1001 = vsel %vm996, %v987, %v989
        %v1002 = vsel %vm996, %v989, %v991
        %v1003 = vsel %vm996, %v991, %v993
        %v1004 = vsel %vm996, %v993, %v995
        %1013 = vst [vmem:[#allocation3 + $0x140] sm:$0xf0] %v997
        %1014 = vst [vmem:[#allocation3 + $0x148] sm:$0xf0] %v998
        %1015 = vst [vmem:[#allocation3 + $0x150] sm:$0xf0] %v999
        %1016 = vst [vmem:[#allocation3 + $0x158] sm:$0xf0] %v1000
        %1017 = vst [vmem:[#allocation3 + $0x160] sm:$0xf0] %v1001
        %1018 = vst [vmem:[#allocation3 + $0x168] sm:$0xf0] %v1002
        %1019 = vst [vmem:[#allocation3 + $0x170] sm:$0xf0] %v1003
        %1020 = vst.msk [vmem:[#allocation3 + $0x178] sm:$0xf0] %vm333, %v1004
        %v1021 = vld [vmem:[#allocation2] sm:$0xff]
        %v1022 = vld [vmem:[#allocation2 + $0x8] sm:$0xff]
        %v1023 = vld [vmem:[#allocation2 + $0x10] sm:$0xff]
        %v1024 = vld [vmem:[#allocation2 + $0x18] sm:$0xff]
        %v1025 = vld [vmem:[#allocation2 + $0x20] sm:$0xf]
        %v1031 = vcombine.high %v1021, %v1021
        %v1032 = vcombine.high %v1022, %v1022
        %v1033 = vcombine.high %v1023, %v1023
        %v1034 = vcombine.high %v1024, %v1024
        %1035 = vrot.lane.b32.xlu0 %v1021, 1
        %v1036 = vpop.permute.xlu0 %1035
        %1037 = vrot.lane.b32.xlu0 %v1031, 1
        %v1038 = vpop.permute.xlu0 %1037
        %1039 = vrot.lane.b32.xlu0 %v1022, 1
        %v1040 = vpop.permute.xlu0 %1039
        %1041 = vrot.lane.b32.xlu0 %v1032, 1
        %v1042 = vpop.permute.xlu0 %1041
        %1043 = vrot.lane.b32.xlu0 %v1023, 1
        %v1044 = vpop.permute.xlu0 %1043
        %1045 = vrot.lane.b32.xlu0 %v1033, 1
        %v1046 = vpop.permute.xlu0 %1045
        %1047 = vrot.lane.b32.xlu0 %v1024, 1
        %v1048 = vpop.permute.xlu0 %1047
        %1049 = vrot.lane.b32.xlu0 %v1034, 1
        %v1050 = vpop.permute.xlu0 %1049
        %1051 = vrot.lane.b32.xlu0 %v1025, 1
        %v1052 = vpop.permute.xlu0 %1051
        %vm1053 = vcmask 7168
        %v1054 = vsel %vm1053, %v1036, %v1038
        %v1055 = vsel %vm1053, %v1038, %v1040
        %v1056 = vsel %vm1053, %v1040, %v1042
        %v1057 = vsel %vm1053, %v1042, %v1044
        %v1058 = vsel %vm1053, %v1044, %v1046
        %v1059 = vsel %vm1053, %v1046, %v1048
        %v1060 = vsel %vm1053, %v1048, %v1050
        %v1061 = vsel %vm1053, %v1050, %v1052
        %1070 = vst [vmem:[#allocation3 + $0x180] sm:$0xf] %v1054
        %1071 = vst [vmem:[#allocation3 + $0x188] sm:$0xf] %v1055
        %1072 = vst [vmem:[#allocation3 + $0x190] sm:$0xf] %v1056
        %1073 = vst [vmem:[#allocation3 + $0x198] sm:$0xf] %v1057
        %1074 = vst [vmem:[#allocation3 + $0x1a0] sm:$0xf] %v1058
        %1075 = vst [vmem:[#allocation3 + $0x1a8] sm:$0xf] %v1059
        %1076 = vst [vmem:[#allocation3 + $0x1b0] sm:$0xf] %v1060
        %1077 = vst.msk [vmem:[#allocation3 + $0x1b8] sm:$0xf] %vm397, %v1061
        %v1078 = vld [vmem:[#allocation2 + $0x4] sm:$0xff]
        %v1079 = vld [vmem:[#allocation2 + $0xc] sm:$0xff]
        %v1080 = vld [vmem:[#allocation2 + $0x14] sm:$0xff]
        %v1081 = vld [vmem:[#allocation2 + $0x1c] sm:$0xff]
        %v1086 = vcombine.low %v1078, %v1078
        %v1087 = vcombine.low %v1079, %v1079
        %v1088 = vcombine.low %v1080, %v1080
        %v1089 = vcombine.low %v1081, %v1081
        %1094 = vst [vmem:[#allocation3 + $0x180] sm:$0xf0] %v1086
        %1095 = vst [vmem:[#allocation3 + $0x188] sm:$0xf0] %v1078
        %1096 = vst [vmem:[#allocation3 + $0x190] sm:$0xf0] %v1087
        %1097 = vst [vmem:[#allocation3 + $0x198] sm:$0xf0] %v1079
        %1098 = vst [vmem:[#allocation3 + $0x1a0] sm:$0xf0] %v1088
        %1099 = vst [vmem:[#allocation3 + $0x1a8] sm:$0xf0] %v1080
        %1100 = vst [vmem:[#allocation3 + $0x1b0] sm:$0xf0] %v1089
        %1101 = vst.msk [vmem:[#allocation3 + $0x1b8] sm:$0xf0] %vm333, %v1081
        %v1102 = vld [vmem:[#allocation2 + $0x4] sm:$0xff]
        %v1103 = vld [vmem:[#allocation2 + $0xc] sm:$0xff]
        %v1104 = vld [vmem:[#allocation2 + $0x14] sm:$0xff]
        %v1105 = vld [vmem:[#allocation2 + $0x1c] sm:$0xff]
        %v1110 = vcombine.high %v1102, %v1102
        %v1111 = vcombine.high %v1103, %v1103
        %v1112 = vcombine.high %v1104, %v1104
        %v1113 = vcombine.high %v1105, %v1105
        %1114 = vrot.lane.b32.xlu0 %v1102, 127
        %v1115 = vpop.permute.xlu0 %1114
        %1116 = vrot.lane.b32.xlu0 %v1110, 127
        %v1117 = vpop.permute.xlu0 %1116
        %1118 = vrot.lane.b32.xlu0 %v1103, 127
        %v1119 = vpop.permute.xlu0 %1118
        %1120 = vrot.lane.b32.xlu0 %v1111, 127
        %v1121 = vpop.permute.xlu0 %1120
        %1122 = vrot.lane.b32.xlu0 %v1104, 127
        %v1123 = vpop.permute.xlu0 %1122
        %1124 = vrot.lane.b32.xlu0 %v1112, 127
        %v1125 = vpop.permute.xlu0 %1124
        %1126 = vrot.lane.b32.xlu0 %v1105, 127
        %v1127 = vpop.permute.xlu0 %1126
        %1128 = vrot.lane.b32.xlu0 %v1113, 127
        %v1129 = vpop.permute.xlu0 %1128
        %vm1130 = vcmask 1039360
        %v1131 = vsel %vm1130, %v1115, %v1117
        %v1132 = vsel %vm1130, %v1117, %v1119
        %v1133 = vsel %vm1130, %v1119, %v1121
        %v1134 = vsel %vm1130, %v1121, %v1123
        %v1135 = vsel %vm1130, %v1123, %v1125
        %v1136 = vsel %vm1130, %v1125, %v1127
        %v1137 = vsel %vm1130, %v1127, %v1129
        %1146 = vst [vmem:[#allocation3 + $0x1c0] sm:$0xf] %v1131
        %1147 = vst [vmem:[#allocation3 + $0x1c8] sm:$0xf] %v1132
        %1148 = vst [vmem:[#allocation3 + $0x1d0] sm:$0xf] %v1133
        %1149 = vst [vmem:[#allocation3 + $0x1d8] sm:$0xf] %v1134
        %1150 = vst [vmem:[#allocation3 + $0x1e0] sm:$0xf] %v1135
        %1151 = vst [vmem:[#allocation3 + $0x1e8] sm:$0xf] %v1136
        %1152 = vst [vmem:[#allocation3 + $0x1f0] sm:$0xf] %v1137
        %1153 = vst.msk [vmem:[#allocation3 + $0x1f8] sm:$0xf] %vm397, %v1129
        %v1154 = vld [vmem:[#allocation2 + $0x4] sm:$0xff]
        %v1155 = vld [vmem:[#allocation2 + $0xc] sm:$0xff]
        %v1156 = vld [vmem:[#allocation2 + $0x14] sm:$0xff]
        %v1157 = vld [vmem:[#allocation2 + $0x1c] sm:$0xff]
        %v1162 = vcombine.low %v1154, %v1154
        %v1163 = vcombine.low %v1155, %v1155
        %v1164 = vcombine.low %v1156, %v1156
        %v1165 = vcombine.low %v1157, %v1157
        %1166 = vrot.lane.b32.xlu0 %v1162, 119
        %v1167 = vpop.permute.xlu0 %1166
        %1168 = vrot.lane.b32.xlu0 %v1154, 119
        %v1169 = vpop.permute.xlu0 %1168
        %1170 = vrot.lane.b32.xlu0 %v1163, 119
        %v1171 = vpop.permute.xlu0 %1170
        %1172 = vrot.lane.b32.xlu0 %v1155, 119
        %v1173 = vpop.permute.xlu0 %1172
        %1174 = vrot.lane.b32.xlu0 %v1164, 119
        %v1175 = vpop.permute.xlu0 %1174
        %1176 = vrot.lane.b32.xlu0 %v1156, 119
        %v1177 = vpop.permute.xlu0 %1176
        %1178 = vrot.lane.b32.xlu0 %v1165, 119
        %v1179 = vpop.permute.xlu0 %1178
        %1180 = vrot.lane.b32.xlu0 %v1157, 119
        %v1181 = vpop.permute.xlu0 %1180
        %vm1182 = vcmask 973824
        %v1183 = vsel %vm1182, %v1167, %v1169
        %v1184 = vsel %vm1182, %v1169, %v1171
        %v1185 = vsel %vm1182, %v1171, %v1173
        %v1186 = vsel %vm1182, %v1173, %v1175
        %v1187 = vsel %vm1182, %v1175, %v1177
        %v1188 = vsel %vm1182, %v1177, %v1179
        %v1189 = vsel %vm1182, %v1179, %v1181
        %1198 = vst [vmem:[#allocation3 + $0x1c0] sm:$0xf0] %v1183
        %1199 = vst [vmem:[#allocation3 + $0x1c8] sm:$0xf0] %v1184
        %1200 = vst [vmem:[#allocation3 + $0x1d0] sm:$0xf0] %v1185
        %1201 = vst [vmem:[#allocation3 + $0x1d8] sm:$0xf0] %v1186
        %1202 = vst [vmem:[#allocation3 + $0x1e0] sm:$0xf0] %v1187
        %1203 = vst [vmem:[#allocation3 + $0x1e8] sm:$0xf0] %v1188
        %1204 = vst [vmem:[#allocation3 + $0x1f0] sm:$0xf0] %v1189
        %1205 = vst.msk [vmem:[#allocation3 + $0x1f8] sm:$0xf0] %vm333, %v1181
        %v1206 = vld [vmem:[#allocation2 + $0x4] sm:$0xff]
        %v1207 = vld [vmem:[#allocation2 + $0xc] sm:$0xff]
        %v1208 = vld [vmem:[#allocation2 + $0x14] sm:$0xff]
        %v1209 = vld [vmem:[#allocation2 + $0x1c] sm:$0xff]
        %v1214 = vcombine.high %v1206, %v1206
        %v1215 = vcombine.high %v1207, %v1207
        %v1216 = vcombine.high %v1208, %v1208
        %v1217 = vcombine.high %v1209, %v1209
        %1218 = vrot.lane.b32.xlu0 %v1206, 118
        %v1219 = vpop.permute.xlu0 %1218
        %1220 = vrot.lane.b32.xlu0 %v1214, 118
        %v1221 = vpop.permute.xlu0 %1220
        %1222 = vrot.lane.b32.xlu0 %v1207, 118
        %v1223 = vpop.permute.xlu0 %1222
        %1224 = vrot.lane.b32.xlu0 %v1215, 118
        %v1225 = vpop.permute.xlu0 %1224
        %1226 = vrot.lane.b32.xlu0 %v1208, 118
        %v1227 = vpop.permute.xlu0 %1226
        %1228 = vrot.lane.b32.xlu0 %v1216, 118
        %v1229 = vpop.permute.xlu0 %1228
        %1230 = vrot.lane.b32.xlu0 %v1209, 118
        %v1231 = vpop.permute.xlu0 %1230
        %1232 = vrot.lane.b32.xlu0 %v1217, 118
        %v1233 = vpop.permute.xlu0 %1232
        %vm1234 = vcmask 965632
        %v1235 = vsel %vm1234, %v1219, %v1221
        %v1236 = vsel %vm1234, %v1221, %v1223
        %v1237 = vsel %vm1234, %v1223, %v1225
        %v1238 = vsel %vm1234, %v1225, %v1227
        %v1239 = vsel %vm1234, %v1227, %v1229
        %v1240 = vsel %vm1234, %v1229, %v1231
        %v1241 = vsel %vm1234, %v1231, %v1233
        %1250 = vst [vmem:[#allocation3 + $0x200] sm:$0xf] %v1235
        %1251 = vst [vmem:[#allocation3 + $0x208] sm:$0xf] %v1236
        %1252 = vst [vmem:[#allocation3 + $0x210] sm:$0xf] %v1237
        %1253 = vst [vmem:[#allocation3 + $0x218] sm:$0xf] %v1238
        %1254 = vst [vmem:[#allocation3 + $0x220] sm:$0xf] %v1239
        %1255 = vst [vmem:[#allocation3 + $0x228] sm:$0xf] %v1240
        %1256 = vst [vmem:[#allocation3 + $0x230] sm:$0xf] %v1241
        %1257 = vst.msk [vmem:[#allocation3 + $0x238] sm:$0xf] %vm397, %v1233
        %v1258 = vld [vmem:[#allocation2 + $0x4] sm:$0xff]
        %v1259 = vld [vmem:[#allocation2 + $0xc] sm:$0xff]
        %v1260 = vld [vmem:[#allocation2 + $0x14] sm:$0xff]
        %v1261 = vld [vmem:[#allocation2 + $0x1c] sm:$0xff]
        %v1266 = vcombine.low %v1258, %v1258
        %v1267 = vcombine.low %v1259, %v1259
        %v1268 = vcombine.low %v1260, %v1260
        %v1269 = vcombine.low %v1261, %v1261
        %1270 = vrot.lane.b32.xlu0 %v1266, 117
        %v1271 = vpop.permute.xlu0 %1270
        %1272 = vrot.lane.b32.xlu0 %v1258, 117
        %v1273 = vpop.permute.xlu0 %1272
        %1274 = vrot.lane.b32.xlu0 %v1267, 117
        %v1275 = vpop.permute.xlu0 %1274
        %1276 = vrot.lane.b32.xlu0 %v1259, 117
        %v1277 = vpop.permute.xlu0 %1276
        %1278 = vrot.lane.b32.xlu0 %v1268, 117
        %v1279 = vpop.permute.xlu0 %1278
        %1280 = vrot.lane.b32.xlu0 %v1260, 117
        %v1281 = vpop.permute.xlu0 %1280
        %1282 = vrot.lane.b32.xlu0 %v1269, 117
        %v1283 = vpop.permute.xlu0 %1282
        %1284 = vrot.lane.b32.xlu0 %v1261, 117
        %v1285 = vpop.permute.xlu0 %1284
        %vm1286 = vcmask 957440
        %v1287 = vsel %vm1286, %v1271, %v1273
        %v1288 = vsel %vm1286, %v1273, %v1275
        %v1289 = vsel %vm1286, %v1275, %v1277
        %v1290 = vsel %vm1286, %v1277, %v1279
        %v1291 = vsel %vm1286, %v1279, %v1281
        %v1292 = vsel %vm1286, %v1281, %v1283
        %v1293 = vsel %vm1286, %v1283, %v1285
        %1302 = vst [vmem:[#allocation3 + $0x200] sm:$0xf0] %v1287
        %1303 = vst [vmem:[#allocation3 + $0x208] sm:$0xf0] %v1288
        %1304 = vst [vmem:[#allocation3 + $0x210] sm:$0xf0] %v1289
        %1305 = vst [vmem:[#allocation3 + $0x218] sm:$0xf0] %v1290
        %1306 = vst [vmem:[#allocation3 + $0x220] sm:$0xf0] %v1291
        %1307 = vst [vmem:[#allocation3 + $0x228] sm:$0xf0] %v1292
        %1308 = vst [vmem:[#allocation3 + $0x230] sm:$0xf0] %v1293
        %1309 = vst.msk [vmem:[#allocation3 + $0x238] sm:$0xf0] %vm333, %v1285
        %v1310 = vld [vmem:[#allocation2 + $0x4] sm:$0xff]
        %v1311 = vld [vmem:[#allocation2 + $0xc] sm:$0xff]
        %v1312 = vld [vmem:[#allocation2 + $0x14] sm:$0xff]
        %v1313 = vld [vmem:[#allocation2 + $0x1c] sm:$0xff]
        %v1314 = vld [vmem:[#allocation2 + $0x24] sm:$0xf]
        %v1320 = vcombine.high %v1310, %v1310
        %v1321 = vcombine.high %v1311, %v1311
        %v1322 = vcombine.high %v1312, %v1312
        %v1323 = vcombine.high %v1313, %v1313
        %1324 = vrot.lane.b32.xlu0 %v1310, 39
        %v1325 = vpop.permute.xlu0 %1324
        %1326 = vrot.lane.b32.xlu0 %v1320, 39
        %v1327 = vpop.permute.xlu0 %1326
        %1328 = vrot.lane.b32.xlu0 %v1311, 39
        %v1329 = vpop.permute.xlu0 %1328
        %1330 = vrot.lane.b32.xlu0 %v1321, 39
        %v1331 = vpop.permute.xlu0 %1330
        %1332 = vrot.lane.b32.xlu0 %v1312, 39
        %v1333 = vpop.permute.xlu0 %1332
        %1334 = vrot.lane.b32.xlu0 %v1322, 39
        %v1335 = vpop.permute.xlu0 %1334
        %1336 = vrot.lane.b32.xlu0 %v1313, 39
        %v1337 = vpop.permute.xlu0 %1336
        %1338 = vrot.lane.b32.xlu0 %v1323, 39
        %v1339 = vpop.permute.xlu0 %1338
        %1340 = vrot.lane.b32.xlu0 %v1314, 39
        %v1341 = vpop.permute.xlu0 %1340
        %vm1342 = vcmask 318464
        %v1343 = vsel %vm1342, %v1325, %v1327
        %v1344 = vsel %vm1342, %v1327, %v1329
        %v1345 = vsel %vm1342, %v1329, %v1331
        %v1346 = vsel %vm1342, %v1331, %v1333
        %v1347 = vsel %vm1342, %v1333, %v1335
        %v1348 = vsel %vm1342, %v1335, %v1337
        %v1349 = vsel %vm1342, %v1337, %v1339
        %v1350 = vsel %vm1342, %v1339, %v1341
        %1359 = vst [vmem:[#allocation3 + $0x240] sm:$0xf] %v1343
        %1360 = vst [vmem:[#allocation3 + $0x248] sm:$0xf] %v1344
        %1361 = vst [vmem:[#allocation3 + $0x250] sm:$0xf] %v1345
        %1362 = vst [vmem:[#allocation3 + $0x258] sm:$0xf] %v1346
        %1363 = vst [vmem:[#allocation3 + $0x260] sm:$0xf] %v1347
        %1364 = vst [vmem:[#allocation3 + $0x268] sm:$0xf] %v1348
        %1365 = vst [vmem:[#allocation3 + $0x270] sm:$0xf] %v1349
        %1366 = vst.msk [vmem:[#allocation3 + $0x278] sm:$0xf] %vm397, %v1350
        %v1367 = vld [vmem:[#allocation2 + $0x4] sm:$0xff]
        %v1368 = vld [vmem:[#allocation2 + $0xc] sm:$0xff]
        %v1369 = vld [vmem:[#allocation2 + $0x14] sm:$0xff]
        %v1370 = vld [vmem:[#allocation2 + $0x1c] sm:$0xff]
        %v1371 = vld [vmem:[#allocation2 + $0x24] sm:$0xf]
        %v1377 = vcombine.low %v1367, %v1367
        %v1378 = vcombine.low %v1368, %v1368
        %v1379 = vcombine.low %v1369, %v1369
        %v1380 = vcombine.low %v1370, %v1370
        %v1381 = vcombine.low %v1371, %v1371
        %1382 = vrot.lane.b32.xlu0 %v1377, 38
        %v1383 = vpop.permute.xlu0 %1382
        %1384 = vrot.lane.b32.xlu0 %v1367, 38
        %v1385 = vpop.permute.xlu0 %1384
        %1386 = vrot.lane.b32.xlu0 %v1378, 38
        %v1387 = vpop.permute.xlu0 %1386
        %1388 = vrot.lane.b32.xlu0 %v1368, 38
        %v1389 = vpop.permute.xlu0 %1388
        %1390 = vrot.lane.b32.xlu0 %v1379, 38
        %v1391 = vpop.permute.xlu0 %1390
        %1392 = vrot.lane.b32.xlu0 %v1369, 38
        %v1393 = vpop.permute.xlu0 %1392
        %1394 = vrot.lane.b32.xlu0 %v1380, 38
        %v1395 = vpop.permute.xlu0 %1394
        %1396 = vrot.lane.b32.xlu0 %v1370, 38
        %v1397 = vpop.permute.xlu0 %1396
        %1398 = vrot.lane.b32.xlu0 %v1381, 38
        %v1399 = vpop.permute.xlu0 %1398
        %vm1400 = vcmask 310272
        %v1401 = vsel %vm1400, %v1383, %v1385
        %v1402 = vsel %vm1400, %v1385, %v1387
        %v1403 = vsel %vm1400, %v1387, %v1389
        %v1404 = vsel %vm1400, %v1389, %v1391
        %v1405 = vsel %vm1400, %v1391, %v1393
        %v1406 = vsel %vm1400, %v1393, %v1395
        %v1407 = vsel %vm1400, %v1395, %v1397
        %v1408 = vsel %vm1400, %v1397, %v1399
        %1417 = vst [vmem:[#allocation3 + $0x240] sm:$0xf0] %v1401
        %1418 = vst [vmem:[#allocation3 + $0x248] sm:$0xf0] %v1402
        %1419 = vst [vmem:[#allocation3 + $0x250] sm:$0xf0] %v1403
        %1420 = vst [vmem:[#allocation3 + $0x258] sm:$0xf0] %v1404
        %1421 = vst [vmem:[#allocation3 + $0x260] sm:$0xf0] %v1405
        %1422 = vst [vmem:[#allocation3 + $0x268] sm:$0xf0] %v1406
        %1423 = vst [vmem:[#allocation3 + $0x270] sm:$0xf0] %v1407
        %1424 = vst.msk [vmem:[#allocation3 + $0x278] sm:$0xf0] %vm333, %v1408
        %v1425 = vld [vmem:[#allocation2 + $0x4] sm:$0xff]
        %v1426 = vld [vmem:[#allocation2 + $0xc] sm:$0xff]
        %v1427 = vld [vmem:[#allocation2 + $0x14] sm:$0xff]
        %v1428 = vld [vmem:[#allocation2 + $0x1c] sm:$0xff]
        %v1429 = vld [vmem:[#allocation2 + $0x24] sm:$0xf]
        %v1435 = vcombine.high %v1425, %v1425
        %v1436 = vcombine.high %v1426, %v1426
        %v1437 = vcombine.high %v1427, %v1427
        %v1438 = vcombine.high %v1428, %v1428
        %1439 = vrot.lane.b32.xlu0 %v1425, 37
        %v1440 = vpop.permute.xlu0 %1439
        %1441 = vrot.lane.b32.xlu0 %v1435, 37
        %v1442 = vpop.permute.xlu0 %1441
        %1443 = vrot.lane.b32.xlu0 %v1426, 37
        %v1444 = vpop.permute.xlu0 %1443
        %1445 = vrot.lane.b32.xlu0 %v1436, 37
        %v1446 = vpop.permute.xlu0 %1445
        %1447 = vrot.lane.b32.xlu0 %v1427, 37
        %v1448 = vpop.permute.xlu0 %1447
        %1449 = vrot.lane.b32.xlu0 %v1437, 37
        %v1450 = vpop.permute.xlu0 %1449
        %1451 = vrot.lane.b32.xlu0 %v1428, 37
        %v1452 = vpop.permute.xlu0 %1451
        %1453 = vrot.lane.b32.xlu0 %v1438, 37
        %v1454 = vpop.permute.xlu0 %1453
        %1455 = vrot.lane.b32.xlu0 %v1429, 37
        %v1456 = vpop.permute.xlu0 %1455
        %vm1457 = vcmask 302080
        %v1458 = vsel %vm1457, %v1440, %v1442
        %v1459 = vsel %vm1457, %v1442, %v1444
        %v1460 = vsel %vm1457, %v1444, %v1446
        %v1461 = vsel %vm1457, %v1446, %v1448
        %v1462 = vsel %vm1457, %v1448, %v1450
        %v1463 = vsel %vm1457, %v1450, %v1452
        %v1464 = vsel %vm1457, %v1452, %v1454
        %v1465 = vsel %vm1457, %v1454, %v1456
        %1474 = vst [vmem:[#allocation3 + $0x280] sm:$0xf] %v1458
        %1475 = vst [vmem:[#allocation3 + $0x288] sm:$0xf] %v1459
        %1476 = vst [vmem:[#allocation3 + $0x290] sm:$0xf] %v1460
        %1477 = vst [vmem:[#allocation3 + $0x298] sm:$0xf] %v1461
        %1478 = vst [vmem:[#allocation3 + $0x2a0] sm:$0xf] %v1462
        %1479 = vst [vmem:[#allocation3 + $0x2a8] sm:$0xf] %v1463
        %1480 = vst [vmem:[#allocation3 + $0x2b0] sm:$0xf] %v1464
        %1481 = vst.msk [vmem:[#allocation3 + $0x2b8] sm:$0xf] %vm397, %v1465
        %v1482 = vld [vmem:[#allocation2 + $0x4] sm:$0xff]
        %v1483 = vld [vmem:[#allocation2 + $0xc] sm:$0xff]
        %v1484 = vld [vmem:[#allocation2 + $0x14] sm:$0xff]
        %v1485 = vld [vmem:[#allocation2 + $0x1c] sm:$0xff]
        %v1486 = vld [vmem:[#allocation2 + $0x24] sm:$0xf]
        %v1492 = vcombine.low %v1482, %v1482
        %v1493 = vcombine.low %v1483, %v1483
        %v1494 = vcombine.low %v1484, %v1484
        %v1495 = vcombine.low %v1485, %v1485
        %v1496 = vcombine.low %v1486, %v1486
        %1497 = vrot.lane.b32.xlu0 %v1492, 29
        %v1498 = vpop.permute.xlu0 %1497
        %1499 = vrot.lane.b32.xlu0 %v1482, 29
        %v1500 = vpop.permute.xlu0 %1499
        %1501 = vrot.lane.b32.xlu0 %v1493, 29
        %v1502 = vpop.permute.xlu0 %1501
        %1503 = vrot.lane.b32.xlu0 %v1483, 29
        %v1504 = vpop.permute.xlu0 %1503
        %1505 = vrot.lane.b32.xlu0 %v1494, 29
        %v1506 = vpop.permute.xlu0 %1505
        %1507 = vrot.lane.b32.xlu0 %v1484, 29
        %v1508 = vpop.permute.xlu0 %1507
        %1509 = vrot.lane.b32.xlu0 %v1495, 29
        %v1510 = vpop.permute.xlu0 %1509
        %1511 = vrot.lane.b32.xlu0 %v1485, 29
        %v1512 = vpop.permute.xlu0 %1511
        %1513 = vrot.lane.b32.xlu0 %v1496, 29
        %v1514 = vpop.permute.xlu0 %1513
        %vm1515 = vcmask 236544
        %v1516 = vsel %vm1515, %v1498, %v1500
        %v1517 = vsel %vm1515, %v1500, %v1502
        %v1518 = vsel %vm1515, %v1502, %v1504
        %v1519 = vsel %vm1515, %v1504, %v1506
        %v1520 = vsel %vm1515, %v1506, %v1508
        %v1521 = vsel %vm1515, %v1508, %v1510
        %v1522 = vsel %vm1515, %v1510, %v1512
        %v1523 = vsel %vm1515, %v1512, %v1514
        %1532 = vst [vmem:[#allocation3 + $0x280] sm:$0xf0] %v1516
        %1533 = vst [vmem:[#allocation3 + $0x288] sm:$0xf0] %v1517
        %1534 = vst [vmem:[#allocation3 + $0x290] sm:$0xf0] %v1518
        %1535 = vst [vmem:[#allocation3 + $0x298] sm:$0xf0] %v1519
        %1536 = vst [vmem:[#allocation3 + $0x2a0] sm:$0xf0] %v1520
        %1537 = vst [vmem:[#allocation3 + $0x2a8] sm:$0xf0] %v1521
        %1538 = vst [vmem:[#allocation3 + $0x2b0] sm:$0xf0] %v1522
        %1539 = vst.msk [vmem:[#allocation3 + $0x2b8] sm:$0xf0] %vm333, %v1523
        %v1540 = vld [vmem:[#allocation2 + $0x4] sm:$0xff]
        %v1541 = vld [vmem:[#allocation2 + $0xc] sm:$0xff]
        %v1542 = vld [vmem:[#allocation2 + $0x14] sm:$0xff]
        %v1543 = vld [vmem:[#allocation2 + $0x1c] sm:$0xff]
        %v1544 = vld [vmem:[#allocation2 + $0x24] sm:$0xf]
        %v1550 = vcombine.high %v1540, %v1540
        %v1551 = vcombine.high %v1541, %v1541
        %v1552 = vcombine.high %v1542, %v1542
        %v1553 = vcombine.high %v1543, %v1543
        %1554 = vrot.lane.b32.xlu0 %v1540, 28
        %v1555 = vpop.permute.xlu0 %1554
        %1556 = vrot.lane.b32.xlu0 %v1550, 28
        %v1557 = vpop.permute.xlu0 %1556
        %1558 = vrot.lane.b32.xlu0 %v1541, 28
        %v1559 = vpop.permute.xlu0 %1558
        %1560 = vrot.lane.b32.xlu0 %v1551, 28
        %v1561 = vpop.permute.xlu0 %1560
        %1562 = vrot.lane.b32.xlu0 %v1542, 28
        %v1563 = vpop.permute.xlu0 %1562
        %1564 = vrot.lane.b32.xlu0 %v1552, 28
        %v1565 = vpop.permute.xlu0 %1564
        %1566 = vrot.lane.b32.xlu0 %v1543, 28
        %v1567 = vpop.permute.xlu0 %1566
        %1568 = vrot.lane.b32.xlu0 %v1553, 28
        %v1569 = vpop.permute.xlu0 %1568
        %1570 = vrot.lane.b32.xlu0 %v1544, 28
        %v1571 = vpop.permute.xlu0 %1570
        %vm1572 = vcmask 228352
        %v1573 = vsel %vm1572, %v1555, %v1557
        %v1574 = vsel %vm1572, %v1557, %v1559
        %v1575 = vsel %vm1572, %v1559, %v1561
        %v1576 = vsel %vm1572, %v1561, %v1563
        %v1577 = vsel %vm1572, %v1563, %v1565
        %v1578 = vsel %vm1572, %v1565, %v1567
        %v1579 = vsel %vm1572, %v1567, %v1569
        %v1580 = vsel %vm1572, %v1569, %v1571
        %1589 = vst [vmem:[#allocation3 + $0x2c0] sm:$0xf] %v1573
        %1590 = vst [vmem:[#allocation3 + $0x2c8] sm:$0xf] %v1574
        %1591 = vst [vmem:[#allocation3 + $0x2d0] sm:$0xf] %v1575
        %1592 = vst [vmem:[#allocation3 + $0x2d8] sm:$0xf] %v1576
        %1593 = vst [vmem:[#allocation3 + $0x2e0] sm:$0xf] %v1577
        %1594 = vst [vmem:[#allocation3 + $0x2e8] sm:$0xf] %v1578
        %1595 = vst [vmem:[#allocation3 + $0x2f0] sm:$0xf] %v1579
        %1596 = vst.msk [vmem:[#allocation3 + $0x2f8] sm:$0xf] %vm397, %v1580
        %v1597 = vld [vmem:[#allocation2 + $0x4] sm:$0xff]
        %v1598 = vld [vmem:[#allocation2 + $0xc] sm:$0xff]
        %v1599 = vld [vmem:[#allocation2 + $0x14] sm:$0xff]
        %v1600 = vld [vmem:[#allocation2 + $0x1c] sm:$0xff]
        %v1601 = vld [vmem:[#allocation2 + $0x24] sm:$0xf]
        %v1607 = vcombine.low %v1597, %v1597
        %v1608 = vcombine.low %v1598, %v1598
        %v1609 = vcombine.low %v1599, %v1599
        %v1610 = vcombine.low %v1600, %v1600
        %v1611 = vcombine.low %v1601, %v1601
        %1612 = vrot.lane.b32.xlu0 %v1607, 27
        %v1613 = vpop.permute.xlu0 %1612
        %1614 = vrot.lane.b32.xlu0 %v1597, 27
        %v1615 = vpop.permute.xlu0 %1614
        %1616 = vrot.lane.b32.xlu0 %v1608, 27
        %v1617 = vpop.permute.xlu0 %1616
        %1618 = vrot.lane.b32.xlu0 %v1598, 27
        %v1619 = vpop.permute.xlu0 %1618
        %1620 = vrot.lane.b32.xlu0 %v1609, 27
        %v1621 = vpop.permute.xlu0 %1620
        %1622 = vrot.lane.b32.xlu0 %v1599, 27
        %v1623 = vpop.permute.xlu0 %1622
        %1624 = vrot.lane.b32.xlu0 %v1610, 27
        %v1625 = vpop.permute.xlu0 %1624
        %1626 = vrot.lane.b32.xlu0 %v1600, 27
        %v1627 = vpop.permute.xlu0 %1626
        %1628 = vrot.lane.b32.xlu0 %v1611, 27
        %v1629 = vpop.permute.xlu0 %1628
        %vm1630 = vcmask 220160
        %v1631 = vsel %vm1630, %v1613, %v1615
        %v1632 = vsel %vm1630, %v1615, %v1617
        %v1633 = vsel %vm1630, %v1617, %v1619
        %v1634 = vsel %vm1630, %v1619, %v1621
        %v1635 = vsel %vm1630, %v1621, %v1623
        %v1636 = vsel %vm1630, %v1623, %v1625
        %v1637 = vsel %vm1630, %v1625, %v1627
        %v1638 = vsel %vm1630, %v1627, %v1629
        %1647 = vst [vmem:[#allocation3 + $0x2c0] sm:$0xf0] %v1631
        %1648 = vst [vmem:[#allocation3 + $0x2c8] sm:$0xf0] %v1632
        %1649 = vst [vmem:[#allocation3 + $0x2d0] sm:$0xf0] %v1633
        %1650 = vst [vmem:[#allocation3 + $0x2d8] sm:$0xf0] %v1634
        %1651 = vst [vmem:[#allocation3 + $0x2e0] sm:$0xf0] %v1635
        %1652 = vst [vmem:[#allocation3 + $0x2e8] sm:$0xf0] %v1636
        %1653 = vst [vmem:[#allocation3 + $0x2f0] sm:$0xf0] %v1637
        %1654 = vst.msk [vmem:[#allocation3 + $0x2f8] sm:$0xf0] %vm333, %v1638
        %v1655 = vld [vmem:[#allocation2 + $0x4] sm:$0xff]
        %v1656 = vld [vmem:[#allocation2 + $0xc] sm:$0xff]
        %v1657 = vld [vmem:[#allocation2 + $0x14] sm:$0xff]
        %v1658 = vld [vmem:[#allocation2 + $0x1c] sm:$0xff]
        %v1659 = vld [vmem:[#allocation2 + $0x24] sm:$0xf]
        %v1665 = vcombine.high %v1655, %v1655
        %v1666 = vcombine.high %v1656, %v1656
        %v1667 = vcombine.high %v1657, %v1657
        %v1668 = vcombine.high %v1658, %v1658
        %1669 = vrot.lane.b32.xlu0 %v1655, 19
        %v1670 = vpop.permute.xlu0 %1669
        %1671 = vrot.lane.b32.xlu0 %v1665, 19
        %v1672 = vpop.permute.xlu0 %1671
        %1673 = vrot.lane.b32.xlu0 %v1656, 19
        %v1674 = vpop.permute.xlu0 %1673
        %1675 = vrot.lane.b32.xlu0 %v1666, 19
        %v1676 = vpop.permute.xlu0 %1675
        %1677 = vrot.lane.b32.xlu0 %v1657, 19
        %v1678 = vpop.permute.xlu0 %1677
        %1679 = vrot.lane.b32.xlu0 %v1667, 19
        %v1680 = vpop.permute.xlu0 %1679
        %1681 = vrot.lane.b32.xlu0 %v1658, 19
        %v1682 = vpop.permute.xlu0 %1681
        %1683 = vrot.lane.b32.xlu0 %v1668, 19
        %v1684 = vpop.permute.xlu0 %1683
        %1685 = vrot.lane.b32.xlu0 %v1659, 19
        %v1686 = vpop.permute.xlu0 %1685
        %vm1687 = vcmask 154624
        %v1688 = vsel %vm1687, %v1670, %v1672
        %v1689 = vsel %vm1687, %v1672, %v1674
        %v1690 = vsel %vm1687, %v1674, %v1676
        %v1691 = vsel %vm1687, %v1676, %v1678
        %v1692 = vsel %vm1687, %v1678, %v1680
        %v1693 = vsel %vm1687, %v1680, %v1682
        %v1694 = vsel %vm1687, %v1682, %v1684
        %v1695 = vsel %vm1687, %v1684, %v1686
        %1704 = vst [vmem:[#allocation3 + $0x300] sm:$0xf] %v1688
        %1705 = vst [vmem:[#allocation3 + $0x308] sm:$0xf] %v1689
        %1706 = vst [vmem:[#allocation3 + $0x310] sm:$0xf] %v1690
        %1707 = vst [vmem:[#allocation3 + $0x318] sm:$0xf] %v1691
        %1708 = vst [vmem:[#allocation3 + $0x320] sm:$0xf] %v1692
        %1709 = vst [vmem:[#allocation3 + $0x328] sm:$0xf] %v1693
        %1710 = vst [vmem:[#allocation3 + $0x330] sm:$0xf] %v1694
        %1711 = vst.msk [vmem:[#allocation3 + $0x338] sm:$0xf] %vm397, %v1695
        %v1712 = vld [vmem:[#allocation2 + $0x4] sm:$0xff]
        %v1713 = vld [vmem:[#allocation2 + $0xc] sm:$0xff]
        %v1714 = vld [vmem:[#allocation2 + $0x14] sm:$0xff]
        %v1715 = vld [vmem:[#allocation2 + $0x1c] sm:$0xff]
        %v1716 = vld [vmem:[#allocation2 + $0x24] sm:$0xf]
        %v1722 = vcombine.low %v1712, %v1712
        %v1723 = vcombine.low %v1713, %v1713
        %v1724 = vcombine.low %v1714, %v1714
        %v1725 = vcombine.low %v1715, %v1715
        %v1726 = vcombine.low %v1716, %v1716
        %1727 = vrot.lane.b32.xlu0 %v1722, 18
        %v1728 = vpop.permute.xlu0 %1727
        %1729 = vrot.lane.b32.xlu0 %v1712, 18
        %v1730 = vpop.permute.xlu0 %1729
        %1731 = vrot.lane.b32.xlu0 %v1723, 18
        %v1732 = vpop.permute.xlu0 %1731
        %1733 = vrot.lane.b32.xlu0 %v1713, 18
        %v1734 = vpop.permute.xlu0 %1733
        %1735 = vrot.lane.b32.xlu0 %v1724, 18
        %v1736 = vpop.permute.xlu0 %1735
        %1737 = vrot.lane.b32.xlu0 %v1714, 18
        %v1738 = vpop.permute.xlu0 %1737
        %1739 = vrot.lane.b32.xlu0 %v1725, 18
        %v1740 = vpop.permute.xlu0 %1739
        %1741 = vrot.lane.b32.xlu0 %v1715, 18
        %v1742 = vpop.permute.xlu0 %1741
        %1743 = vrot.lane.b32.xlu0 %v1726, 18
        %v1744 = vpop.permute.xlu0 %1743
        %vm1745 = vcmask 146432
        %v1746 = vsel %vm1745, %v1728, %v1730
        %v1747 = vsel %vm1745, %v1730, %v1732
        %v1748 = vsel %vm1745, %v1732, %v1734
        %v1749 = vsel %vm1745, %v1734, %v1736
        %v1750 = vsel %vm1745, %v1736, %v1738
        %v1751 = vsel %vm1745, %v1738, %v1740
        %v1752 = vsel %vm1745, %v1740, %v1742
        %v1753 = vsel %vm1745, %v1742, %v1744
        %1762 = vst [vmem:[#allocation3 + $0x300] sm:$0xf0] %v1746
        %1763 = vst [vmem:[#allocation3 + $0x308] sm:$0xf0] %v1747
        %1764 = vst [vmem:[#allocation3 + $0x310] sm:$0xf0] %v1748
        %1765 = vst [vmem:[#allocation3 + $0x318] sm:$0xf0] %v1749
        %1766 = vst [vmem:[#allocation3 + $0x320] sm:$0xf0] %v1750
        %1767 = vst [vmem:[#allocation3 + $0x328] sm:$0xf0] %v1751
        %1768 = vst [vmem:[#allocation3 + $0x330] sm:$0xf0] %v1752
        %1769 = vst.msk [vmem:[#allocation3 + $0x338] sm:$0xf0] %vm333, %v1753
        %v1770 = vld [vmem:[#allocation2 + $0x4] sm:$0xff]
        %v1771 = vld [vmem:[#allocation2 + $0xc] sm:$0xff]
        %v1772 = vld [vmem:[#allocation2 + $0x14] sm:$0xff]
        %v1773 = vld [vmem:[#allocation2 + $0x1c] sm:$0xff]
        %v1774 = vld [vmem:[#allocation2 + $0x24] sm:$0xf]
        %v1780 = vcombine.high %v1770, %v1770
        %v1781 = vcombine.high %v1771, %v1771
        %v1782 = vcombine.high %v1772, %v1772
        %v1783 = vcombine.high %v1773, %v1773
        %1784 = vrot.lane.b32.xlu0 %v1770, 17
        %v1785 = vpop.permute.xlu0 %1784
        %1786 = vrot.lane.b32.xlu0 %v1780, 17
        %v1787 = vpop.permute.xlu0 %1786
        %1788 = vrot.lane.b32.xlu0 %v1771, 17
        %v1789 = vpop.permute.xlu0 %1788
        %1790 = vrot.lane.b32.xlu0 %v1781, 17
        %v1791 = vpop.permute.xlu0 %1790
        %1792 = vrot.lane.b32.xlu0 %v1772, 17
        %v1793 = vpop.permute.xlu0 %1792
        %1794 = vrot.lane.b32.xlu0 %v1782, 17
        %v1795 = vpop.permute.xlu0 %1794
        %1796 = vrot.lane.b32.xlu0 %v1773, 17
        %v1797 = vpop.permute.xlu0 %1796
        %1798 = vrot.lane.b32.xlu0 %v1783, 17
        %v1799 = vpop.permute.xlu0 %1798
        %1800 = vrot.lane.b32.xlu0 %v1774, 17
        %v1801 = vpop.permute.xlu0 %1800
        %vm1802 = vcmask 138240
        %v1803 = vsel %vm1802, %v1785, %v1787
        %v1804 = vsel %vm1802, %v1787, %v1789
        %v1805 = vsel %vm1802, %v1789, %v1791
        %v1806 = vsel %vm1802, %v1791, %v1793
        %v1807 = vsel %vm1802, %v1793, %v1795
        %v1808 = vsel %vm1802, %v1795, %v1797
        %v1809 = vsel %vm1802, %v1797, %v1799
        %v1810 = vsel %vm1802, %v1799, %v1801
        %1819 = vst [vmem:[#allocation3 + $0x340] sm:$0xf] %v1803
        %1820 = vst [vmem:[#allocation3 + $0x348] sm:$0xf] %v1804
        %1821 = vst [vmem:[#allocation3 + $0x350] sm:$0xf] %v1805
        %1822 = vst [vmem:[#allocation3 + $0x358] sm:$0xf] %v1806
        %1823 = vst [vmem:[#allocation3 + $0x360] sm:$0xf] %v1807
        %1824 = vst [vmem:[#allocation3 + $0x368] sm:$0xf] %v1808
        %1825 = vst [vmem:[#allocation3 + $0x370] sm:$0xf] %v1809
        %1826 = vst.msk [vmem:[#allocation3 + $0x378] sm:$0xf] %vm397, %v1810
        %v1827 = vld [vmem:[%s1] sm:$0xf]
        %v1828 = vld [vmem:[#allocation3] sm:$0xff]
        %v1829 = vld [vmem:[#allocation3 + $0x8] sm:$0xff]
        %v1830 = vld [vmem:[#allocation3 + $0x10] sm:$0xff]
        %v1831 = vld [vmem:[#allocation3 + $0x18] sm:$0xff]
        %v1832 = vld [vmem:[#allocation3 + $0x20] sm:$0xff]
        %v1833 = vld [vmem:[#allocation3 + $0x28] sm:$0xff]
        %v1834 = vld [vmem:[#allocation3 + $0x30] sm:$0xff]
        %v1835 = vld [vmem:[#allocation3 + $0x38] sm:$0xff]
        %v1836 = vld [vmem:[#allocation3 + $0x40] sm:$0xff]
        %v1837 = vld [vmem:[#allocation3 + $0x48] sm:$0xff]
        %v1838 = vld [vmem:[#allocation3 + $0x50] sm:$0xff]
        %v1839 = vld [vmem:[#allocation3 + $0x58] sm:$0xff]
        %v1840 = vld [vmem:[#allocation3 + $0x60] sm:$0xff]
        %v1841 = vld [vmem:[#allocation3 + $0x68] sm:$0xff]
        %v1842 = vld [vmem:[#allocation3 + $0x70] sm:$0xff]
        %v1843 = vld [vmem:[#allocation3 + $0x78] sm:$0xff]
        %v1844 = vld [vmem:[#allocation3 + $0x80] sm:$0xff]
        %v1845 = vld [vmem:[#allocation3 + $0x88] sm:$0xff]
        %v1846 = vld [vmem:[#allocation3 + $0x90] sm:$0xff]
        %v1847 = vld [vmem:[#allocation3 + $0x98] sm:$0xff]
        %v1848 = vld [vmem:[#allocation3 + $0xa0] sm:$0xff]
        %v1849 = vld [vmem:[#allocation3 + $0xa8] sm:$0xff]
        %v1850 = vld [vmem:[#allocation3 + $0xb0] sm:$0xff]
        %v1851 = vld [vmem:[#allocation3 + $0xb8] sm:$0xff]
        %v1852 = vld [vmem:[#allocation3 + $0xc0] sm:$0xff]
        %v1853 = vld [vmem:[#allocation3 + $0xc8] sm:$0xff]
        %v1854 = vld [vmem:[#allocation3 + $0xd0] sm:$0xff]
        %v1855 = vld [vmem:[#allocation3 + $0xd8] sm:$0xff]
        %v1856 = vld [vmem:[#allocation3 + $0xe0] sm:$0xff]
        %v1857 = vld [vmem:[#allocation3 + $0xe8] sm:$0xff]
        %v1858 = vld [vmem:[#allocation3 + $0xf0] sm:$0xff]
        %v1859 = vld [vmem:[#allocation3 + $0xf8] sm:$0xff]
        %v1860 = vld [vmem:[#allocation3 + $0x100] sm:$0xff]
        %v1861 = vld [vmem:[#allocation3 + $0x108] sm:$0xff]
        %v1862 = vld [vmem:[#allocation3 + $0x110] sm:$0xff]
        %v1863 = vld [vmem:[#allocation3 + $0x118] sm:$0xff]
        %v1864 = vld [vmem:[#allocation3 + $0x120] sm:$0xff]
        %v1865 = vld [vmem:[#allocation3 + $0x128] sm:$0xff]
        %v1866 = vld [vmem:[#allocation3 + $0x130] sm:$0xff]
        %v1867 = vld [vmem:[#allocation3 + $0x138] sm:$0xff]
        %v1868 = vld [vmem:[#allocation3 + $0x140] sm:$0xff]
        %v1869 = vld [vmem:[#allocation3 + $0x148] sm:$0xff]
        %v1870 = vld [vmem:[#allocation3 + $0x150] sm:$0xff]
        %v1871 = vld [vmem:[#allocation3 + $0x158] sm:$0xff]
        %v1872 = vld [vmem:[#allocation3 + $0x160] sm:$0xff]
        %v1873 = vld [vmem:[#allocation3 + $0x168] sm:$0xff]
        %v1874 = vld [vmem:[#allocation3 + $0x170] sm:$0xff]
        %v1875 = vld [vmem:[#allocation3 + $0x178] sm:$0xff]
        %v1876 = vld [vmem:[#allocation3 + $0x180] sm:$0xff]
        %v1877 = vld [vmem:[#allocation3 + $0x188] sm:$0xff]
        %v1878 = vld [vmem:[#allocation3 + $0x190] sm:$0xff]
        %v1879 = vld [vmem:[#allocation3 + $0x198] sm:$0xff]
        %v1880 = vld [vmem:[#allocation3 + $0x1a0] sm:$0xff]
        %v1881 = vld [vmem:[#allocation3 + $0x1a8] sm:$0xff]
        %v1882 = vld [vmem:[#allocation3 + $0x1b0] sm:$0xff]
        %v1883 = vld [vmem:[#allocation3 + $0x1b8] sm:$0xff]
        %v1884 = vld [vmem:[#allocation3 + $0x1c0] sm:$0xff]
        %v1885 = vld [vmem:[#allocation3 + $0x1c8] sm:$0xff]
        %v1886 = vld [vmem:[#allocation3 + $0x1d0] sm:$0xff]
        %v1887 = vld [vmem:[#allocation3 + $0x1d8] sm:$0xff]
        %v1888 = vld [vmem:[#allocation3 + $0x1e0] sm:$0xff]
        %v1889 = vld [vmem:[#allocation3 + $0x1e8] sm:$0xff]
        %v1890 = vld [vmem:[#allocation3 + $0x1f0] sm:$0xff]
        %v1891 = vld [vmem:[#allocation3 + $0x1f8] sm:$0xff]
        %v1892 = vld [vmem:[#allocation3 + $0x200] sm:$0xff]
        %v1893 = vld [vmem:[#allocation3 + $0x208] sm:$0xff]
        %v1894 = vld [vmem:[#allocation3 + $0x210] sm:$0xff]
        %v1895 = vld [vmem:[#allocation3 + $0x218] sm:$0xff]
        %v1896 = vld [vmem:[#allocation3 + $0x220] sm:$0xff]
        %v1897 = vld [vmem:[#allocation3 + $0x228] sm:$0xff]
        %v1898 = vld [vmem:[#allocation3 + $0x230] sm:$0xff]
        %v1899 = vld [vmem:[#allocation3 + $0x238] sm:$0xff]
        %v1900 = vld [vmem:[#allocation3 + $0x240] sm:$0xff]
        %v1901 = vld [vmem:[#allocation3 + $0x248] sm:$0xff]
        %v1902 = vld [vmem:[#allocation3 + $0x250] sm:$0xff]
        %v1903 = vld [vmem:[#allocation3 + $0x258] sm:$0xff]
        %v1904 = vld [vmem:[#allocation3 + $0x260] sm:$0xff]
        %v1905 = vld [vmem:[#allocation3 + $0x268] sm:$0xff]
        %v1906 = vld [vmem:[#allocation3 + $0x270] sm:$0xff]
        %v1907 = vld [vmem:[#allocation3 + $0x278] sm:$0xff]
        %v1908 = vld [vmem:[#allocation3 + $0x280] sm:$0xff]
        %v1909 = vld [vmem:[#allocation3 + $0x288] sm:$0xff]
        %v1910 = vld [vmem:[#allocation3 + $0x290] sm:$0xff]
        %v1911 = vld [vmem:[#allocation3 + $0x298] sm:$0xff]
        %v1912 = vld [vmem:[#allocation3 + $0x2a0] sm:$0xff]
        %v1913 = vld [vmem:[#allocation3 + $0x2a8] sm:$0xff]
        %v1914 = vld [vmem:[#allocation3 + $0x2b0] sm:$0xff]
        %v1915 = vld [vmem:[#allocation3 + $0x2b8] sm:$0xff]
        %v1916 = vld [vmem:[#allocation3 + $0x2c0] sm:$0xff]
        %v1917 = vld [vmem:[#allocation3 + $0x2c8] sm:$0xff]
        %v1918 = vld [vmem:[#allocation3 + $0x2d0] sm:$0xff]
        %v1919 = vld [vmem:[#allocation3 + $0x2d8] sm:$0xff]
        %v1920 = vld [vmem:[#allocation3 + $0x2e0] sm:$0xff]
        %v1921 = vld [vmem:[#allocation3 + $0x2e8] sm:$0xff]
        %v1922 = vld [vmem:[#allocation3 + $0x2f0] sm:$0xff]
        %v1923 = vld [vmem:[#allocation3 + $0x2f8] sm:$0xff]
        %v1924 = vld [vmem:[#allocation3 + $0x300] sm:$0xff]
        %v1925 = vld [vmem:[#allocation3 + $0x308] sm:$0xff]
        %v1926 = vld [vmem:[#allocation3 + $0x310] sm:$0xff]
        %v1927 = vld [vmem:[#allocation3 + $0x318] sm:$0xff]
        %v1928 = vld [vmem:[#allocation3 + $0x320] sm:$0xff]
        %v1929 = vld [vmem:[#allocation3 + $0x328] sm:$0xff]
        %v1930 = vld [vmem:[#allocation3 + $0x330] sm:$0xff]
        %v1931 = vld [vmem:[#allocation3 + $0x338] sm:$0xff]
        %v1932 = vld [vmem:[#allocation3 + $0x340] sm:$0xf]
        %v1933 = vld [vmem:[#allocation3 + $0x348] sm:$0xf]
        %v1934 = vld [vmem:[#allocation3 + $0x350] sm:$0xf]
        %v1935 = vld [vmem:[#allocation3 + $0x358] sm:$0xf]
        %v1936 = vld [vmem:[#allocation3 + $0x360] sm:$0xf]
        %v1937 = vld [vmem:[#allocation3 + $0x368] sm:$0xf]
        %v1938 = vld [vmem:[#allocation3 + $0x370] sm:$0xf]
        %v1939 = vld [vmem:[#allocation3 + $0x378] sm:$0xf]
        %v1940 = vld [vmem:[%s2] sm:$0xf]
        %1942 = vset.pattern.permute.xlu0 0
        %1943 = vperm.xlu0 %1942, %v1940
        %v1944 = vpop.permute.xlu0 %1943
        %vm1946 = vcmask 883712
        %v1948 = vsel %vm1946, %v1827, 0
        %v1951 = vsel %vm343, %v1932, 0
        %v1954 = vsel %vm343, %v1933, 0
        %v1957 = vsel %vm343, %v1934, 0
        %v1960 = vsel %vm343, %v1935, 0
        %v1963 = vsel %vm343, %v1936, 0
        %v1966 = vsel %vm343, %v1937, 0
        %v1969 = vsel %vm343, %v1938, 0
        %v1972 = vsel %vm343, %v1939, 0
        %1974 = vmatprep.subr.mxu0 0.0
        %1975 = vmatpush1.msra.mxu0 0.0
        %1976 = vmatprep.subr.mxu0 0.0
        %1977 = vmatpush1.msra.mxu0 0.0
        %1978 = vmatprep.subr.mxu0 %v1954
        %1979 = vmatpush1.msra.mxu0 %v1951
        %1980 = vmatprep.subr.mxu0 %v1925
        %1981 = vmatpush1.msra.mxu0 %v1924
        %1982 = vmatprep.subr.mxu0 %v1917
        %1983 = vmatpush1.msra.mxu0 %v1916
        %1984 = vmatprep.subr.mxu0 %v1909
        %1985 = vmatpush1.msra.mxu0 %v1908
        %1986 = vmatprep.subr.mxu0 %v1901
        %1987 = vmatpush1.msra.mxu0 %v1900
        %1988 = vmatprep.subr.mxu0 %v1893
        %1989 = vmatpush1.msra.mxu0 %v1892
        %1990 = vmatprep.subr.mxu0 %v1885
        %1991 = vmatpush1.msra.mxu0 %v1884
        %1992 = vmatprep.subr.mxu0 %v1877
        %1993 = vmatpush1.msra.mxu0 %v1876
        %1994 = vmatprep.subr.mxu0 %v1869
        %1995 = vmatpush1.msra.mxu0 %v1868
        %1996 = vmatprep.subr.mxu0 %v1861
        %1997 = vmatpush1.msra.mxu0 %v1860
        %1998 = vmatprep.subr.mxu0 %v1853
        %1999 = vmatpush1.msra.mxu0 %v1852
        %2000 = vmatprep.subr.mxu0 %v1845
        %2001 = vmatpush1.msra.mxu0 %v1844
        %2002 = vmatprep.subr.mxu0 %v1837
        %2003 = vmatpush1.msra.mxu0 %v1836
        %2004 = vmatprep.subr.mxu0 %v1829
        %2005 = vmatpush1.msra.mxu0 %v1828
        %2006 = vmatprep.subr.mxu0 0.0
        %2007 = vmatpush2.msra.mxu0 0.0
        %2008 = vmatprep.subr.mxu0 0.0
        %2009 = vmatpush2.msra.mxu0 0.0
        %2010 = vmatprep.subr.mxu0 0.0
        %2011 = vmatpush2.msra.mxu0 0.0
        %2012 = vmatprep.subr.mxu0 0.0
        %2013 = vmatpush2.msra.mxu0 0.0
        %2014 = vmatprep.subr.mxu0 0.0
        %2015 = vmatpush2.msra.mxu0 0.0
        %2016 = vmatprep.subr.mxu0 0.0
        %2017 = vmatpush2.msra.mxu0 0.0
        %2018 = vmatprep.subr.mxu0 0.0
        %2019 = vmatpush2.msra.mxu0 0.0
        %2020 = vmatprep.subr.mxu0 0.0
        %2021 = vmatpush2.msra.mxu0 0.0
        %2022 = vmatprep.subr.mxu0 0.0
        %2023 = vmatpush2.msra.mxu0 0.0
        %2024 = vmatprep.subr.mxu0 0.0
        %2025 = vmatpush2.msra.mxu0 0.0
        %2026 = vmatprep.subr.mxu0 0.0
        %2027 = vmatpush2.msra.mxu0 0.0
        %2028 = vmatprep.subr.mxu0 0.0
        %2029 = vmatpush2.msra.mxu0 0.0
        %2030 = vmatprep.subr.mxu0 0.0
        %2031 = vmatpush2.msra.mxu0 0.0
        %2032 = vmatprep.subr.mxu0 0.0
        %2033 = vmatpush2.msra.mxu0 0.0
        %2034 = vmatprep.subr.mxu0 0.0
        %2035 = vmatpush2.msra.mxu0 0.0
        %2036 = vmatprep.subr.mxu0 0.0
        %2037 = vmatpush2.msra.mxu0 0.0
        %2038 = vmatprep.mubr.f32.mxu0 0.0
        %2039 = vmatmul.mubr.f32.gmra.mxu0 %v1948
        %v2040 = vpop.f32.mrf.mxu0
        %v2041 = vadd.f32 %v1944, %v2040
        %v2042 = vpop.f32.mrf.mxu0
        %v2043 = vadd.f32 %v1944, %v2042
        %2044 = vdwg.mxu0
        %2045 = vmatprep.subr.mxu0 0.0
        %2046 = vmatpush1.msra.mxu0 0.0
        %2047 = vmatprep.subr.mxu0 0.0
        %2048 = vmatpush1.msra.mxu0 0.0
        %2049 = vmatprep.subr.mxu0 %v1960
        %2050 = vmatpush1.msra.mxu0 %v1957
        %2051 = vmatprep.subr.mxu0 %v1927
        %2052 = vmatpush1.msra.mxu0 %v1926
        %2053 = vmatprep.subr.mxu0 %v1919
        %2054 = vmatpush1.msra.mxu0 %v1918
        %2055 = vmatprep.subr.mxu0 %v1911
        %2056 = vmatpush1.msra.mxu0 %v1910
        %2057 = vmatprep.subr.mxu0 %v1903
        %2058 = vmatpush1.msra.mxu0 %v1902
        %2059 = vmatprep.subr.mxu0 %v1895
        %2060 = vmatpush1.msra.mxu0 %v1894
        %2061 = vmatprep.subr.mxu0 %v1887
        %2062 = vmatpush1.msra.mxu0 %v1886
        %2063 = vmatprep.subr.mxu0 %v1879
        %2064 = vmatpush1.msra.mxu0 %v1878
        %2065 = vmatprep.subr.mxu0 %v1871
        %2066 = vmatpush1.msra.mxu0 %v1870
        %2067 = vmatprep.subr.mxu0 %v1863
        %2068 = vmatpush1.msra.mxu0 %v1862
        %2069 = vmatprep.subr.mxu0 %v1855
        %2070 = vmatpush1.msra.mxu0 %v1854
        %2071 = vmatprep.subr.mxu0 %v1847
        %2072 = vmatpush1.msra.mxu0 %v1846
        %2073 = vmatprep.subr.mxu0 %v1839
        %2074 = vmatpush1.msra.mxu0 %v1838
        %2075 = vmatprep.subr.mxu0 %v1831
        %2076 = vmatpush1.msra.mxu0 %v1830
        %2077 = vmatprep.subr.mxu0 0.0
        %2078 = vmatpush2.msra.mxu0 0.0
        %2079 = vmatprep.subr.mxu0 0.0
        %2080 = vmatpush2.msra.mxu0 0.0
        %2081 = vmatprep.subr.mxu0 0.0
        %2082 = vmatpush2.msra.mxu0 0.0
        %2083 = vmatprep.subr.mxu0 0.0
        %2084 = vmatpush2.msra.mxu0 0.0
        %2085 = vmatprep.subr.mxu0 0.0
        %2086 = vmatpush2.msra.mxu0 0.0
        %2087 = vmatprep.subr.mxu0 0.0
        %2088 = vmatpush2.msra.mxu0 0.0
        %2089 = vmatprep.subr.mxu0 0.0
        %2090 = vmatpush2.msra.mxu0 0.0
        %2091 = vmatprep.subr.mxu0 0.0
        %2092 = vmatpush2.msra.mxu0 0.0
        %2093 = vmatprep.subr.mxu0 0.0
        %2094 = vmatpush2.msra.mxu0 0.0
        %2095 = vmatprep.subr.mxu0 0.0
        %2096 = vmatpush2.msra.mxu0 0.0
        %2097 = vmatprep.subr.mxu0 0.0
        %2098 = vmatpush2.msra.mxu0 0.0
        %2099 = vmatprep.subr.mxu0 0.0
        %2100 = vmatpush2.msra.mxu0 0.0
        %2101 = vmatprep.subr.mxu0 0.0
        %2102 = vmatpush2.msra.mxu0 0.0
        %2103 = vmatprep.subr.mxu0 0.0
        %2104 = vmatpush2.msra.mxu0 0.0
        %2105 = vmatprep.subr.mxu0 0.0
        %2106 = vmatpush2.msra.mxu0 0.0
        %2107 = vmatprep.subr.mxu0 0.0
        %2108 = vmatpush2.msra.mxu0 0.0
        %2109 = vmatprep.mubr.f32.mxu0 0.0
        %2110 = vmatmul.mubr.f32.gmra.mxu0 %v1948
        %v2111 = vpop.f32.mrf.mxu0
        %v2112 = vadd.f32 %v1944, %v2111
        %v2113 = vpop.f32.mrf.mxu0
        %v2114 = vadd.f32 %v1944, %v2113
        %2115 = vdwg.mxu0
        %2116 = vmatprep.subr.mxu0 0.0
        %2117 = vmatpush1.msra.mxu0 0.0
        %2118 = vmatprep.subr.mxu0 0.0
        %2119 = vmatpush1.msra.mxu0 0.0
        %2120 = vmatprep.subr.mxu0 %v1966
        %2121 = vmatpush1.msra.mxu0 %v1963
        %2122 = vmatprep.subr.mxu0 %v1929
        %2123 = vmatpush1.msra.mxu0 %v1928
        %2124 = vmatprep.subr.mxu0 %v1921
        %2125 = vmatpush1.msra.mxu0 %v1920
        %2126 = vmatprep.subr.mxu0 %v1913
        %2127 = vmatpush1.msra.mxu0 %v1912
        %2128 = vmatprep.subr.mxu0 %v1905
        %2129 = vmatpush1.msra.mxu0 %v1904
        %2130 = vmatprep.subr.mxu0 %v1897
        %2131 = vmatpush1.msra.mxu0 %v1896
        %2132 = vmatprep.subr.mxu0 %v1889
        %2133 = vmatpush1.msra.mxu0 %v1888
        %2134 = vmatprep.subr.mxu0 %v1881
        %2135 = vmatpush1.msra.mxu0 %v1880
        %2136 = vmatprep.subr.mxu0 %v1873
        %2137 = vmatpush1.msra.mxu0 %v1872
        %2138 = vmatprep.subr.mxu0 %v1865
        %2139 = vmatpush1.msra.mxu0 %v1864
        %2140 = vmatprep.subr.mxu0 %v1857
        %2141 = vmatpush1.msra.mxu0 %v1856
        %2142 = vmatprep.subr.mxu0 %v1849
        %2143 = vmatpush1.msra.mxu0 %v1848
        %2144 = vmatprep.subr.mxu0 %v1841
        %2145 = vmatpush1.msra.mxu0 %v1840
        %2146 = vmatprep.subr.mxu0 %v1833
        %2147 = vmatpush1.msra.mxu0 %v1832
        %2148 = vmatprep.subr.mxu0 0.0
        %2149 = vmatpush2.msra.mxu0 0.0
        %2150 = vmatprep.subr.mxu0 0.0
        %2151 = vmatpush2.msra.mxu0 0.0
        %2152 = vmatprep.subr.mxu0 0.0
        %2153 = vmatpush2.msra.mxu0 0.0
        %2154 = vmatprep.subr.mxu0 0.0
        %2155 = vmatpush2.msra.mxu0 0.0
        %2156 = vmatprep.subr.mxu0 0.0
        %2157 = vmatpush2.msra.mxu0 0.0
        %2158 = vmatprep.subr.mxu0 0.0
        %2159 = vmatpush2.msra.mxu0 0.0
        %2160 = vmatprep.subr.mxu0 0.0
        %2161 = vmatpush2.msra.mxu0 0.0
        %2162 = vmatprep.subr.mxu0 0.0
        %2163 = vmatpush2.msra.mxu0 0.0
        %2164 = vmatprep.subr.mxu0 0.0
        %2165 = vmatpush2.msra.mxu0 0.0
        %2166 = vmatprep.subr.mxu0 0.0
        %2167 = vmatpush2.msra.mxu0 0.0
        %2168 = vmatprep.subr.mxu0 0.0
        %2169 = vmatpush2.msra.mxu0 0.0
        %2170 = vmatprep.subr.mxu0 0.0
        %2171 = vmatpush2.msra.mxu0 0.0
        %2172 = vmatprep.subr.mxu0 0.0
        %2173 = vmatpush2.msra.mxu0 0.0
        %2174 = vmatprep.subr.mxu0 0.0
        %2175 = vmatpush2.msra.mxu0 0.0
        %2176 = vmatprep.subr.mxu0 0.0
        %2177 = vmatpush2.msra.mxu0 0.0
        %2178 = vmatprep.subr.mxu0 0.0
        %2179 = vmatpush2.msra.mxu0 0.0
        %2180 = vmatprep.mubr.f32.mxu0 0.0
        %2181 = vmatmul.mubr.f32.gmra.mxu0 %v1948
        %v2182 = vpop.f32.mrf.mxu0
        %v2183 = vadd.f32 %v1944, %v2182
        %v2184 = vpop.f32.mrf.mxu0
        %v2185 = vadd.f32 %v1944, %v2184
        %2186 = vdwg.mxu0
        %2187 = vmatprep.subr.mxu0 0.0
        %2188 = vmatpush1.msra.mxu0 0.0
        %2189 = vmatprep.subr.mxu0 0.0
        %2190 = vmatpush1.msra.mxu0 0.0
        %2191 = vmatprep.subr.mxu0 %v1972
        %2192 = vmatpush1.msra.mxu0 %v1969
        %2193 = vmatprep.subr.mxu0 %v1931
        %2194 = vmatpush1.msra.mxu0 %v1930
        %2195 = vmatprep.subr.mxu0 %v1923
        %2196 = vmatpush1.msra.mxu0 %v1922
        %2197 = vmatprep.subr.mxu0 %v1915
        %2198 = vmatpush1.msra.mxu0 %v1914
        %2199 = vmatprep.subr.mxu0 %v1907
        %2200 = vmatpush1.msra.mxu0 %v1906
        %2201 = vmatprep.subr.mxu0 %v1899
        %2202 = vmatpush1.msra.mxu0 %v1898
        %2203 = vmatprep.subr.mxu0 %v1891
        %2204 = vmatpush1.msra.mxu0 %v1890
        %2205 = vmatprep.subr.mxu0 %v1883
        %2206 = vmatpush1.msra.mxu0 %v1882
        %2207 = vmatprep.subr.mxu0 %v1875
        %2208 = vmatpush1.msra.mxu0 %v1874
        %2209 = vmatprep.subr.mxu0 %v1867
        %2210 = vmatpush1.msra.mxu0 %v1866
        %2211 = vmatprep.subr.mxu0 %v1859
        %2212 = vmatpush1.msra.mxu0 %v1858
        %2213 = vmatprep.subr.mxu0 %v1851
        %2214 = vmatpush1.msra.mxu0 %v1850
        %2215 = vmatprep.subr.mxu0 %v1843
        %2216 = vmatpush1.msra.mxu0 %v1842
        %2217 = vmatprep.subr.mxu0 %v1835
        %2218 = vmatpush1.msra.mxu0 %v1834
        %2219 = vmatprep.subr.mxu0 0.0
        %2220 = vmatpush2.msra.mxu0 0.0
        %2221 = vmatprep.subr.mxu0 0.0
        %2222 = vmatpush2.msra.mxu0 0.0
        %2223 = vmatprep.subr.mxu0 0.0
        %2224 = vmatpush2.msra.mxu0 0.0
        %2225 = vmatprep.subr.mxu0 0.0
        %2226 = vmatpush2.msra.mxu0 0.0
        %2227 = vmatprep.subr.mxu0 0.0
        %2228 = vmatpush2.msra.mxu0 0.0
        %2229 = vmatprep.subr.mxu0 0.0
        %2230 = vmatpush2.msra.mxu0 0.0
        %2231 = vmatprep.subr.mxu0 0.0
        %2232 = vmatpush2.msra.mxu0 0.0
        %2233 = vmatprep.subr.mxu0 0.0
        %2234 = vmatpush2.msra.mxu0 0.0
        %2235 = vmatprep.subr.mxu0 0.0
        %2236 = vmatpush2.msra.mxu0 0.0
        %2237 = vmatprep.subr.mxu0 0.0
        %2238 = vmatpush2.msra.mxu0 0.0
        %2239 = vmatprep.subr.mxu0 0.0
        %2240 = vmatpush2.msra.mxu0 0.0
        %2241 = vmatprep.subr.mxu0 0.0
        %2242 = vmatpush2.msra.mxu0 0.0
        %2243 = vmatprep.subr.mxu0 0.0
        %2244 = vmatpush2.msra.mxu0 0.0
        %2245 = vmatprep.subr.mxu0 0.0
        %2246 = vmatpush2.msra.mxu0 0.0
        %2247 = vmatprep.subr.mxu0 0.0
        %2248 = vmatpush2.msra.mxu0 0.0
        %2249 = vmatprep.subr.mxu0 0.0
        %2250 = vmatpush2.msra.mxu0 0.0
        %2251 = vmatprep.mubr.f32.mxu0 0.0
        %2252 = vmatmul.mubr.f32.gmra.mxu0 %v1948
        %v2253 = vpop.f32.mrf.mxu0
        %v2254 = vadd.f32 %v1944, %v2253
        %v2255 = vpop.f32.mrf.mxu0
        %v2256 = vadd.f32 %v1944, %v2255
        %2257 = vdwg.mxu0
        %v2258 = vmax.f32 %v2041, 0.0
        %v2259 = vmax.f32 %v2043, 0.0
        %v2260 = vmax.f32 %v2112, 0.0
        %v2261 = vmax.f32 %v2114, 0.0
        %v2262 = vmax.f32 %v2183, 0.0
        %v2263 = vmax.f32 %v2185, 0.0
        %v2264 = vmax.f32 %v2254, 0.0
        %v2265 = vmax.f32 %v2256, 0.0
        %v2266 = vld [vmem:[%s7] sm:$0xff]
        %v2268 = vlaneseq
        %v2269 = vshrl.u32 %v2268, 7
        %v2270 = vsub.s32 0, %v2269
        %v2271 = vrot.slane %v2266, %v2270
        %v2272 = vlaneseq
        %v2273 = vshrl.u32 %v2272, 7
        %v2274 = vsub.s32 1, %v2273
        %v2275 = vrot.slane %v2266, %v2274
        %v2276 = vlaneseq
        %v2277 = vshrl.u32 %v2276, 7
        %v2278 = vsub.s32 2, %v2277
        %v2279 = vrot.slane %v2266, %v2278
        %v2280 = vlaneseq
        %v2281 = vshrl.u32 %v2280, 7
        %v2282 = vsub.s32 3, %v2281
        %v2283 = vrot.slane %v2266, %v2282
        %v2284 = vlaneseq
        %v2285 = vshrl.u32 %v2284, 7
        %v2286 = vsub.s32 4, %v2285
        %v2287 = vrot.slane %v2266, %v2286
        %v2288 = vlaneseq
        %v2289 = vshrl.u32 %v2288, 7
        %v2290 = vsub.s32 5, %v2289
        %v2291 = vrot.slane %v2266, %v2290
        %v2292 = vlaneseq
        %v2293 = vshrl.u32 %v2292, 7
        %v2294 = vsub.s32 6, %v2293
        %v2295 = vrot.slane %v2266, %v2294
        %v2296 = vlaneseq
        %v2297 = vshrl.u32 %v2296, 7
        %v2298 = vsub.s32 7, %v2297
        %v2299 = vrot.slane %v2266, %v2298
        %v2308 = vmul.f32 %v2258, %v2271
        %v2309 = vmul.f32 %v2259, %v2275
        %v2310 = vmul.f32 %v2260, %v2279
        %v2311 = vmul.f32 %v2261, %v2283
        %v2312 = vmul.f32 %v2262, %v2287
        %v2313 = vmul.f32 %v2263, %v2291
        %v2314 = vmul.f32 %v2264, %v2295
        %v2315 = vmul.f32 %v2265, %v2299
        %v2324 = vcombine.low %v2308, %v2309
        %v2325 = vcombine.low %v2310, %v2311
        %v2326 = vcombine.low %v2312, %v2313
        %v2327 = vcombine.low %v2314, %v2315
        %2332 = vst [vmem:[#allocation2 + $0x4] sm:$0xff] %v2324
        %2333 = vst [vmem:[#allocation2 + $0xc] sm:$0xff] %v2325
        %2334 = vst [vmem:[#allocation2 + $0x14] sm:$0xff] %v2326
        %2335 = vst.msk [vmem:[#allocation2 + $0x1c] sm:$0xff] %vm344, %v2327
        %v2336 = vld [vmem:[#allocation2] sm:$0xff]
        %v2337 = vld [vmem:[#allocation2 + $0x8] sm:$0xff]
        %v2338 = vld [vmem:[#allocation2 + $0x10] sm:$0xff]
        %v2339 = vld [vmem:[#allocation2 + $0x18] sm:$0xff]
        %v2344 = vcombine.high %v2336, %v2336
        %v2345 = vcombine.high %v2337, %v2337
        %v2346 = vcombine.high %v2338, %v2338
        %v2347 = vcombine.high %v2339, %v2339
        %2348 = vrot.lane.b32.xlu0 %v2336, 111
        %v2349 = vpop.permute.xlu0 %2348
        %2350 = vrot.lane.b32.xlu0 %v2344, 111
        %v2351 = vpop.permute.xlu0 %2350
        %2352 = vrot.lane.b32.xlu0 %v2337, 111
        %v2353 = vpop.permute.xlu0 %2352
        %2354 = vrot.lane.b32.xlu0 %v2345, 111
        %v2355 = vpop.permute.xlu0 %2354
        %2356 = vrot.lane.b32.xlu0 %v2338, 111
        %v2357 = vpop.permute.xlu0 %2356
        %2358 = vrot.lane.b32.xlu0 %v2346, 111
        %v2359 = vpop.permute.xlu0 %2358
        %2360 = vrot.lane.b32.xlu0 %v2339, 111
        %v2361 = vpop.permute.xlu0 %2360
        %2362 = vrot.lane.b32.xlu0 %v2347, 111
        %v2363 = vpop.permute.xlu0 %2362
        %v2364 = vsel %vm374, %v2349, %v2351
        %v2365 = vsel %vm374, %v2351, %v2353
        %v2366 = vsel %vm374, %v2353, %v2355
        %v2367 = vsel %vm374, %v2355, %v2357
        %v2368 = vsel %vm374, %v2357, %v2359
        %v2369 = vsel %vm374, %v2359, %v2361
        %v2370 = vsel %vm374, %v2361, %v2363
        %2379 = vst [vmem:[#allocation3] sm:$0xf] %v2364
        %2380 = vst [vmem:[#allocation3 + $0x8] sm:$0xf] %v2365
        %2381 = vst [vmem:[#allocation3 + $0x10] sm:$0xf] %v2366
        %2382 = vst [vmem:[#allocation3 + $0x18] sm:$0xf] %v2367
        %2383 = vst [vmem:[#allocation3 + $0x20] sm:$0xf] %v2368
        %2384 = vst [vmem:[#allocation3 + $0x28] sm:$0xf] %v2369
        %2385 = vst [vmem:[#allocation3 + $0x30] sm:$0xf] %v2370
        %2386 = vst.msk [vmem:[#allocation3 + $0x38] sm:$0xf] %vm397, %v2363
        %v2387 = vld [vmem:[#allocation2] sm:$0xff]
        %v2388 = vld [vmem:[#allocation2 + $0x8] sm:$0xff]
        %v2389 = vld [vmem:[#allocation2 + $0x10] sm:$0xff]
        %v2390 = vld [vmem:[#allocation2 + $0x18] sm:$0xff]
        %v2395 = vcombine.low %v2387, %v2387
        %v2396 = vcombine.low %v2388, %v2388
        %v2397 = vcombine.low %v2389, %v2389
        %v2398 = vcombine.low %v2390, %v2390
        %2399 = vrot.lane.b32.xlu0 %v2395, 110
        %v2400 = vpop.permute.xlu0 %2399
        %2401 = vrot.lane.b32.xlu0 %v2387, 110
        %v2402 = vpop.permute.xlu0 %2401
        %2403 = vrot.lane.b32.xlu0 %v2396, 110
        %v2404 = vpop.permute.xlu0 %2403
        %2405 = vrot.lane.b32.xlu0 %v2388, 110
        %v2406 = vpop.permute.xlu0 %2405
        %2407 = vrot.lane.b32.xlu0 %v2397, 110
        %v2408 = vpop.permute.xlu0 %2407
        %2409 = vrot.lane.b32.xlu0 %v2389, 110
        %v2410 = vpop.permute.xlu0 %2409
        %2411 = vrot.lane.b32.xlu0 %v2398, 110
        %v2412 = vpop.permute.xlu0 %2411
        %2413 = vrot.lane.b32.xlu0 %v2390, 110
        %v2414 = vpop.permute.xlu0 %2413
        %v2415 = vsel %vm427, %v2400, %v2402
        %v2416 = vsel %vm427, %v2402, %v2404
        %v2417 = vsel %vm427, %v2404, %v2406
        %v2418 = vsel %vm427, %v2406, %v2408
        %v2419 = vsel %vm427, %v2408, %v2410
        %v2420 = vsel %vm427, %v2410, %v2412
        %v2421 = vsel %vm427, %v2412, %v2414
        %2430 = vst [vmem:[#allocation3] sm:$0xf0] %v2415
        %2431 = vst [vmem:[#allocation3 + $0x8] sm:$0xf0] %v2416
        %2432 = vst [vmem:[#allocation3 + $0x10] sm:$0xf0] %v2417
        %2433 = vst [vmem:[#allocation3 + $0x18] sm:$0xf0] %v2418
        %2434 = vst [vmem:[#allocation3 + $0x20] sm:$0xf0] %v2419
        %2435 = vst [vmem:[#allocation3 + $0x28] sm:$0xf0] %v2420
        %2436 = vst [vmem:[#allocation3 + $0x30] sm:$0xf0] %v2421
        %2437 = vst.msk [vmem:[#allocation3 + $0x38] sm:$0xf0] %vm333, %v2414
        %v2438 = vld [vmem:[#allocation2] sm:$0xff]
        %v2439 = vld [vmem:[#allocation2 + $0x8] sm:$0xff]
        %v2440 = vld [vmem:[#allocation2 + $0x10] sm:$0xff]
        %v2441 = vld [vmem:[#allocation2 + $0x18] sm:$0xff]
        %v2446 = vcombine.high %v2438, %v2438
        %v2447 = vcombine.high %v2439, %v2439
        %v2448 = vcombine.high %v2440, %v2440
        %v2449 = vcombine.high %v2441, %v2441
        %2450 = vrot.lane.b32.xlu0 %v2438, 109
        %v2451 = vpop.permute.xlu0 %2450
        %2452 = vrot.lane.b32.xlu0 %v2446, 109
        %v2453 = vpop.permute.xlu0 %2452
        %2454 = vrot.lane.b32.xlu0 %v2439, 109
        %v2455 = vpop.permute.xlu0 %2454
        %2456 = vrot.lane.b32.xlu0 %v2447, 109
        %v2457 = vpop.permute.xlu0 %2456
        %2458 = vrot.lane.b32.xlu0 %v2440, 109
        %v2459 = vpop.permute.xlu0 %2458
        %2460 = vrot.lane.b32.xlu0 %v2448, 109
        %v2461 = vpop.permute.xlu0 %2460
        %2462 = vrot.lane.b32.xlu0 %v2441, 109
        %v2463 = vpop.permute.xlu0 %2462
        %2464 = vrot.lane.b32.xlu0 %v2449, 109
        %v2465 = vpop.permute.xlu0 %2464
        %v2466 = vsel %vm479, %v2451, %v2453
        %v2467 = vsel %vm479, %v2453, %v2455
        %v2468 = vsel %vm479, %v2455, %v2457
        %v2469 = vsel %vm479, %v2457, %v2459
        %v2470 = vsel %vm479, %v2459, %v2461
        %v2471 = vsel %vm479, %v2461, %v2463
        %v2472 = vsel %vm479, %v2463, %v2465
        %2481 = vst [vmem:[#allocation3 + $0x40] sm:$0xf] %v2466
        %2482 = vst [vmem:[#allocation3 + $0x48] sm:$0xf] %v2467
        %2483 = vst [vmem:[#allocation3 + $0x50] sm:$0xf] %v2468
        %2484 = vst [vmem:[#allocation3 + $0x58] sm:$0xf] %v2469
        %2485 = vst [vmem:[#allocation3 + $0x60] sm:$0xf] %v2470
        %2486 = vst [vmem:[#allocation3 + $0x68] sm:$0xf] %v2471
        %2487 = vst [vmem:[#allocation3 + $0x70] sm:$0xf] %v2472
        %2488 = vst.msk [vmem:[#allocation3 + $0x78] sm:$0xf] %vm397, %v2465
        %v2489 = vld [vmem:[#allocation2] sm:$0xff]
        %v2490 = vld [vmem:[#allocation2 + $0x8] sm:$0xff]
        %v2491 = vld [vmem:[#allocation2 + $0x10] sm:$0xff]
        %v2492 = vld [vmem:[#allocation2 + $0x18] sm:$0xff]
        %v2493 = vld [vmem:[#allocation2 + $0x20] sm:$0xf]
        %v2499 = vcombine.low %v2489, %v2489
        %v2500 = vcombine.low %v2490, %v2490
        %v2501 = vcombine.low %v2491, %v2491
        %v2502 = vcombine.low %v2492, %v2492
        %v2503 = vcombine.low %v2493, %v2493
        %2504 = vrot.lane.b32.xlu0 %v2499, 101
        %v2505 = vpop.permute.xlu0 %2504
        %2506 = vrot.lane.b32.xlu0 %v2489, 101
        %v2507 = vpop.permute.xlu0 %2506
        %2508 = vrot.lane.b32.xlu0 %v2500, 101
        %v2509 = vpop.permute.xlu0 %2508
        %2510 = vrot.lane.b32.xlu0 %v2490, 101
        %v2511 = vpop.permute.xlu0 %2510
        %2512 = vrot.lane.b32.xlu0 %v2501, 101
        %v2513 = vpop.permute.xlu0 %2512
        %2514 = vrot.lane.b32.xlu0 %v2491, 101
        %v2515 = vpop.permute.xlu0 %2514
        %2516 = vrot.lane.b32.xlu0 %v2502, 101
        %v2517 = vpop.permute.xlu0 %2516
        %2518 = vrot.lane.b32.xlu0 %v2492, 101
        %v2519 = vpop.permute.xlu0 %2518
        %2520 = vrot.lane.b32.xlu0 %v2503, 101
        %v2521 = vpop.permute.xlu0 %2520
        %v2522 = vsel %vm536, %v2505, %v2507
        %v2523 = vsel %vm536, %v2507, %v2509
        %v2524 = vsel %vm536, %v2509, %v2511
        %v2525 = vsel %vm536, %v2511, %v2513
        %v2526 = vsel %vm536, %v2513, %v2515
        %v2527 = vsel %vm536, %v2515, %v2517
        %v2528 = vsel %vm536, %v2517, %v2519
        %v2529 = vsel %vm536, %v2519, %v2521
        %2538 = vst [vmem:[#allocation3 + $0x40] sm:$0xf0] %v2522
        %2539 = vst [vmem:[#allocation3 + $0x48] sm:$0xf0] %v2523
        %2540 = vst [vmem:[#allocation3 + $0x50] sm:$0xf0] %v2524
        %2541 = vst [vmem:[#allocation3 + $0x58] sm:$0xf0] %v2525
        %2542 = vst [vmem:[#allocation3 + $0x60] sm:$0xf0] %v2526
        %2543 = vst [vmem:[#allocation3 + $0x68] sm:$0xf0] %v2527
        %2544 = vst [vmem:[#allocation3 + $0x70] sm:$0xf0] %v2528
        %2545 = vst.msk [vmem:[#allocation3 + $0x78] sm:$0xf0] %vm333, %v2529
        %v2546 = vld [vmem:[#allocation2] sm:$0xff]
        %v2547 = vld [vmem:[#allocation2 + $0x8] sm:$0xff]
        %v2548 = vld [vmem:[#allocation2 + $0x10] sm:$0xff]
        %v2549 = vld [vmem:[#allocation2 + $0x18] sm:$0xff]
        %v2550 = vld [vmem:[#allocation2 + $0x20] sm:$0xf]
        %v2556 = vcombine.high %v2546, %v2546
        %v2557 = vcombine.high %v2547, %v2547
        %v2558 = vcombine.high %v2548, %v2548
        %v2559 = vcombine.high %v2549, %v2549
        %2560 = vrot.lane.b32.xlu0 %v2546, 100
        %v2561 = vpop.permute.xlu0 %2560
        %2562 = vrot.lane.b32.xlu0 %v2556, 100
        %v2563 = vpop.permute.xlu0 %2562
        %2564 = vrot.lane.b32.xlu0 %v2547, 100
        %v2565 = vpop.permute.xlu0 %2564
        %2566 = vrot.lane.b32.xlu0 %v2557, 100
        %v2567 = vpop.permute.xlu0 %2566
        %2568 = vrot.lane.b32.xlu0 %v2548, 100
        %v2569 = vpop.permute.xlu0 %2568
        %2570 = vrot.lane.b32.xlu0 %v2558, 100
        %v2571 = vpop.permute.xlu0 %2570
        %2572 = vrot.lane.b32.xlu0 %v2549, 100
        %v2573 = vpop.permute.xlu0 %2572
        %2574 = vrot.lane.b32.xlu0 %v2559, 100
        %v2575 = vpop.permute.xlu0 %2574
        %2576 = vrot.lane.b32.xlu0 %v2550, 100
        %v2577 = vpop.permute.xlu0 %2576
        %v2578 = vsel %vm593, %v2561, %v2563
        %v2579 = vsel %vm593, %v2563, %v2565
        %v2580 = vsel %vm593, %v2565, %v2567
        %v2581 = vsel %vm593, %v2567, %v2569
        %v2582 = vsel %vm593, %v2569, %v2571
        %v2583 = vsel %vm593, %v2571, %v2573
        %v2584 = vsel %vm593, %v2573, %v2575
        %v2585 = vsel %vm593, %v2575, %v2577
        %2594 = vst [vmem:[#allocation3 + $0x80] sm:$0xf] %v2578
        %2595 = vst [vmem:[#allocation3 + $0x88] sm:$0xf] %v2579
        %2596 = vst [vmem:[#allocation3 + $0x90] sm:$0xf] %v2580
        %2597 = vst [vmem:[#allocation3 + $0x98] sm:$0xf] %v2581
        %2598 = vst [vmem:[#allocation3 + $0xa0] sm:$0xf] %v2582
        %2599 = vst [vmem:[#allocation3 + $0xa8] sm:$0xf] %v2583
        %2600 = vst [vmem:[#allocation3 + $0xb0] sm:$0xf] %v2584
        %2601 = vst.msk [vmem:[#allocation3 + $0xb8] sm:$0xf] %vm397, %v2585
        %v2602 = vld [vmem:[#allocation2] sm:$0xff]
        %v2603 = vld [vmem:[#allocation2 + $0x8] sm:$0xff]
        %v2604 = vld [vmem:[#allocation2 + $0x10] sm:$0xff]
        %v2605 = vld [vmem:[#allocation2 + $0x18] sm:$0xff]
        %v2606 = vld [vmem:[#allocation2 + $0x20] sm:$0xf]
        %v2612 = vcombine.low %v2602, %v2602
        %v2613 = vcombine.low %v2603, %v2603
        %v2614 = vcombine.low %v2604, %v2604
        %v2615 = vcombine.low %v2605, %v2605
        %v2616 = vcombine.low %v2606, %v2606
        %2617 = vrot.lane.b32.xlu0 %v2612, 99
        %v2618 = vpop.permute.xlu0 %2617
        %2619 = vrot.lane.b32.xlu0 %v2602, 99
        %v2620 = vpop.permute.xlu0 %2619
        %2621 = vrot.lane.b32.xlu0 %v2613, 99
        %v2622 = vpop.permute.xlu0 %2621
        %2623 = vrot.lane.b32.xlu0 %v2603, 99
        %v2624 = vpop.permute.xlu0 %2623
        %2625 = vrot.lane.b32.xlu0 %v2614, 99
        %v2626 = vpop.permute.xlu0 %2625
        %2627 = vrot.lane.b32.xlu0 %v2604, 99
        %v2628 = vpop.permute.xlu0 %2627
        %2629 = vrot.lane.b32.xlu0 %v2615, 99
        %v2630 = vpop.permute.xlu0 %2629
        %2631 = vrot.lane.b32.xlu0 %v2605, 99
        %v2632 = vpop.permute.xlu0 %2631
        %2633 = vrot.lane.b32.xlu0 %v2616, 99
        %v2634 = vpop.permute.xlu0 %2633
        %v2635 = vsel %vm651, %v2618, %v2620
        %v2636 = vsel %vm651, %v2620, %v2622
        %v2637 = vsel %vm651, %v2622, %v2624
        %v2638 = vsel %vm651, %v2624, %v2626
        %v2639 = vsel %vm651, %v2626, %v2628
        %v2640 = vsel %vm651, %v2628, %v2630
        %v2641 = vsel %vm651, %v2630, %v2632
        %v2642 = vsel %vm651, %v2632, %v2634
        %2651 = vst [vmem:[#allocation3 + $0x80] sm:$0xf0] %v2635
        %2652 = vst [vmem:[#allocation3 + $0x88] sm:$0xf0] %v2636
        %2653 = vst [vmem:[#allocation3 + $0x90] sm:$0xf0] %v2637
        %2654 = vst [vmem:[#allocation3 + $0x98] sm:$0xf0] %v2638
        %2655 = vst [vmem:[#allocation3 + $0xa0] sm:$0xf0] %v2639
        %2656 = vst [vmem:[#allocation3 + $0xa8] sm:$0xf0] %v2640
        %2657 = vst [vmem:[#allocation3 + $0xb0] sm:$0xf0] %v2641
        %2658 = vst.msk [vmem:[#allocation3 + $0xb8] sm:$0xf0] %vm333, %v2642
        %v2659 = vld [vmem:[#allocation2] sm:$0xff]
        %v2660 = vld [vmem:[#allocation2 + $0x8] sm:$0xff]
        %v2661 = vld [vmem:[#allocation2 + $0x10] sm:$0xff]
        %v2662 = vld [vmem:[#allocation2 + $0x18] sm:$0xff]
        %v2663 = vld [vmem:[#allocation2 + $0x20] sm:$0xf]
        %v2669 = vcombine.high %v2659, %v2659
        %v2670 = vcombine.high %v2660, %v2660
        %v2671 = vcombine.high %v2661, %v2661
        %v2672 = vcombine.high %v2662, %v2662
        %2673 = vrot.lane.b32.xlu0 %v2659, 91
        %v2674 = vpop.permute.xlu0 %2673
        %2675 = vrot.lane.b32.xlu0 %v2669, 91
        %v2676 = vpop.permute.xlu0 %2675
        %2677 = vrot.lane.b32.xlu0 %v2660, 91
        %v2678 = vpop.permute.xlu0 %2677
        %2679 = vrot.lane.b32.xlu0 %v2670, 91
        %v2680 = vpop.permute.xlu0 %2679
        %2681 = vrot.lane.b32.xlu0 %v2661, 91
        %v2682 = vpop.permute.xlu0 %2681
        %2683 = vrot.lane.b32.xlu0 %v2671, 91
        %v2684 = vpop.permute.xlu0 %2683
        %2685 = vrot.lane.b32.xlu0 %v2662, 91
        %v2686 = vpop.permute.xlu0 %2685
        %2687 = vrot.lane.b32.xlu0 %v2672, 91
        %v2688 = vpop.permute.xlu0 %2687
        %2689 = vrot.lane.b32.xlu0 %v2663, 91
        %v2690 = vpop.permute.xlu0 %2689
        %v2691 = vsel %vm708, %v2674, %v2676
        %v2692 = vsel %vm708, %v2676, %v2678
        %v2693 = vsel %vm708, %v2678, %v2680
        %v2694 = vsel %vm708, %v2680, %v2682
        %v2695 = vsel %vm708, %v2682, %v2684
        %v2696 = vsel %vm708, %v2684, %v2686
        %v2697 = vsel %vm708, %v2686, %v2688
        %v2698 = vsel %vm708, %v2688, %v2690
        %2707 = vst [vmem:[#allocation3 + $0xc0] sm:$0xf] %v2691
        %2708 = vst [vmem:[#allocation3 + $0xc8] sm:$0xf] %v2692
        %2709 = vst [vmem:[#allocation3 + $0xd0] sm:$0xf] %v2693
        %2710 = vst [vmem:[#allocation3 + $0xd8] sm:$0xf] %v2694
        %2711 = vst [vmem:[#allocation3 + $0xe0] sm:$0xf] %v2695
        %2712 = vst [vmem:[#allocation3 + $0xe8] sm:$0xf] %v2696
        %2713 = vst [vmem:[#allocation3 + $0xf0] sm:$0xf] %v2697
        %2714 = vst.msk [vmem:[#allocation3 + $0xf8] sm:$0xf] %vm397, %v2698
        %v2715 = vld [vmem:[#allocation2] sm:$0xff]
        %v2716 = vld [vmem:[#allocation2 + $0x8] sm:$0xff]
        %v2717 = vld [vmem:[#allocation2 + $0x10] sm:$0xff]
        %v2718 = vld [vmem:[#allocation2 + $0x18] sm:$0xff]
        %v2719 = vld [vmem:[#allocation2 + $0x20] sm:$0xf]
        %v2725 = vcombine.low %v2715, %v2715
        %v2726 = vcombine.low %v2716, %v2716
        %v2727 = vcombine.low %v2717, %v2717
        %v2728 = vcombine.low %v2718, %v2718
        %v2729 = vcombine.low %v2719, %v2719
        %2730 = vrot.lane.b32.xlu0 %v2725, 90
        %v2731 = vpop.permute.xlu0 %2730
        %2732 = vrot.lane.b32.xlu0 %v2715, 90
        %v2733 = vpop.permute.xlu0 %2732
        %2734 = vrot.lane.b32.xlu0 %v2726, 90
        %v2735 = vpop.permute.xlu0 %2734
        %2736 = vrot.lane.b32.xlu0 %v2716, 90
        %v2737 = vpop.permute.xlu0 %2736
        %2738 = vrot.lane.b32.xlu0 %v2727, 90
        %v2739 = vpop.permute.xlu0 %2738
        %2740 = vrot.lane.b32.xlu0 %v2717, 90
        %v2741 = vpop.permute.xlu0 %2740
        %2742 = vrot.lane.b32.xlu0 %v2728, 90
        %v2743 = vpop.permute.xlu0 %2742
        %2744 = vrot.lane.b32.xlu0 %v2718, 90
        %v2745 = vpop.permute.xlu0 %2744
        %2746 = vrot.lane.b32.xlu0 %v2729, 90
        %v2747 = vpop.permute.xlu0 %2746
        %v2748 = vsel %vm766, %v2731, %v2733
        %v2749 = vsel %vm766, %v2733, %v2735
        %v2750 = vsel %vm766, %v2735, %v2737
        %v2751 = vsel %vm766, %v2737, %v2739
        %v2752 = vsel %vm766, %v2739, %v2741
        %v2753 = vsel %vm766, %v2741, %v2743
        %v2754 = vsel %vm766, %v2743, %v2745
        %v2755 = vsel %vm766, %v2745, %v2747
        %2764 = vst [vmem:[#allocation3 + $0xc0] sm:$0xf0] %v2748
        %2765 = vst [vmem:[#allocation3 + $0xc8] sm:$0xf0] %v2749
        %2766 = vst [vmem:[#allocation3 + $0xd0] sm:$0xf0] %v2750
        %2767 = vst [vmem:[#allocation3 + $0xd8] sm:$0xf0] %v2751
        %2768 = vst [vmem:[#allocation3 + $0xe0] sm:$0xf0] %v2752
        %2769 = vst [vmem:[#allocation3 + $0xe8] sm:$0xf0] %v2753
        %2770 = vst [vmem:[#allocation3 + $0xf0] sm:$0xf0] %v2754
        %2771 = vst.msk [vmem:[#allocation3 + $0xf8] sm:$0xf0] %vm333, %v2755
        %v2772 = vld [vmem:[#allocation2] sm:$0xff]
        %v2773 = vld [vmem:[#allocation2 + $0x8] sm:$0xff]
        %v2774 = vld [vmem:[#allocation2 + $0x10] sm:$0xff]
        %v2775 = vld [vmem:[#allocation2 + $0x18] sm:$0xff]
        %v2776 = vld [vmem:[#allocation2 + $0x20] sm:$0xf]
        %v2782 = vcombine.high %v2772, %v2772
        %v2783 = vcombine.high %v2773, %v2773
        %v2784 = vcombine.high %v2774, %v2774
        %v2785 = vcombine.high %v2775, %v2775
        %2786 = vrot.lane.b32.xlu0 %v2772, 89
        %v2787 = vpop.permute.xlu0 %2786
        %2788 = vrot.lane.b32.xlu0 %v2782, 89
        %v2789 = vpop.permute.xlu0 %2788
        %2790 = vrot.lane.b32.xlu0 %v2773, 89
        %v2791 = vpop.permute.xlu0 %2790
        %2792 = vrot.lane.b32.xlu0 %v2783, 89
        %v2793 = vpop.permute.xlu0 %2792
        %2794 = vrot.lane.b32.xlu0 %v2774, 89
        %v2795 = vpop.permute.xlu0 %2794
        %2796 = vrot.lane.b32.xlu0 %v2784, 89
        %v2797 = vpop.permute.xlu0 %2796
        %2798 = vrot.lane.b32.xlu0 %v2775, 89
        %v2799 = vpop.permute.xlu0 %2798
        %2800 = vrot.lane.b32.xlu0 %v2785, 89
        %v2801 = vpop.permute.xlu0 %2800
        %2802 = vrot.lane.b32.xlu0 %v2776, 89
        %v2803 = vpop.permute.xlu0 %2802
        %v2804 = vsel %vm823, %v2787, %v2789
        %v2805 = vsel %vm823, %v2789, %v2791
        %v2806 = vsel %vm823, %v2791, %v2793
        %v2807 = vsel %vm823, %v2793, %v2795
        %v2808 = vsel %vm823, %v2795, %v2797
        %v2809 = vsel %vm823, %v2797, %v2799
        %v2810 = vsel %vm823, %v2799, %v2801
        %v2811 = vsel %vm823, %v2801, %v2803
        %2820 = vst [vmem:[#allocation3 + $0x100] sm:$0xf] %v2804
        %2821 = vst [vmem:[#allocation3 + $0x108] sm:$0xf] %v2805
        %2822 = vst [vmem:[#allocation3 + $0x110] sm:$0xf] %v2806
        %2823 = vst [vmem:[#allocation3 + $0x118] sm:$0xf] %v2807
        %2824 = vst [vmem:[#allocation3 + $0x120] sm:$0xf] %v2808
        %2825 = vst [vmem:[#allocation3 + $0x128] sm:$0xf] %v2809
        %2826 = vst [vmem:[#allocation3 + $0x130] sm:$0xf] %v2810
        %2827 = vst.msk [vmem:[#allocation3 + $0x138] sm:$0xf] %vm397, %v2811
        %v2828 = vld [vmem:[#allocation2] sm:$0xff]
        %v2829 = vld [vmem:[#allocation2 + $0x8] sm:$0xff]
        %v2830 = vld [vmem:[#allocation2 + $0x10] sm:$0xff]
        %v2831 = vld [vmem:[#allocation2 + $0x18] sm:$0xff]
        %v2832 = vld [vmem:[#allocation2 + $0x20] sm:$0xf]
        %v2838 = vcombine.low %v2828, %v2828
        %v2839 = vcombine.low %v2829, %v2829
        %v2840 = vcombine.low %v2830, %v2830
        %v2841 = vcombine.low %v2831, %v2831
        %v2842 = vcombine.low %v2832, %v2832
        %2843 = vrot.lane.b32.xlu0 %v2838, 11
        %v2844 = vpop.permute.xlu0 %2843
        %2845 = vrot.lane.b32.xlu0 %v2828, 11
        %v2846 = vpop.permute.xlu0 %2845
        %2847 = vrot.lane.b32.xlu0 %v2839, 11
        %v2848 = vpop.permute.xlu0 %2847
        %2849 = vrot.lane.b32.xlu0 %v2829, 11
        %v2850 = vpop.permute.xlu0 %2849
        %2851 = vrot.lane.b32.xlu0 %v2840, 11
        %v2852 = vpop.permute.xlu0 %2851
        %2853 = vrot.lane.b32.xlu0 %v2830, 11
        %v2854 = vpop.permute.xlu0 %2853
        %2855 = vrot.lane.b32.xlu0 %v2841, 11
        %v2856 = vpop.permute.xlu0 %2855
        %2857 = vrot.lane.b32.xlu0 %v2831, 11
        %v2858 = vpop.permute.xlu0 %2857
        %2859 = vrot.lane.b32.xlu0 %v2842, 11
        %v2860 = vpop.permute.xlu0 %2859
        %v2861 = vsel %vm881, %v2844, %v2846
        %v2862 = vsel %vm881, %v2846, %v2848
        %v2863 = vsel %vm881, %v2848, %v2850
        %v2864 = vsel %vm881, %v2850, %v2852
        %v2865 = vsel %vm881, %v2852, %v2854
        %v2866 = vsel %vm881, %v2854, %v2856
        %v2867 = vsel %vm881, %v2856, %v2858
        %v2868 = vsel %vm881, %v2858, %v2860
        %2877 = vst [vmem:[#allocation3 + $0x100] sm:$0xf0] %v2861
        %2878 = vst [vmem:[#allocation3 + $0x108] sm:$0xf0] %v2862
        %2879 = vst [vmem:[#allocation3 + $0x110] sm:$0xf0] %v2863
        %2880 = vst [vmem:[#allocation3 + $0x118] sm:$0xf0] %v2864
        %2881 = vst [vmem:[#allocation3 + $0x120] sm:$0xf0] %v2865
        %2882 = vst [vmem:[#allocation3 + $0x128] sm:$0xf0] %v2866
        %2883 = vst [vmem:[#allocation3 + $0x130] sm:$0xf0] %v2867
        %2884 = vst.msk [vmem:[#allocation3 + $0x138] sm:$0xf0] %vm333, %v2868
        %v2885 = vld [vmem:[#allocation2] sm:$0xff]
        %v2886 = vld [vmem:[#allocation2 + $0x8] sm:$0xff]
        %v2887 = vld [vmem:[#allocation2 + $0x10] sm:$0xff]
        %v2888 = vld [vmem:[#allocation2 + $0x18] sm:$0xff]
        %v2889 = vld [vmem:[#allocation2 + $0x20] sm:$0xf]
        %v2895 = vcombine.high %v2885, %v2885
        %v2896 = vcombine.high %v2886, %v2886
        %v2897 = vcombine.high %v2887, %v2887
        %v2898 = vcombine.high %v2888, %v2888
        %2899 = vrot.lane.b32.xlu0 %v2885, 10
        %v2900 = vpop.permute.xlu0 %2899
        %2901 = vrot.lane.b32.xlu0 %v2895, 10
        %v2902 = vpop.permute.xlu0 %2901
        %2903 = vrot.lane.b32.xlu0 %v2886, 10
        %v2904 = vpop.permute.xlu0 %2903
        %2905 = vrot.lane.b32.xlu0 %v2896, 10
        %v2906 = vpop.permute.xlu0 %2905
        %2907 = vrot.lane.b32.xlu0 %v2887, 10
        %v2908 = vpop.permute.xlu0 %2907
        %2909 = vrot.lane.b32.xlu0 %v2897, 10
        %v2910 = vpop.permute.xlu0 %2909
        %2911 = vrot.lane.b32.xlu0 %v2888, 10
        %v2912 = vpop.permute.xlu0 %2911
        %2913 = vrot.lane.b32.xlu0 %v2898, 10
        %v2914 = vpop.permute.xlu0 %2913
        %2915 = vrot.lane.b32.xlu0 %v2889, 10
        %v2916 = vpop.permute.xlu0 %2915
        %v2917 = vsel %vm938, %v2900, %v2902
        %v2918 = vsel %vm938, %v2902, %v2904
        %v2919 = vsel %vm938, %v2904, %v2906
        %v2920 = vsel %vm938, %v2906, %v2908
        %v2921 = vsel %vm938, %v2908, %v2910
        %v2922 = vsel %vm938, %v2910, %v2912
        %v2923 = vsel %vm938, %v2912, %v2914
        %v2924 = vsel %vm938, %v2914, %v2916
        %2933 = vst [vmem:[#allocation3 + $0x140] sm:$0xf] %v2917
        %2934 = vst [vmem:[#allocation3 + $0x148] sm:$0xf] %v2918
        %2935 = vst [vmem:[#allocation3 + $0x150] sm:$0xf] %v2919
        %2936 = vst [vmem:[#allocation3 + $0x158] sm:$0xf] %v2920
        %2937 = vst [vmem:[#allocation3 + $0x160] sm:$0xf] %v2921
        %2938 = vst [vmem:[#allocation3 + $0x168] sm:$0xf] %v2922
        %2939 = vst [vmem:[#allocation3 + $0x170] sm:$0xf] %v2923
        %2940 = vst.msk [vmem:[#allocation3 + $0x178] sm:$0xf] %vm397, %v2924
        %v2941 = vld [vmem:[#allocation2] sm:$0xff]
        %v2942 = vld [vmem:[#allocation2 + $0x8] sm:$0xff]
        %v2943 = vld [vmem:[#allocation2 + $0x10] sm:$0xff]
        %v2944 = vld [vmem:[#allocation2 + $0x18] sm:$0xff]
        %v2945 = vld [vmem:[#allocation2 + $0x20] sm:$0xf]
        %v2951 = vcombine.low %v2941, %v2941
        %v2952 = vcombine.low %v2942, %v2942
        %v2953 = vcombine.low %v2943, %v2943
        %v2954 = vcombine.low %v2944, %v2944
        %v2955 = vcombine.low %v2945, %v2945
        %2956 = vrot.lane.b32.xlu0 %v2951, 9
        %v2957 = vpop.permute.xlu0 %2956
        %2958 = vrot.lane.b32.xlu0 %v2941, 9
        %v2959 = vpop.permute.xlu0 %2958
        %2960 = vrot.lane.b32.xlu0 %v2952, 9
        %v2961 = vpop.permute.xlu0 %2960
        %2962 = vrot.lane.b32.xlu0 %v2942, 9
        %v2963 = vpop.permute.xlu0 %2962
        %2964 = vrot.lane.b32.xlu0 %v2953, 9
        %v2965 = vpop.permute.xlu0 %2964
        %2966 = vrot.lane.b32.xlu0 %v2943, 9
        %v2967 = vpop.permute.xlu0 %2966
        %2968 = vrot.lane.b32.xlu0 %v2954, 9
        %v2969 = vpop.permute.xlu0 %2968
        %2970 = vrot.lane.b32.xlu0 %v2944, 9
        %v2971 = vpop.permute.xlu0 %2970
        %2972 = vrot.lane.b32.xlu0 %v2955, 9
        %v2973 = vpop.permute.xlu0 %2972
        %v2974 = vsel %vm996, %v2957, %v2959
        %v2975 = vsel %vm996, %v2959, %v2961
        %v2976 = vsel %vm996, %v2961, %v2963
        %v2977 = vsel %vm996, %v2963, %v2965
        %v2978 = vsel %vm996, %v2965, %v2967
        %v2979 = vsel %vm996, %v2967, %v2969
        %v2980 = vsel %vm996, %v2969, %v2971
        %v2981 = vsel %vm996, %v2971, %v2973
        %2990 = vst [vmem:[#allocation3 + $0x140] sm:$0xf0] %v2974
        %2991 = vst [vmem:[#allocation3 + $0x148] sm:$0xf0] %v2975
        %2992 = vst [vmem:[#allocation3 + $0x150] sm:$0xf0] %v2976
        %2993 = vst [vmem:[#allocation3 + $0x158] sm:$0xf0] %v2977
        %2994 = vst [vmem:[#allocation3 + $0x160] sm:$0xf0] %v2978
        %2995 = vst [vmem:[#allocation3 + $0x168] sm:$0xf0] %v2979
        %2996 = vst [vmem:[#allocation3 + $0x170] sm:$0xf0] %v2980
        %2997 = vst.msk [vmem:[#allocation3 + $0x178] sm:$0xf0] %vm333, %v2981
        %v2998 = vld [vmem:[#allocation2] sm:$0xff]
        %v2999 = vld [vmem:[#allocation2 + $0x8] sm:$0xff]
        %v3000 = vld [vmem:[#allocation2 + $0x10] sm:$0xff]
        %v3001 = vld [vmem:[#allocation2 + $0x18] sm:$0xff]
        %v3002 = vld [vmem:[#allocation2 + $0x20] sm:$0xf]
        %v3008 = vcombine.high %v2998, %v2998
        %v3009 = vcombine.high %v2999, %v2999
        %v3010 = vcombine.high %v3000, %v3000
        %v3011 = vcombine.high %v3001, %v3001
        %3012 = vrot.lane.b32.xlu0 %v2998, 1
        %v3013 = vpop.permute.xlu0 %3012
        %3014 = vrot.lane.b32.xlu0 %v3008, 1
        %v3015 = vpop.permute.xlu0 %3014
        %3016 = vrot.lane.b32.xlu0 %v2999, 1
        %v3017 = vpop.permute.xlu0 %3016
        %3018 = vrot.lane.b32.xlu0 %v3009, 1
        %v3019 = vpop.permute.xlu0 %3018
        %3020 = vrot.lane.b32.xlu0 %v3000, 1
        %v3021 = vpop.permute.xlu0 %3020
        %3022 = vrot.lane.b32.xlu0 %v3010, 1
        %v3023 = vpop.permute.xlu0 %3022
        %3024 = vrot.lane.b32.xlu0 %v3001, 1
        %v3025 = vpop.permute.xlu0 %3024
        %3026 = vrot.lane.b32.xlu0 %v3011, 1
        %v3027 = vpop.permute.xlu0 %3026
        %3028 = vrot.lane.b32.xlu0 %v3002, 1
        %v3029 = vpop.permute.xlu0 %3028
        %v3030 = vsel %vm1053, %v3013, %v3015
        %v3031 = vsel %vm1053, %v3015, %v3017
        %v3032 = vsel %vm1053, %v3017, %v3019
        %v3033 = vsel %vm1053, %v3019, %v3021
        %v3034 = vsel %vm1053, %v3021, %v3023
        %v3035 = vsel %vm1053, %v3023, %v3025
        %v3036 = vsel %vm1053, %v3025, %v3027
        %v3037 = vsel %vm1053, %v3027, %v3029
        %3046 = vst [vmem:[#allocation3 + $0x180] sm:$0xf] %v3030
        %3047 = vst [vmem:[#allocation3 + $0x188] sm:$0xf] %v3031
        %3048 = vst [vmem:[#allocation3 + $0x190] sm:$0xf] %v3032
        %3049 = vst [vmem:[#allocation3 + $0x198] sm:$0xf] %v3033
        %3050 = vst [vmem:[#allocation3 + $0x1a0] sm:$0xf] %v3034
        %3051 = vst [vmem:[#allocation3 + $0x1a8] sm:$0xf] %v3035
        %3052 = vst [vmem:[#allocation3 + $0x1b0] sm:$0xf] %v3036
        %3053 = vst.msk [vmem:[#allocation3 + $0x1b8] sm:$0xf] %vm397, %v3037
        %v3054 = vld [vmem:[#allocation2 + $0x4] sm:$0xff]
        %v3055 = vld [vmem:[#allocation2 + $0xc] sm:$0xff]
        %v3056 = vld [vmem:[#allocation2 + $0x14] sm:$0xff]
        %v3057 = vld [vmem:[#allocation2 + $0x1c] sm:$0xff]
        %v3062 = vcombine.low %v3054, %v3054
        %v3063 = vcombine.low %v3055, %v3055
        %v3064 = vcombine.low %v3056, %v3056
        %v3065 = vcombine.low %v3057, %v3057
        %3070 = vst [vmem:[#allocation3 + $0x180] sm:$0xf0] %v3062
        %3071 = vst [vmem:[#allocation3 + $0x188] sm:$0xf0] %v3054
        %3072 = vst [vmem:[#allocation3 + $0x190] sm:$0xf0] %v3063
        %3073 = vst [vmem:[#allocation3 + $0x198] sm:$0xf0] %v3055
        %3074 = vst [vmem:[#allocation3 + $0x1a0] sm:$0xf0] %v3064
        %3075 = vst [vmem:[#allocation3 + $0x1a8] sm:$0xf0] %v3056
        %3076 = vst [vmem:[#allocation3 + $0x1b0] sm:$0xf0] %v3065
        %3077 = vst.msk [vmem:[#allocation3 + $0x1b8] sm:$0xf0] %vm333, %v3057
        %v3078 = vld [vmem:[#allocation2 + $0x4] sm:$0xff]
        %v3079 = vld [vmem:[#allocation2 + $0xc] sm:$0xff]
        %v3080 = vld [vmem:[#allocation2 + $0x14] sm:$0xff]
        %v3081 = vld [vmem:[#allocation2 + $0x1c] sm:$0xff]
        %v3086 = vcombine.high %v3078, %v3078
        %v3087 = vcombine.high %v3079, %v3079
        %v3088 = vcombine.high %v3080, %v3080
        %v3089 = vcombine.high %v3081, %v3081
        %3090 = vrot.lane.b32.xlu0 %v3078, 127
        %v3091 = vpop.permute.xlu0 %3090
        %3092 = vrot.lane.b32.xlu0 %v3086, 127
        %v3093 = vpop.permute.xlu0 %3092
        %3094 = vrot.lane.b32.xlu0 %v3079, 127
        %v3095 = vpop.permute.xlu0 %3094
        %3096 = vrot.lane.b32.xlu0 %v3087, 127
        %v3097 = vpop.permute.xlu0 %3096
        %3098 = vrot.lane.b32.xlu0 %v3080, 127
        %v3099 = vpop.permute.xlu0 %3098
        %3100 = vrot.lane.b32.xlu0 %v3088, 127
        %v3101 = vpop.permute.xlu0 %3100
        %3102 = vrot.lane.b32.xlu0 %v3081, 127
        %v3103 = vpop.permute.xlu0 %3102
        %3104 = vrot.lane.b32.xlu0 %v3089, 127
        %v3105 = vpop.permute.xlu0 %3104
        %v3106 = vsel %vm1130, %v3091, %v3093
        %v3107 = vsel %vm1130, %v3093, %v3095
        %v3108 = vsel %vm1130, %v3095, %v3097
        %v3109 = vsel %vm1130, %v3097, %v3099
        %v3110 = vsel %vm1130, %v3099, %v3101
        %v3111 = vsel %vm1130, %v3101, %v3103
        %v3112 = vsel %vm1130, %v3103, %v3105
        %3121 = vst [vmem:[#allocation3 + $0x1c0] sm:$0xf] %v3106
        %3122 = vst [vmem:[#allocation3 + $0x1c8] sm:$0xf] %v3107
        %3123 = vst [vmem:[#allocation3 + $0x1d0] sm:$0xf] %v3108
        %3124 = vst [vmem:[#allocation3 + $0x1d8] sm:$0xf] %v3109
        %3125 = vst [vmem:[#allocation3 + $0x1e0] sm:$0xf] %v3110
        %3126 = vst [vmem:[#allocation3 + $0x1e8] sm:$0xf] %v3111
        %3127 = vst [vmem:[#allocation3 + $0x1f0] sm:$0xf] %v3112
        %3128 = vst.msk [vmem:[#allocation3 + $0x1f8] sm:$0xf] %vm397, %v3105
        %v3129 = vld [vmem:[#allocation2 + $0x4] sm:$0xff]
        %v3130 = vld [vmem:[#allocation2 + $0xc] sm:$0xff]
        %v3131 = vld [vmem:[#allocation2 + $0x14] sm:$0xff]
        %v3132 = vld [vmem:[#allocation2 + $0x1c] sm:$0xff]
        %v3137 = vcombine.low %v3129, %v3129
        %v3138 = vcombine.low %v3130, %v3130
        %v3139 = vcombine.low %v3131, %v3131
        %v3140 = vcombine.low %v3132, %v3132
        %3141 = vrot.lane.b32.xlu0 %v3137, 119
        %v3142 = vpop.permute.xlu0 %3141
        %3143 = vrot.lane.b32.xlu0 %v3129, 119
        %v3144 = vpop.permute.xlu0 %3143
        %3145 = vrot.lane.b32.xlu0 %v3138, 119
        %v3146 = vpop.permute.xlu0 %3145
        %3147 = vrot.lane.b32.xlu0 %v3130, 119
        %v3148 = vpop.permute.xlu0 %3147
        %3149 = vrot.lane.b32.xlu0 %v3139, 119
        %v3150 = vpop.permute.xlu0 %3149
        %3151 = vrot.lane.b32.xlu0 %v3131, 119
        %v3152 = vpop.permute.xlu0 %3151
        %3153 = vrot.lane.b32.xlu0 %v3140, 119
        %v3154 = vpop.permute.xlu0 %3153
        %3155 = vrot.lane.b32.xlu0 %v3132, 119
        %v3156 = vpop.permute.xlu0 %3155
        %v3157 = vsel %vm1182, %v3142, %v3144
        %v3158 = vsel %vm1182, %v3144, %v3146
        %v3159 = vsel %vm1182, %v3146, %v3148
        %v3160 = vsel %vm1182, %v3148, %v3150
        %v3161 = vsel %vm1182, %v3150, %v3152
        %v3162 = vsel %vm1182, %v3152, %v3154
        %v3163 = vsel %vm1182, %v3154, %v3156
        %3172 = vst [vmem:[#allocation3 + $0x1c0] sm:$0xf0] %v3157
        %3173 = vst [vmem:[#allocation3 + $0x1c8] sm:$0xf0] %v3158
        %3174 = vst [vmem:[#allocation3 + $0x1d0] sm:$0xf0] %v3159
        %3175 = vst [vmem:[#allocation3 + $0x1d8] sm:$0xf0] %v3160
        %3176 = vst [vmem:[#allocation3 + $0x1e0] sm:$0xf0] %v3161
        %3177 = vst [vmem:[#allocation3 + $0x1e8] sm:$0xf0] %v3162
        %3178 = vst [vmem:[#allocation3 + $0x1f0] sm:$0xf0] %v3163
        %3179 = vst.msk [vmem:[#allocation3 + $0x1f8] sm:$0xf0] %vm333, %v3156
        %v3180 = vld [vmem:[#allocation2 + $0x4] sm:$0xff]
        %v3181 = vld [vmem:[#allocation2 + $0xc] sm:$0xff]
        %v3182 = vld [vmem:[#allocation2 + $0x14] sm:$0xff]
        %v3183 = vld [vmem:[#allocation2 + $0x1c] sm:$0xff]
        %v3188 = vcombine.high %v3180, %v3180
        %v3189 = vcombine.high %v3181, %v3181
        %v3190 = vcombine.high %v3182, %v3182
        %v3191 = vcombine.high %v3183, %v3183
        %3192 = vrot.lane.b32.xlu0 %v3180, 118
        %v3193 = vpop.permute.xlu0 %3192
        %3194 = vrot.lane.b32.xlu0 %v3188, 118
        %v3195 = vpop.permute.xlu0 %3194
        %3196 = vrot.lane.b32.xlu0 %v3181, 118
        %v3197 = vpop.permute.xlu0 %3196
        %3198 = vrot.lane.b32.xlu0 %v3189, 118
        %v3199 = vpop.permute.xlu0 %3198
        %3200 = vrot.lane.b32.xlu0 %v3182, 118
        %v3201 = vpop.permute.xlu0 %3200
        %3202 = vrot.lane.b32.xlu0 %v3190, 118
        %v3203 = vpop.permute.xlu0 %3202
        %3204 = vrot.lane.b32.xlu0 %v3183, 118
        %v3205 = vpop.permute.xlu0 %3204
        %3206 = vrot.lane.b32.xlu0 %v3191, 118
        %v3207 = vpop.permute.xlu0 %3206
        %v3208 = vsel %vm1234, %v3193, %v3195
        %v3209 = vsel %vm1234, %v3195, %v3197
        %v3210 = vsel %vm1234, %v3197, %v3199
        %v3211 = vsel %vm1234, %v3199, %v3201
        %v3212 = vsel %vm1234, %v3201, %v3203
        %v3213 = vsel %vm1234, %v3203, %v3205
        %v3214 = vsel %vm1234, %v3205, %v3207
        %3223 = vst [vmem:[#allocation3 + $0x200] sm:$0xf] %v3208
        %3224 = vst [vmem:[#allocation3 + $0x208] sm:$0xf] %v3209
        %3225 = vst [vmem:[#allocation3 + $0x210] sm:$0xf] %v3210
        %3226 = vst [vmem:[#allocation3 + $0x218] sm:$0xf] %v3211
        %3227 = vst [vmem:[#allocation3 + $0x220] sm:$0xf] %v3212
        %3228 = vst [vmem:[#allocation3 + $0x228] sm:$0xf] %v3213
        %3229 = vst [vmem:[#allocation3 + $0x230] sm:$0xf] %v3214
        %3230 = vst.msk [vmem:[#allocation3 + $0x238] sm:$0xf] %vm397, %v3207
        %v3231 = vld [vmem:[#allocation2 + $0x4] sm:$0xff]
        %v3232 = vld [vmem:[#allocation2 + $0xc] sm:$0xff]
        %v3233 = vld [vmem:[#allocation2 + $0x14] sm:$0xff]
        %v3234 = vld [vmem:[#allocation2 + $0x1c] sm:$0xff]
        %v3239 = vcombine.low %v3231, %v3231
        %v3240 = vcombine.low %v3232, %v3232
        %v3241 = vcombine.low %v3233, %v3233
        %v3242 = vcombine.low %v3234, %v3234
        %3243 = vrot.lane.b32.xlu0 %v3239, 117
        %v3244 = vpop.permute.xlu0 %3243
        %3245 = vrot.lane.b32.xlu0 %v3231, 117
        %v3246 = vpop.permute.xlu0 %3245
        %3247 = vrot.lane.b32.xlu0 %v3240, 117
        %v3248 = vpop.permute.xlu0 %3247
        %3249 = vrot.lane.b32.xlu0 %v3232, 117
        %v3250 = vpop.permute.xlu0 %3249
        %3251 = vrot.lane.b32.xlu0 %v3241, 117
        %v3252 = vpop.permute.xlu0 %3251
        %3253 = vrot.lane.b32.xlu0 %v3233, 117
        %v3254 = vpop.permute.xlu0 %3253
        %3255 = vrot.lane.b32.xlu0 %v3242, 117
        %v3256 = vpop.permute.xlu0 %3255
        %3257 = vrot.lane.b32.xlu0 %v3234, 117
        %v3258 = vpop.permute.xlu0 %3257
        %v3259 = vsel %vm1286, %v3244, %v3246
        %v3260 = vsel %vm1286, %v3246, %v3248
        %v3261 = vsel %vm1286, %v3248, %v3250
        %v3262 = vsel %vm1286, %v3250, %v3252
        %v3263 = vsel %vm1286, %v3252, %v3254
        %v3264 = vsel %vm1286, %v3254, %v3256
        %v3265 = vsel %vm1286, %v3256, %v3258
        %3274 = vst [vmem:[#allocation3 + $0x200] sm:$0xf0] %v3259
        %3275 = vst [vmem:[#allocation3 + $0x208] sm:$0xf0] %v3260
        %3276 = vst [vmem:[#allocation3 + $0x210] sm:$0xf0] %v3261
        %3277 = vst [vmem:[#allocation3 + $0x218] sm:$0xf0] %v3262
        %3278 = vst [vmem:[#allocation3 + $0x220] sm:$0xf0] %v3263
        %3279 = vst [vmem:[#allocation3 + $0x228] sm:$0xf0] %v3264
        %3280 = vst [vmem:[#allocation3 + $0x230] sm:$0xf0] %v3265
        %3281 = vst.msk [vmem:[#allocation3 + $0x238] sm:$0xf0] %vm333, %v3258
        %v3282 = vld [vmem:[#allocation2 + $0x4] sm:$0xff]
        %v3283 = vld [vmem:[#allocation2 + $0xc] sm:$0xff]
        %v3284 = vld [vmem:[#allocation2 + $0x14] sm:$0xff]
        %v3285 = vld [vmem:[#allocation2 + $0x1c] sm:$0xff]
        %v3286 = vld [vmem:[#allocation2 + $0x24] sm:$0xf]
        %v3292 = vcombine.high %v3282, %v3282
        %v3293 = vcombine.high %v3283, %v3283
        %v3294 = vcombine.high %v3284, %v3284
        %v3295 = vcombine.high %v3285, %v3285
        %3296 = vrot.lane.b32.xlu0 %v3282, 39
        %v3297 = vpop.permute.xlu0 %3296
        %3298 = vrot.lane.b32.xlu0 %v3292, 39
        %v3299 = vpop.permute.xlu0 %3298
        %3300 = vrot.lane.b32.xlu0 %v3283, 39
        %v3301 = vpop.permute.xlu0 %3300
        %3302 = vrot.lane.b32.xlu0 %v3293, 39
        %v3303 = vpop.permute.xlu0 %3302
        %3304 = vrot.lane.b32.xlu0 %v3284, 39
        %v3305 = vpop.permute.xlu0 %3304
        %3306 = vrot.lane.b32.xlu0 %v3294, 39
        %v3307 = vpop.permute.xlu0 %3306
        %3308 = vrot.lane.b32.xlu0 %v3285, 39
        %v3309 = vpop.permute.xlu0 %3308
        %3310 = vrot.lane.b32.xlu0 %v3295, 39
        %v3311 = vpop.permute.xlu0 %3310
        %3312 = vrot.lane.b32.xlu0 %v3286, 39
        %v3313 = vpop.permute.xlu0 %3312
        %v3314 = vsel %vm1342, %v3297, %v3299
        %v3315 = vsel %vm1342, %v3299, %v3301
        %v3316 = vsel %vm1342, %v3301, %v3303
        %v3317 = vsel %vm1342, %v3303, %v3305
        %v3318 = vsel %vm1342, %v3305, %v3307
        %v3319 = vsel %vm1342, %v3307, %v3309
        %v3320 = vsel %vm1342, %v3309, %v3311
        %v3321 = vsel %vm1342, %v3311, %v3313
        %3330 = vst [vmem:[#allocation3 + $0x240] sm:$0xf] %v3314
        %3331 = vst [vmem:[#allocation3 + $0x248] sm:$0xf] %v3315
        %3332 = vst [vmem:[#allocation3 + $0x250] sm:$0xf] %v3316
        %3333 = vst [vmem:[#allocation3 + $0x258] sm:$0xf] %v3317
        %3334 = vst [vmem:[#allocation3 + $0x260] sm:$0xf] %v3318
        %3335 = vst [vmem:[#allocation3 + $0x268] sm:$0xf] %v3319
        %3336 = vst [vmem:[#allocation3 + $0x270] sm:$0xf] %v3320
        %3337 = vst.msk [vmem:[#allocation3 + $0x278] sm:$0xf] %vm397, %v3321
        %v3338 = vld [vmem:[#allocation2 + $0x4] sm:$0xff]
        %v3339 = vld [vmem:[#allocation2 + $0xc] sm:$0xff]
        %v3340 = vld [vmem:[#allocation2 + $0x14] sm:$0xff]
        %v3341 = vld [vmem:[#allocation2 + $0x1c] sm:$0xff]
        %v3342 = vld [vmem:[#allocation2 + $0x24] sm:$0xf]
        %v3348 = vcombine.low %v3338, %v3338
        %v3349 = vcombine.low %v3339, %v3339
        %v3350 = vcombine.low %v3340, %v3340
        %v3351 = vcombine.low %v3341, %v3341
        %v3352 = vcombine.low %v3342, %v3342
        %3353 = vrot.lane.b32.xlu0 %v3348, 38
        %v3354 = vpop.permute.xlu0 %3353
        %3355 = vrot.lane.b32.xlu0 %v3338, 38
        %v3356 = vpop.permute.xlu0 %3355
        %3357 = vrot.lane.b32.xlu0 %v3349, 38
        %v3358 = vpop.permute.xlu0 %3357
        %3359 = vrot.lane.b32.xlu0 %v3339, 38
        %v3360 = vpop.permute.xlu0 %3359
        %3361 = vrot.lane.b32.xlu0 %v3350, 38
        %v3362 = vpop.permute.xlu0 %3361
        %3363 = vrot.lane.b32.xlu0 %v3340, 38
        %v3364 = vpop.permute.xlu0 %3363
        %3365 = vrot.lane.b32.xlu0 %v3351, 38
        %v3366 = vpop.permute.xlu0 %3365
        %3367 = vrot.lane.b32.xlu0 %v3341, 38
        %v3368 = vpop.permute.xlu0 %3367
        %3369 = vrot.lane.b32.xlu0 %v3352, 38
        %v3370 = vpop.permute.xlu0 %3369
        %v3371 = vsel %vm1400, %v3354, %v3356
        %v3372 = vsel %vm1400, %v3356, %v3358
        %v3373 = vsel %vm1400, %v3358, %v3360
        %v3374 = vsel %vm1400, %v3360, %v3362
        %v3375 = vsel %vm1400, %v3362, %v3364
        %v3376 = vsel %vm1400, %v3364, %v3366
        %v3377 = vsel %vm1400, %v3366, %v3368
        %v3378 = vsel %vm1400, %v3368, %v3370
        %3387 = vst [vmem:[#allocation3 + $0x240] sm:$0xf0] %v3371
        %3388 = vst [vmem:[#allocation3 + $0x248] sm:$0xf0] %v3372
        %3389 = vst [vmem:[#allocation3 + $0x250] sm:$0xf0] %v3373
        %3390 = vst [vmem:[#allocation3 + $0x258] sm:$0xf0] %v3374
        %3391 = vst [vmem:[#allocation3 + $0x260] sm:$0xf0] %v3375
        %3392 = vst [vmem:[#allocation3 + $0x268] sm:$0xf0] %v3376
        %3393 = vst [vmem:[#allocation3 + $0x270] sm:$0xf0] %v3377
        %3394 = vst.msk [vmem:[#allocation3 + $0x278] sm:$0xf0] %vm333, %v3378
        %v3395 = vld [vmem:[#allocation2 + $0x4] sm:$0xff]
        %v3396 = vld [vmem:[#allocation2 + $0xc] sm:$0xff]
        %v3397 = vld [vmem:[#allocation2 + $0x14] sm:$0xff]
        %v3398 = vld [vmem:[#allocation2 + $0x1c] sm:$0xff]
        %v3399 = vld [vmem:[#allocation2 + $0x24] sm:$0xf]
        %v3405 = vcombine.high %v3395, %v3395
        %v3406 = vcombine.high %v3396, %v3396
        %v3407 = vcombine.high %v3397, %v3397
        %v3408 = vcombine.high %v3398, %v3398
        %3409 = vrot.lane.b32.xlu0 %v3395, 37
        %v3410 = vpop.permute.xlu0 %3409
        %3411 = vrot.lane.b32.xlu0 %v3405, 37
        %v3412 = vpop.permute.xlu0 %3411
        %3413 = vrot.lane.b32.xlu0 %v3396, 37
        %v3414 = vpop.permute.xlu0 %3413
        %3415 = vrot.lane.b32.xlu0 %v3406, 37
        %v3416 = vpop.permute.xlu0 %3415
        %3417 = vrot.lane.b32.xlu0 %v3397, 37
        %v3418 = vpop.permute.xlu0 %3417
        %3419 = vrot.lane.b32.xlu0 %v3407, 37
        %v3420 = vpop.permute.xlu0 %3419
        %3421 = vrot.lane.b32.xlu0 %v3398, 37
        %v3422 = vpop.permute.xlu0 %3421
        %3423 = vrot.lane.b32.xlu0 %v3408, 37
        %v3424 = vpop.permute.xlu0 %3423
        %3425 = vrot.lane.b32.xlu0 %v3399, 37
        %v3426 = vpop.permute.xlu0 %3425
        %v3427 = vsel %vm1457, %v3410, %v3412
        %v3428 = vsel %vm1457, %v3412, %v3414
        %v3429 = vsel %vm1457, %v3414, %v3416
        %v3430 = vsel %vm1457, %v3416, %v3418
        %v3431 = vsel %vm1457, %v3418, %v3420
        %v3432 = vsel %vm1457, %v3420, %v3422
        %v3433 = vsel %vm1457, %v3422, %v3424
        %v3434 = vsel %vm1457, %v3424, %v3426
        %3443 = vst [vmem:[#allocation3 + $0x280] sm:$0xf] %v3427
        %3444 = vst [vmem:[#allocation3 + $0x288] sm:$0xf] %v3428
        %3445 = vst [vmem:[#allocation3 + $0x290] sm:$0xf] %v3429
        %3446 = vst [vmem:[#allocation3 + $0x298] sm:$0xf] %v3430
        %3447 = vst [vmem:[#allocation3 + $0x2a0] sm:$0xf] %v3431
        %3448 = vst [vmem:[#allocation3 + $0x2a8] sm:$0xf] %v3432
        %3449 = vst [vmem:[#allocation3 + $0x2b0] sm:$0xf] %v3433
        %3450 = vst.msk [vmem:[#allocation3 + $0x2b8] sm:$0xf] %vm397, %v3434
        %v3451 = vld [vmem:[#allocation2 + $0x4] sm:$0xff]
        %v3452 = vld [vmem:[#allocation2 + $0xc] sm:$0xff]
        %v3453 = vld [vmem:[#allocation2 + $0x14] sm:$0xff]
        %v3454 = vld [vmem:[#allocation2 + $0x1c] sm:$0xff]
        %v3455 = vld [vmem:[#allocation2 + $0x24] sm:$0xf]
        %v3461 = vcombine.low %v3451, %v3451
        %v3462 = vcombine.low %v3452, %v3452
        %v3463 = vcombine.low %v3453, %v3453
        %v3464 = vcombine.low %v3454, %v3454
        %v3465 = vcombine.low %v3455, %v3455
        %3466 = vrot.lane.b32.xlu0 %v3461, 29
        %v3467 = vpop.permute.xlu0 %3466
        %3468 = vrot.lane.b32.xlu0 %v3451, 29
        %v3469 = vpop.permute.xlu0 %3468
        %3470 = vrot.lane.b32.xlu0 %v3462, 29
        %v3471 = vpop.permute.xlu0 %3470
        %3472 = vrot.lane.b32.xlu0 %v3452, 29
        %v3473 = vpop.permute.xlu0 %3472
        %3474 = vrot.lane.b32.xlu0 %v3463, 29
        %v3475 = vpop.permute.xlu0 %3474
        %3476 = vrot.lane.b32.xlu0 %v3453, 29
        %v3477 = vpop.permute.xlu0 %3476
        %3478 = vrot.lane.b32.xlu0 %v3464, 29
        %v3479 = vpop.permute.xlu0 %3478
        %3480 = vrot.lane.b32.xlu0 %v3454, 29
        %v3481 = vpop.permute.xlu0 %3480
        %3482 = vrot.lane.b32.xlu0 %v3465, 29
        %v3483 = vpop.permute.xlu0 %3482
        %v3484 = vsel %vm1515, %v3467, %v3469
        %v3485 = vsel %vm1515, %v3469, %v3471
        %v3486 = vsel %vm1515, %v3471, %v3473
        %v3487 = vsel %vm1515, %v3473, %v3475
        %v3488 = vsel %vm1515, %v3475, %v3477
        %v3489 = vsel %vm1515, %v3477, %v3479
        %v3490 = vsel %vm1515, %v3479, %v3481
        %v3491 = vsel %vm1515, %v3481, %v3483
        %3500 = vst [vmem:[#allocation3 + $0x280] sm:$0xf0] %v3484
        %3501 = vst [vmem:[#allocation3 + $0x288] sm:$0xf0] %v3485
        %3502 = vst [vmem:[#allocation3 + $0x290] sm:$0xf0] %v3486
        %3503 = vst [vmem:[#allocation3 + $0x298] sm:$0xf0] %v3487
        %3504 = vst [vmem:[#allocation3 + $0x2a0] sm:$0xf0] %v3488
        %3505 = vst [vmem:[#allocation3 + $0x2a8] sm:$0xf0] %v3489
        %3506 = vst [vmem:[#allocation3 + $0x2b0] sm:$0xf0] %v3490
        %3507 = vst.msk [vmem:[#allocation3 + $0x2b8] sm:$0xf0] %vm333, %v3491
        %v3508 = vld [vmem:[#allocation2 + $0x4] sm:$0xff]
        %v3509 = vld [vmem:[#allocation2 + $0xc] sm:$0xff]
        %v3510 = vld [vmem:[#allocation2 + $0x14] sm:$0xff]
        %v3511 = vld [vmem:[#allocation2 + $0x1c] sm:$0xff]
        %v3512 = vld [vmem:[#allocation2 + $0x24] sm:$0xf]
        %v3518 = vcombine.high %v3508, %v3508
        %v3519 = vcombine.high %v3509, %v3509
        %v3520 = vcombine.high %v3510, %v3510
        %v3521 = vcombine.high %v3511, %v3511
        %3522 = vrot.lane.b32.xlu0 %v3508, 28
        %v3523 = vpop.permute.xlu0 %3522
        %3524 = vrot.lane.b32.xlu0 %v3518, 28
        %v3525 = vpop.permute.xlu0 %3524
        %3526 = vrot.lane.b32.xlu0 %v3509, 28
        %v3527 = vpop.permute.xlu0 %3526
        %3528 = vrot.lane.b32.xlu0 %v3519, 28
        %v3529 = vpop.permute.xlu0 %3528
        %3530 = vrot.lane.b32.xlu0 %v3510, 28
        %v3531 = vpop.permute.xlu0 %3530
        %3532 = vrot.lane.b32.xlu0 %v3520, 28
        %v3533 = vpop.permute.xlu0 %3532
        %3534 = vrot.lane.b32.xlu0 %v3511, 28
        %v3535 = vpop.permute.xlu0 %3534
        %3536 = vrot.lane.b32.xlu0 %v3521, 28
        %v3537 = vpop.permute.xlu0 %3536
        %3538 = vrot.lane.b32.xlu0 %v3512, 28
        %v3539 = vpop.permute.xlu0 %3538
        %v3540 = vsel %vm1572, %v3523, %v3525
        %v3541 = vsel %vm1572, %v3525, %v3527
        %v3542 = vsel %vm1572, %v3527, %v3529
        %v3543 = vsel %vm1572, %v3529, %v3531
        %v3544 = vsel %vm1572, %v3531, %v3533
        %v3545 = vsel %vm1572, %v3533, %v3535
        %v3546 = vsel %vm1572, %v3535, %v3537
        %v3547 = vsel %vm1572, %v3537, %v3539
        %3556 = vst [vmem:[#allocation3 + $0x2c0] sm:$0xf] %v3540
        %3557 = vst [vmem:[#allocation3 + $0x2c8] sm:$0xf] %v3541
        %3558 = vst [vmem:[#allocation3 + $0x2d0] sm:$0xf] %v3542
        %3559 = vst [vmem:[#allocation3 + $0x2d8] sm:$0xf] %v3543
        %3560 = vst [vmem:[#allocation3 + $0x2e0] sm:$0xf] %v3544
        %3561 = vst [vmem:[#allocation3 + $0x2e8] sm:$0xf] %v3545
        %3562 = vst [vmem:[#allocation3 + $0x2f0] sm:$0xf] %v3546
        %3563 = vst.msk [vmem:[#allocation3 + $0x2f8] sm:$0xf] %vm397, %v3547
        %v3564 = vld [vmem:[#allocation2 + $0x4] sm:$0xff]
        %v3565 = vld [vmem:[#allocation2 + $0xc] sm:$0xff]
        %v3566 = vld [vmem:[#allocation2 + $0x14] sm:$0xff]
        %v3567 = vld [vmem:[#allocation2 + $0x1c] sm:$0xff]
        %v3568 = vld [vmem:[#allocation2 + $0x24] sm:$0xf]
        %v3574 = vcombine.low %v3564, %v3564
        %v3575 = vcombine.low %v3565, %v3565
        %v3576 = vcombine.low %v3566, %v3566
        %v3577 = vcombine.low %v3567, %v3567
        %v3578 = vcombine.low %v3568, %v3568
        %3579 = vrot.lane.b32.xlu0 %v3574, 27
        %v3580 = vpop.permute.xlu0 %3579
        %3581 = vrot.lane.b32.xlu0 %v3564, 27
        %v3582 = vpop.permute.xlu0 %3581
        %3583 = vrot.lane.b32.xlu0 %v3575, 27
        %v3584 = vpop.permute.xlu0 %3583
        %3585 = vrot.lane.b32.xlu0 %v3565, 27
        %v3586 = vpop.permute.xlu0 %3585
        %3587 = vrot.lane.b32.xlu0 %v3576, 27
        %v3588 = vpop.permute.xlu0 %3587
        %3589 = vrot.lane.b32.xlu0 %v3566, 27
        %v3590 = vpop.permute.xlu0 %3589
        %3591 = vrot.lane.b32.xlu0 %v3577, 27
        %v3592 = vpop.permute.xlu0 %3591
        %3593 = vrot.lane.b32.xlu0 %v3567, 27
        %v3594 = vpop.permute.xlu0 %3593
        %3595 = vrot.lane.b32.xlu0 %v3578, 27
        %v3596 = vpop.permute.xlu0 %3595
        %v3597 = vsel %vm1630, %v3580, %v3582
        %v3598 = vsel %vm1630, %v3582, %v3584
        %v3599 = vsel %vm1630, %v3584, %v3586
        %v3600 = vsel %vm1630, %v3586, %v3588
        %v3601 = vsel %vm1630, %v3588, %v3590
        %v3602 = vsel %vm1630, %v3590, %v3592
        %v3603 = vsel %vm1630, %v3592, %v3594
        %v3604 = vsel %vm1630, %v3594, %v3596
        %3613 = vst [vmem:[#allocation3 + $0x2c0] sm:$0xf0] %v3597
        %3614 = vst [vmem:[#allocation3 + $0x2c8] sm:$0xf0] %v3598
        %3615 = vst [vmem:[#allocation3 + $0x2d0] sm:$0xf0] %v3599
        %3616 = vst [vmem:[#allocation3 + $0x2d8] sm:$0xf0] %v3600
        %3617 = vst [vmem:[#allocation3 + $0x2e0] sm:$0xf0] %v3601
        %3618 = vst [vmem:[#allocation3 + $0x2e8] sm:$0xf0] %v3602
        %3619 = vst [vmem:[#allocation3 + $0x2f0] sm:$0xf0] %v3603
        %3620 = vst.msk [vmem:[#allocation3 + $0x2f8] sm:$0xf0] %vm333, %v3604
        %v3621 = vld [vmem:[#allocation2 + $0x4] sm:$0xff]
        %v3622 = vld [vmem:[#allocation2 + $0xc] sm:$0xff]
        %v3623 = vld [vmem:[#allocation2 + $0x14] sm:$0xff]
        %v3624 = vld [vmem:[#allocation2 + $0x1c] sm:$0xff]
        %v3625 = vld [vmem:[#allocation2 + $0x24] sm:$0xf]
        %v3631 = vcombine.high %v3621, %v3621
        %v3632 = vcombine.high %v3622, %v3622
        %v3633 = vcombine.high %v3623, %v3623
        %v3634 = vcombine.high %v3624, %v3624
        %3635 = vrot.lane.b32.xlu0 %v3621, 19
        %v3636 = vpop.permute.xlu0 %3635
        %3637 = vrot.lane.b32.xlu0 %v3631, 19
        %v3638 = vpop.permute.xlu0 %3637
        %3639 = vrot.lane.b32.xlu0 %v3622, 19
        %v3640 = vpop.permute.xlu0 %3639
        %3641 = vrot.lane.b32.xlu0 %v3632, 19
        %v3642 = vpop.permute.xlu0 %3641
        %3643 = vrot.lane.b32.xlu0 %v3623, 19
        %v3644 = vpop.permute.xlu0 %3643
        %3645 = vrot.lane.b32.xlu0 %v3633, 19
        %v3646 = vpop.permute.xlu0 %3645
        %3647 = vrot.lane.b32.xlu0 %v3624, 19
        %v3648 = vpop.permute.xlu0 %3647
        %3649 = vrot.lane.b32.xlu0 %v3634, 19
        %v3650 = vpop.permute.xlu0 %3649
        %3651 = vrot.lane.b32.xlu0 %v3625, 19
        %v3652 = vpop.permute.xlu0 %3651
        %v3653 = vsel %vm1687, %v3636, %v3638
        %v3654 = vsel %vm1687, %v3638, %v3640
        %v3655 = vsel %vm1687, %v3640, %v3642
        %v3656 = vsel %vm1687, %v3642, %v3644
        %v3657 = vsel %vm1687, %v3644, %v3646
        %v3658 = vsel %vm1687, %v3646, %v3648
        %v3659 = vsel %vm1687, %v3648, %v3650
        %v3660 = vsel %vm1687, %v3650, %v3652
        %3669 = vst [vmem:[#allocation3 + $0x300] sm:$0xf] %v3653
        %3670 = vst [vmem:[#allocation3 + $0x308] sm:$0xf] %v3654
        %3671 = vst [vmem:[#allocation3 + $0x310] sm:$0xf] %v3655
        %3672 = vst [vmem:[#allocation3 + $0x318] sm:$0xf] %v3656
        %3673 = vst [vmem:[#allocation3 + $0x320] sm:$0xf] %v3657
        %3674 = vst [vmem:[#allocation3 + $0x328] sm:$0xf] %v3658
        %3675 = vst [vmem:[#allocation3 + $0x330] sm:$0xf] %v3659
        %3676 = vst.msk [vmem:[#allocation3 + $0x338] sm:$0xf] %vm397, %v3660
        %v3677 = vld [vmem:[#allocation2 + $0x4] sm:$0xff]
        %v3678 = vld [vmem:[#allocation2 + $0xc] sm:$0xff]
        %v3679 = vld [vmem:[#allocation2 + $0x14] sm:$0xff]
        %v3680 = vld [vmem:[#allocation2 + $0x1c] sm:$0xff]
        %v3681 = vld [vmem:[#allocation2 + $0x24] sm:$0xf]
        %v3687 = vcombine.low %v3677, %v3677
        %v3688 = vcombine.low %v3678, %v3678
        %v3689 = vcombine.low %v3679, %v3679
        %v3690 = vcombine.low %v3680, %v3680
        %v3691 = vcombine.low %v3681, %v3681
        %3692 = vrot.lane.b32.xlu0 %v3687, 18
        %v3693 = vpop.permute.xlu0 %3692
        %3694 = vrot.lane.b32.xlu0 %v3677, 18
        %v3695 = vpop.permute.xlu0 %3694
        %3696 = vrot.lane.b32.xlu0 %v3688, 18
        %v3697 = vpop.permute.xlu0 %3696
        %3698 = vrot.lane.b32.xlu0 %v3678, 18
        %v3699 = vpop.permute.xlu0 %3698
        %3700 = vrot.lane.b32.xlu0 %v3689, 18
        %v3701 = vpop.permute.xlu0 %3700
        %3702 = vrot.lane.b32.xlu0 %v3679, 18
        %v3703 = vpop.permute.xlu0 %3702
        %3704 = vrot.lane.b32.xlu0 %v3690, 18
        %v3705 = vpop.permute.xlu0 %3704
        %3706 = vrot.lane.b32.xlu0 %v3680, 18
        %v3707 = vpop.permute.xlu0 %3706
        %3708 = vrot.lane.b32.xlu0 %v3691, 18
        %v3709 = vpop.permute.xlu0 %3708
        %v3710 = vsel %vm1745, %v3693, %v3695
        %v3711 = vsel %vm1745, %v3695, %v3697
        %v3712 = vsel %vm1745, %v3697, %v3699
        %v3713 = vsel %vm1745, %v3699, %v3701
        %v3714 = vsel %vm1745, %v3701, %v3703
        %v3715 = vsel %vm1745, %v3703, %v3705
        %v3716 = vsel %vm1745, %v3705, %v3707
        %v3717 = vsel %vm1745, %v3707, %v3709
        %3726 = vst [vmem:[#allocation3 + $0x300] sm:$0xf0] %v3710
        %3727 = vst [vmem:[#allocation3 + $0x308] sm:$0xf0] %v3711
        %3728 = vst [vmem:[#allocation3 + $0x310] sm:$0xf0] %v3712
        %3729 = vst [vmem:[#allocation3 + $0x318] sm:$0xf0] %v3713
        %3730 = vst [vmem:[#allocation3 + $0x320] sm:$0xf0] %v3714
        %3731 = vst [vmem:[#allocation3 + $0x328] sm:$0xf0] %v3715
        %3732 = vst [vmem:[#allocation3 + $0x330] sm:$0xf0] %v3716
        %3733 = vst.msk [vmem:[#allocation3 + $0x338] sm:$0xf0] %vm333, %v3717
        %v3734 = vld [vmem:[#allocation2 + $0x4] sm:$0xff]
        %v3735 = vld [vmem:[#allocation2 + $0xc] sm:$0xff]
        %v3736 = vld [vmem:[#allocation2 + $0x14] sm:$0xff]
        %v3737 = vld [vmem:[#allocation2 + $0x1c] sm:$0xff]
        %v3738 = vld [vmem:[#allocation2 + $0x24] sm:$0xf]
        %v3744 = vcombine.high %v3734, %v3734
        %v3745 = vcombine.high %v3735, %v3735
        %v3746 = vcombine.high %v3736, %v3736
        %v3747 = vcombine.high %v3737, %v3737
        %3748 = vrot.lane.b32.xlu0 %v3734, 17
        %v3749 = vpop.permute.xlu0 %3748
        %3750 = vrot.lane.b32.xlu0 %v3744, 17
        %v3751 = vpop.permute.xlu0 %3750
        %3752 = vrot.lane.b32.xlu0 %v3735, 17
        %v3753 = vpop.permute.xlu0 %3752
        %3754 = vrot.lane.b32.xlu0 %v3745, 17
        %v3755 = vpop.permute.xlu0 %3754
        %3756 = vrot.lane.b32.xlu0 %v3736, 17
        %v3757 = vpop.permute.xlu0 %3756
        %3758 = vrot.lane.b32.xlu0 %v3746, 17
        %v3759 = vpop.permute.xlu0 %3758
        %3760 = vrot.lane.b32.xlu0 %v3737, 17
        %v3761 = vpop.permute.xlu0 %3760
        %3762 = vrot.lane.b32.xlu0 %v3747, 17
        %v3763 = vpop.permute.xlu0 %3762
        %3764 = vrot.lane.b32.xlu0 %v3738, 17
        %v3765 = vpop.permute.xlu0 %3764
        %v3766 = vsel %vm1802, %v3749, %v3751
        %v3767 = vsel %vm1802, %v3751, %v3753
        %v3768 = vsel %vm1802, %v3753, %v3755
        %v3769 = vsel %vm1802, %v3755, %v3757
        %v3770 = vsel %vm1802, %v3757, %v3759
        %v3771 = vsel %vm1802, %v3759, %v3761
        %v3772 = vsel %vm1802, %v3761, %v3763
        %v3773 = vsel %vm1802, %v3763, %v3765
        %3782 = vst [vmem:[#allocation3 + $0x340] sm:$0xf] %v3766
        %3783 = vst [vmem:[#allocation3 + $0x348] sm:$0xf] %v3767
        %3784 = vst [vmem:[#allocation3 + $0x350] sm:$0xf] %v3768
        %3785 = vst [vmem:[#allocation3 + $0x358] sm:$0xf] %v3769
        %3786 = vst [vmem:[#allocation3 + $0x360] sm:$0xf] %v3770
        %3787 = vst [vmem:[#allocation3 + $0x368] sm:$0xf] %v3771
        %3788 = vst [vmem:[#allocation3 + $0x370] sm:$0xf] %v3772
        %3789 = vst.msk [vmem:[#allocation3 + $0x378] sm:$0xf] %vm397, %v3773
        %v3790 = vld [vmem:[%s3] sm:$0xf]
        %v3791 = vld [vmem:[#allocation3] sm:$0xff]
        %v3792 = vld [vmem:[#allocation3 + $0x8] sm:$0xff]
        %v3793 = vld [vmem:[#allocation3 + $0x10] sm:$0xff]
        %v3794 = vld [vmem:[#allocation3 + $0x18] sm:$0xff]
        %v3795 = vld [vmem:[#allocation3 + $0x20] sm:$0xff]
        %v3796 = vld [vmem:[#allocation3 + $0x28] sm:$0xff]
        %v3797 = vld [vmem:[#allocation3 + $0x30] sm:$0xff]
        %v3798 = vld [vmem:[#allocation3 + $0x38] sm:$0xff]
        %v3799 = vld [vmem:[#allocation3 + $0x40] sm:$0xff]
        %v3800 = vld [vmem:[#allocation3 + $0x48] sm:$0xff]
        %v3801 = vld [vmem:[#allocation3 + $0x50] sm:$0xff]
        %v3802 = vld [vmem:[#allocation3 + $0x58] sm:$0xff]
        %v3803 = vld [vmem:[#allocation3 + $0x60] sm:$0xff]
        %v3804 = vld [vmem:[#allocation3 + $0x68] sm:$0xff]
        %v3805 = vld [vmem:[#allocation3 + $0x70] sm:$0xff]
        %v3806 = vld [vmem:[#allocation3 + $0x78] sm:$0xff]
        %v3807 = vld [vmem:[#allocation3 + $0x80] sm:$0xff]
        %v3808 = vld [vmem:[#allocation3 + $0x88] sm:$0xff]
        %v3809 = vld [vmem:[#allocation3 + $0x90] sm:$0xff]
        %v3810 = vld [vmem:[#allocation3 + $0x98] sm:$0xff]
        %v3811 = vld [vmem:[#allocation3 + $0xa0] sm:$0xff]
        %v3812 = vld [vmem:[#allocation3 + $0xa8] sm:$0xff]
        %v3813 = vld [vmem:[#allocation3 + $0xb0] sm:$0xff]
        %v3814 = vld [vmem:[#allocation3 + $0xb8] sm:$0xff]
        %v3815 = vld [vmem:[#allocation3 + $0xc0] sm:$0xff]
        %v3816 = vld [vmem:[#allocation3 + $0xc8] sm:$0xff]
        %v3817 = vld [vmem:[#allocation3 + $0xd0] sm:$0xff]
        %v3818 = vld [vmem:[#allocation3 + $0xd8] sm:$0xff]
        %v3819 = vld [vmem:[#allocation3 + $0xe0] sm:$0xff]
        %v3820 = vld [vmem:[#allocation3 + $0xe8] sm:$0xff]
        %v3821 = vld [vmem:[#allocation3 + $0xf0] sm:$0xff]
        %v3822 = vld [vmem:[#allocation3 + $0xf8] sm:$0xff]
        %v3823 = vld [vmem:[#allocation3 + $0x100] sm:$0xff]
        %v3824 = vld [vmem:[#allocation3 + $0x108] sm:$0xff]
        %v3825 = vld [vmem:[#allocation3 + $0x110] sm:$0xff]
        %v3826 = vld [vmem:[#allocation3 + $0x118] sm:$0xff]
        %v3827 = vld [vmem:[#allocation3 + $0x120] sm:$0xff]
        %v3828 = vld [vmem:[#allocation3 + $0x128] sm:$0xff]
        %v3829 = vld [vmem:[#allocation3 + $0x130] sm:$0xff]
        %v3830 = vld [vmem:[#allocation3 + $0x138] sm:$0xff]
        %v3831 = vld [vmem:[#allocation3 + $0x140] sm:$0xff]
        %v3832 = vld [vmem:[#allocation3 + $0x148] sm:$0xff]
        %v3833 = vld [vmem:[#allocation3 + $0x150] sm:$0xff]
        %v3834 = vld [vmem:[#allocation3 + $0x158] sm:$0xff]
        %v3835 = vld [vmem:[#allocation3 + $0x160] sm:$0xff]
        %v3836 = vld [vmem:[#allocation3 + $0x168] sm:$0xff]
        %v3837 = vld [vmem:[#allocation3 + $0x170] sm:$0xff]
        %v3838 = vld [vmem:[#allocation3 + $0x178] sm:$0xff]
        %v3839 = vld [vmem:[#allocation3 + $0x180] sm:$0xff]
        %v3840 = vld [vmem:[#allocation3 + $0x188] sm:$0xff]
        %v3841 = vld [vmem:[#allocation3 + $0x190] sm:$0xff]
        %v3842 = vld [vmem:[#allocation3 + $0x198] sm:$0xff]
        %v3843 = vld [vmem:[#allocation3 + $0x1a0] sm:$0xff]
        %v3844 = vld [vmem:[#allocation3 + $0x1a8] sm:$0xff]
        %v3845 = vld [vmem:[#allocation3 + $0x1b0] sm:$0xff]
        %v3846 = vld [vmem:[#allocation3 + $0x1b8] sm:$0xff]
        %v3847 = vld [vmem:[#allocation3 + $0x1c0] sm:$0xff]
        %v3848 = vld [vmem:[#allocation3 + $0x1c8] sm:$0xff]
        %v3849 = vld [vmem:[#allocation3 + $0x1d0] sm:$0xff]
        %v3850 = vld [vmem:[#allocation3 + $0x1d8] sm:$0xff]
        %v3851 = vld [vmem:[#allocation3 + $0x1e0] sm:$0xff]
        %v3852 = vld [vmem:[#allocation3 + $0x1e8] sm:$0xff]
        %v3853 = vld [vmem:[#allocation3 + $0x1f0] sm:$0xff]
        %v3854 = vld [vmem:[#allocation3 + $0x1f8] sm:$0xff]
        %v3855 = vld [vmem:[#allocation3 + $0x200] sm:$0xff]
        %v3856 = vld [vmem:[#allocation3 + $0x208] sm:$0xff]
        %v3857 = vld [vmem:[#allocation3 + $0x210] sm:$0xff]
        %v3858 = vld [vmem:[#allocation3 + $0x218] sm:$0xff]
        %v3859 = vld [vmem:[#allocation3 + $0x220] sm:$0xff]
        %v3860 = vld [vmem:[#allocation3 + $0x228] sm:$0xff]
        %v3861 = vld [vmem:[#allocation3 + $0x230] sm:$0xff]
        %v3862 = vld [vmem:[#allocation3 + $0x238] sm:$0xff]
        %v3863 = vld [vmem:[#allocation3 + $0x240] sm:$0xff]
        %v3864 = vld [vmem:[#allocation3 + $0x248] sm:$0xff]
        %v3865 = vld [vmem:[#allocation3 + $0x250] sm:$0xff]
        %v3866 = vld [vmem:[#allocation3 + $0x258] sm:$0xff]
        %v3867 = vld [vmem:[#allocation3 + $0x260] sm:$0xff]
        %v3868 = vld [vmem:[#allocation3 + $0x268] sm:$0xff]
        %v3869 = vld [vmem:[#allocation3 + $0x270] sm:$0xff]
        %v3870 = vld [vmem:[#allocation3 + $0x278] sm:$0xff]
        %v3871 = vld [vmem:[#allocation3 + $0x280] sm:$0xff]
        %v3872 = vld [vmem:[#allocation3 + $0x288] sm:$0xff]
        %v3873 = vld [vmem:[#allocation3 + $0x290] sm:$0xff]
        %v3874 = vld [vmem:[#allocation3 + $0x298] sm:$0xff]
        %v3875 = vld [vmem:[#allocation3 + $0x2a0] sm:$0xff]
        %v3876 = vld [vmem:[#allocation3 + $0x2a8] sm:$0xff]
        %v3877 = vld [vmem:[#allocation3 + $0x2b0] sm:$0xff]
        %v3878 = vld [vmem:[#allocation3 + $0x2b8] sm:$0xff]
        %v3879 = vld [vmem:[#allocation3 + $0x2c0] sm:$0xff]
        %v3880 = vld [vmem:[#allocation3 + $0x2c8] sm:$0xff]
        %v3881 = vld [vmem:[#allocation3 + $0x2d0] sm:$0xff]
        %v3882 = vld [vmem:[#allocation3 + $0x2d8] sm:$0xff]
        %v3883 = vld [vmem:[#allocation3 + $0x2e0] sm:$0xff]
        %v3884 = vld [vmem:[#allocation3 + $0x2e8] sm:$0xff]
        %v3885 = vld [vmem:[#allocation3 + $0x2f0] sm:$0xff]
        %v3886 = vld [vmem:[#allocation3 + $0x2f8] sm:$0xff]
        %v3887 = vld [vmem:[#allocation3 + $0x300] sm:$0xff]
        %v3888 = vld [vmem:[#allocation3 + $0x308] sm:$0xff]
        %v3889 = vld [vmem:[#allocation3 + $0x310] sm:$0xff]
        %v3890 = vld [vmem:[#allocation3 + $0x318] sm:$0xff]
        %v3891 = vld [vmem:[#allocation3 + $0x320] sm:$0xff]
        %v3892 = vld [vmem:[#allocation3 + $0x328] sm:$0xff]
        %v3893 = vld [vmem:[#allocation3 + $0x330] sm:$0xff]
        %v3894 = vld [vmem:[#allocation3 + $0x338] sm:$0xff]
        %v3895 = vld [vmem:[#allocation3 + $0x340] sm:$0xf]
        %v3896 = vld [vmem:[#allocation3 + $0x348] sm:$0xf]
        %v3897 = vld [vmem:[#allocation3 + $0x350] sm:$0xf]
        %v3898 = vld [vmem:[#allocation3 + $0x358] sm:$0xf]
        %v3899 = vld [vmem:[#allocation3 + $0x360] sm:$0xf]
        %v3900 = vld [vmem:[#allocation3 + $0x368] sm:$0xf]
        %v3901 = vld [vmem:[#allocation3 + $0x370] sm:$0xf]
        %v3902 = vld [vmem:[#allocation3 + $0x378] sm:$0xf]
        %v3903 = vld [vmem:[%s4] sm:$0xf]
        %3905 = vset.pattern.permute.xlu0 0
        %3906 = vperm.xlu0 %3905, %v3903
        %v3907 = vpop.permute.xlu0 %3906
        %v3910 = vsel %vm1946, %v3790, 0
        %v3913 = vsel %vm343, %v3895, 0
        %v3916 = vsel %vm343, %v3896, 0
        %v3919 = vsel %vm343, %v3897, 0
        %v3922 = vsel %vm343, %v3898, 0
        %v3925 = vsel %vm343, %v3899, 0
        %v3928 = vsel %vm343, %v3900, 0
        %v3931 = vsel %vm343, %v3901, 0
        %v3934 = vsel %vm343, %v3902, 0
        %3936 = vmatprep.subr.mxu0 0.0
        %3937 = vmatpush1.msra.mxu0 0.0
        %3938 = vmatprep.subr.mxu0 0.0
        %3939 = vmatpush1.msra.mxu0 0.0
        %3940 = vmatprep.subr.mxu0 %v3916
        %3941 = vmatpush1.msra.mxu0 %v3913
        %3942 = vmatprep.subr.mxu0 %v3888
        %3943 = vmatpush1.msra.mxu0 %v3887
        %3944 = vmatprep.subr.mxu0 %v3880
        %3945 = vmatpush1.msra.mxu0 %v3879
        %3946 = vmatprep.subr.mxu0 %v3872
        %3947 = vmatpush1.msra.mxu0 %v3871
        %3948 = vmatprep.subr.mxu0 %v3864
        %3949 = vmatpush1.msra.mxu0 %v3863
        %3950 = vmatprep.subr.mxu0 %v3856
        %3951 = vmatpush1.msra.mxu0 %v3855
        %3952 = vmatprep.subr.mxu0 %v3848
        %3953 = vmatpush1.msra.mxu0 %v3847
        %3954 = vmatprep.subr.mxu0 %v3840
        %3955 = vmatpush1.msra.mxu0 %v3839
        %3956 = vmatprep.subr.mxu0 %v3832
        %3957 = vmatpush1.msra.mxu0 %v3831
        %3958 = vmatprep.subr.mxu0 %v3824
        %3959 = vmatpush1.msra.mxu0 %v3823
        %3960 = vmatprep.subr.mxu0 %v3816
        %3961 = vmatpush1.msra.mxu0 %v3815
        %3962 = vmatprep.subr.mxu0 %v3808
        %3963 = vmatpush1.msra.mxu0 %v3807
        %3964 = vmatprep.subr.mxu0 %v3800
        %3965 = vmatpush1.msra.mxu0 %v3799
        %3966 = vmatprep.subr.mxu0 %v3792
        %3967 = vmatpush1.msra.mxu0 %v3791
        %3968 = vmatprep.subr.mxu0 0.0
        %3969 = vmatpush2.msra.mxu0 0.0
        %3970 = vmatprep.subr.mxu0 0.0
        %3971 = vmatpush2.msra.mxu0 0.0
        %3972 = vmatprep.subr.mxu0 0.0
        %3973 = vmatpush2.msra.mxu0 0.0
        %3974 = vmatprep.subr.mxu0 0.0
        %3975 = vmatpush2.msra.mxu0 0.0
        %3976 = vmatprep.subr.mxu0 0.0
        %3977 = vmatpush2.msra.mxu0 0.0
        %3978 = vmatprep.subr.mxu0 0.0
        %3979 = vmatpush2.msra.mxu0 0.0
        %3980 = vmatprep.subr.mxu0 0.0
        %3981 = vmatpush2.msra.mxu0 0.0
        %3982 = vmatprep.subr.mxu0 0.0
        %3983 = vmatpush2.msra.mxu0 0.0
        %3984 = vmatprep.subr.mxu0 0.0
        %3985 = vmatpush2.msra.mxu0 0.0
        %3986 = vmatprep.subr.mxu0 0.0
        %3987 = vmatpush2.msra.mxu0 0.0
        %3988 = vmatprep.subr.mxu0 0.0
        %3989 = vmatpush2.msra.mxu0 0.0
        %3990 = vmatprep.subr.mxu0 0.0
        %3991 = vmatpush2.msra.mxu0 0.0
        %3992 = vmatprep.subr.mxu0 0.0
        %3993 = vmatpush2.msra.mxu0 0.0
        %3994 = vmatprep.subr.mxu0 0.0
        %3995 = vmatpush2.msra.mxu0 0.0
        %3996 = vmatprep.subr.mxu0 0.0
        %3997 = vmatpush2.msra.mxu0 0.0
        %3998 = vmatprep.subr.mxu0 0.0
        %3999 = vmatpush2.msra.mxu0 0.0
        %4000 = vmatprep.mubr.f32.mxu0 0.0
        %4001 = vmatmul.mubr.f32.gmra.mxu0 %v3910
        %v4002 = vpop.f32.mrf.mxu0
        %v4003 = vadd.f32 %v3907, %v4002
        %v4004 = vpop.f32.mrf.mxu0
        %v4005 = vadd.f32 %v3907, %v4004
        %4006 = vdwg.mxu0
        %4007 = vmatprep.subr.mxu0 0.0
        %4008 = vmatpush1.msra.mxu0 0.0
        %4009 = vmatprep.subr.mxu0 0.0
        %4010 = vmatpush1.msra.mxu0 0.0
        %4011 = vmatprep.subr.mxu0 %v3922
        %4012 = vmatpush1.msra.mxu0 %v3919
        %4013 = vmatprep.subr.mxu0 %v3890
        %4014 = vmatpush1.msra.mxu0 %v3889
        %4015 = vmatprep.subr.mxu0 %v3882
        %4016 = vmatpush1.msra.mxu0 %v3881
        %4017 = vmatprep.subr.mxu0 %v3874
        %4018 = vmatpush1.msra.mxu0 %v3873
        %4019 = vmatprep.subr.mxu0 %v3866
        %4020 = vmatpush1.msra.mxu0 %v3865
        %4021 = vmatprep.subr.mxu0 %v3858
        %4022 = vmatpush1.msra.mxu0 %v3857
        %4023 = vmatprep.subr.mxu0 %v3850
        %4024 = vmatpush1.msra.mxu0 %v3849
        %4025 = vmatprep.subr.mxu0 %v3842
        %4026 = vmatpush1.msra.mxu0 %v3841
        %4027 = vmatprep.subr.mxu0 %v3834
        %4028 = vmatpush1.msra.mxu0 %v3833
        %4029 = vmatprep.subr.mxu0 %v3826
        %4030 = vmatpush1.msra.mxu0 %v3825
        %4031 = vmatprep.subr.mxu0 %v3818
        %4032 = vmatpush1.msra.mxu0 %v3817
        %4033 = vmatprep.subr.mxu0 %v3810
        %4034 = vmatpush1.msra.mxu0 %v3809
        %4035 = vmatprep.subr.mxu0 %v3802
        %4036 = vmatpush1.msra.mxu0 %v3801
        %4037 = vmatprep.subr.mxu0 %v3794
        %4038 = vmatpush1.msra.mxu0 %v3793
        %4039 = vmatprep.subr.mxu0 0.0
        %4040 = vmatpush2.msra.mxu0 0.0
        %4041 = vmatprep.subr.mxu0 0.0
        %4042 = vmatpush2.msra.mxu0 0.0
        %4043 = vmatprep.subr.mxu0 0.0
        %4044 = vmatpush2.msra.mxu0 0.0
        %4045 = vmatprep.subr.mxu0 0.0
        %4046 = vmatpush2.msra.mxu0 0.0
        %4047 = vmatprep.subr.mxu0 0.0
        %4048 = vmatpush2.msra.mxu0 0.0
        %4049 = vmatprep.subr.mxu0 0.0
        %4050 = vmatpush2.msra.mxu0 0.0
        %4051 = vmatprep.subr.mxu0 0.0
        %4052 = vmatpush2.msra.mxu0 0.0
        %4053 = vmatprep.subr.mxu0 0.0
        %4054 = vmatpush2.msra.mxu0 0.0
        %4055 = vmatprep.subr.mxu0 0.0
        %4056 = vmatpush2.msra.mxu0 0.0
        %4057 = vmatprep.subr.mxu0 0.0
        %4058 = vmatpush2.msra.mxu0 0.0
        %4059 = vmatprep.subr.mxu0 0.0
        %4060 = vmatpush2.msra.mxu0 0.0
        %4061 = vmatprep.subr.mxu0 0.0
        %4062 = vmatpush2.msra.mxu0 0.0
        %4063 = vmatprep.subr.mxu0 0.0
        %4064 = vmatpush2.msra.mxu0 0.0
        %4065 = vmatprep.subr.mxu0 0.0
        %4066 = vmatpush2.msra.mxu0 0.0
        %4067 = vmatprep.subr.mxu0 0.0
        %4068 = vmatpush2.msra.mxu0 0.0
        %4069 = vmatprep.subr.mxu0 0.0
        %4070 = vmatpush2.msra.mxu0 0.0
        %4071 = vmatprep.mubr.f32.mxu0 0.0
        %4072 = vmatmul.mubr.f32.gmra.mxu0 %v3910
        %v4073 = vpop.f32.mrf.mxu0
        %v4074 = vadd.f32 %v3907, %v4073
        %v4075 = vpop.f32.mrf.mxu0
        %v4076 = vadd.f32 %v3907, %v4075
        %4077 = vdwg.mxu0
        %4078 = vmatprep.subr.mxu0 0.0
        %4079 = vmatpush1.msra.mxu0 0.0
        %4080 = vmatprep.subr.mxu0 0.0
        %4081 = vmatpush1.msra.mxu0 0.0
        %4082 = vmatprep.subr.mxu0 %v3928
        %4083 = vmatpush1.msra.mxu0 %v3925
        %4084 = vmatprep.subr.mxu0 %v3892
        %4085 = vmatpush1.msra.mxu0 %v3891
        %4086 = vmatprep.subr.mxu0 %v3884
        %4087 = vmatpush1.msra.mxu0 %v3883
        %4088 = vmatprep.subr.mxu0 %v3876
        %4089 = vmatpush1.msra.mxu0 %v3875
        %4090 = vmatprep.subr.mxu0 %v3868
        %4091 = vmatpush1.msra.mxu0 %v3867
        %4092 = vmatprep.subr.mxu0 %v3860
        %4093 = vmatpush1.msra.mxu0 %v3859
        %4094 = vmatprep.subr.mxu0 %v3852
        %4095 = vmatpush1.msra.mxu0 %v3851
        %4096 = vmatprep.subr.mxu0 %v3844
        %4097 = vmatpush1.msra.mxu0 %v3843
        %4098 = vmatprep.subr.mxu0 %v3836
        %4099 = vmatpush1.msra.mxu0 %v3835
        %4100 = vmatprep.subr.mxu0 %v3828
        %4101 = vmatpush1.msra.mxu0 %v3827
        %4102 = vmatprep.subr.mxu0 %v3820
        %4103 = vmatpush1.msra.mxu0 %v3819
        %4104 = vmatprep.subr.mxu0 %v3812
        %4105 = vmatpush1.msra.mxu0 %v3811
        %4106 = vmatprep.subr.mxu0 %v3804
        %4107 = vmatpush1.msra.mxu0 %v3803
        %4108 = vmatprep.subr.mxu0 %v3796
        %4109 = vmatpush1.msra.mxu0 %v3795
        %4110 = vmatprep.subr.mxu0 0.0
        %4111 = vmatpush2.msra.mxu0 0.0
        %4112 = vmatprep.subr.mxu0 0.0
        %4113 = vmatpush2.msra.mxu0 0.0
        %4114 = vmatprep.subr.mxu0 0.0
        %4115 = vmatpush2.msra.mxu0 0.0
        %4116 = vmatprep.subr.mxu0 0.0
        %4117 = vmatpush2.msra.mxu0 0.0
        %4118 = vmatprep.subr.mxu0 0.0
        %4119 = vmatpush2.msra.mxu0 0.0
        %4120 = vmatprep.subr.mxu0 0.0
        %4121 = vmatpush2.msra.mxu0 0.0
        %4122 = vmatprep.subr.mxu0 0.0
        %4123 = vmatpush2.msra.mxu0 0.0
        %4124 = vmatprep.subr.mxu0 0.0
        %4125 = vmatpush2.msra.mxu0 0.0
        %4126 = vmatprep.subr.mxu0 0.0
        %4127 = vmatpush2.msra.mxu0 0.0
        %4128 = vmatprep.subr.mxu0 0.0
        %4129 = vmatpush2.msra.mxu0 0.0
        %4130 = vmatprep.subr.mxu0 0.0
        %4131 = vmatpush2.msra.mxu0 0.0
        %4132 = vmatprep.subr.mxu0 0.0
        %4133 = vmatpush2.msra.mxu0 0.0
        %4134 = vmatprep.subr.mxu0 0.0
        %4135 = vmatpush2.msra.mxu0 0.0
        %4136 = vmatprep.subr.mxu0 0.0
        %4137 = vmatpush2.msra.mxu0 0.0
        %4138 = vmatprep.subr.mxu0 0.0
        %4139 = vmatpush2.msra.mxu0 0.0
        %4140 = vmatprep.subr.mxu0 0.0
        %4141 = vmatpush2.msra.mxu0 0.0
        %4142 = vmatprep.mubr.f32.mxu0 0.0
        %4143 = vmatmul.mubr.f32.gmra.mxu0 %v3910
        %v4144 = vpop.f32.mrf.mxu0
        %v4145 = vadd.f32 %v3907, %v4144
        %v4146 = vpop.f32.mrf.mxu0
        %v4147 = vadd.f32 %v3907, %v4146
        %4148 = vdwg.mxu0
        %4149 = vmatprep.subr.mxu0 0.0
        %4150 = vmatpush1.msra.mxu0 0.0
        %4151 = vmatprep.subr.mxu0 0.0
        %4152 = vmatpush1.msra.mxu0 0.0
        %4153 = vmatprep.subr.mxu0 %v3934
        %4154 = vmatpush1.msra.mxu0 %v3931
        %4155 = vmatprep.subr.mxu0 %v3894
        %4156 = vmatpush1.msra.mxu0 %v3893
        %4157 = vmatprep.subr.mxu0 %v3886
        %4158 = vmatpush1.msra.mxu0 %v3885
        %4159 = vmatprep.subr.mxu0 %v3878
        %4160 = vmatpush1.msra.mxu0 %v3877
        %4161 = vmatprep.subr.mxu0 %v3870
        %4162 = vmatpush1.msra.mxu0 %v3869
        %4163 = vmatprep.subr.mxu0 %v3862
        %4164 = vmatpush1.msra.mxu0 %v3861
        %4165 = vmatprep.subr.mxu0 %v3854
        %4166 = vmatpush1.msra.mxu0 %v3853
        %4167 = vmatprep.subr.mxu0 %v3846
        %4168 = vmatpush1.msra.mxu0 %v3845
        %4169 = vmatprep.subr.mxu0 %v3838
        %4170 = vmatpush1.msra.mxu0 %v3837
        %4171 = vmatprep.subr.mxu0 %v3830
        %4172 = vmatpush1.msra.mxu0 %v3829
        %4173 = vmatprep.subr.mxu0 %v3822
        %4174 = vmatpush1.msra.mxu0 %v3821
        %4175 = vmatprep.subr.mxu0 %v3814
        %4176 = vmatpush1.msra.mxu0 %v3813
        %4177 = vmatprep.subr.mxu0 %v3806
        %4178 = vmatpush1.msra.mxu0 %v3805
        %4179 = vmatprep.subr.mxu0 %v3798
        %4180 = vmatpush1.msra.mxu0 %v3797
        %4181 = vmatprep.subr.mxu0 0.0
        %4182 = vmatpush2.msra.mxu0 0.0
        %4183 = vmatprep.subr.mxu0 0.0
        %4184 = vmatpush2.msra.mxu0 0.0
        %4185 = vmatprep.subr.mxu0 0.0
        %4186 = vmatpush2.msra.mxu0 0.0
        %4187 = vmatprep.subr.mxu0 0.0
        %4188 = vmatpush2.msra.mxu0 0.0
        %4189 = vmatprep.subr.mxu0 0.0
        %4190 = vmatpush2.msra.mxu0 0.0
        %4191 = vmatprep.subr.mxu0 0.0
        %4192 = vmatpush2.msra.mxu0 0.0
        %4193 = vmatprep.subr.mxu0 0.0
        %4194 = vmatpush2.msra.mxu0 0.0
        %4195 = vmatprep.subr.mxu0 0.0
        %4196 = vmatpush2.msra.mxu0 0.0
        %4197 = vmatprep.subr.mxu0 0.0
        %4198 = vmatpush2.msra.mxu0 0.0
        %4199 = vmatprep.subr.mxu0 0.0
        %4200 = vmatpush2.msra.mxu0 0.0
        %4201 = vmatprep.subr.mxu0 0.0
        %4202 = vmatpush2.msra.mxu0 0.0
        %4203 = vmatprep.subr.mxu0 0.0
        %4204 = vmatpush2.msra.mxu0 0.0
        %4205 = vmatprep.subr.mxu0 0.0
        %4206 = vmatpush2.msra.mxu0 0.0
        %4207 = vmatprep.subr.mxu0 0.0
        %4208 = vmatpush2.msra.mxu0 0.0
        %4209 = vmatprep.subr.mxu0 0.0
        %4210 = vmatpush2.msra.mxu0 0.0
        %4211 = vmatprep.subr.mxu0 0.0
        %4212 = vmatpush2.msra.mxu0 0.0
        %4213 = vmatprep.mubr.f32.mxu0 0.0
        %4214 = vmatmul.mubr.f32.gmra.mxu0 %v3910
        %v4215 = vpop.f32.mrf.mxu0
        %v4216 = vadd.f32 %v3907, %v4215
        %v4217 = vpop.f32.mrf.mxu0
        %v4218 = vadd.f32 %v3907, %v4217
        %4219 = vdwg.mxu0
        %v4220 = vmax.f32 %v4003, 0.0
        %v4221 = vmax.f32 %v4005, 0.0
        %v4222 = vmax.f32 %v4074, 0.0
        %v4223 = vmax.f32 %v4076, 0.0
        %v4224 = vmax.f32 %v4145, 0.0
        %v4225 = vmax.f32 %v4147, 0.0
        %v4226 = vmax.f32 %v4216, 0.0
        %v4227 = vmax.f32 %v4218, 0.0
        %v4228 = vld [vmem:[%s8] sm:$0xff]
        %v4229 = vld [vmem:[%s8 + $0x8] sm:$0xff]
        %v4230 = vld [vmem:[%s8 + $0x10] sm:$0xff]
        %v4231 = vld [vmem:[%s8 + $0x18] sm:$0xff]
        %v4232 = vld [vmem:[%s8 + $0x20] sm:$0xff]
        %v4233 = vld [vmem:[%s8 + $0x28] sm:$0xff]
        %v4234 = vld [vmem:[%s8 + $0x30] sm:$0xff]
        %v4235 = vld [vmem:[%s8 + $0x38] sm:$0xff]
        %v4236 = vld [vmem:[%s8 + $0x40] sm:$0xff]
        %v4237 = vld [vmem:[%s8 + $0x48] sm:$0xff]
        %v4238 = vld [vmem:[%s8 + $0x50] sm:$0xff]
        %v4239 = vld [vmem:[%s8 + $0x58] sm:$0xff]
        %v4240 = vld [vmem:[%s8 + $0x60] sm:$0xff]
        %v4241 = vld [vmem:[%s8 + $0x68] sm:$0xff]
        %v4242 = vld [vmem:[%s8 + $0x70] sm:$0xff]
        %v4243 = vld [vmem:[%s8 + $0x78] sm:$0xff]
        %v4244 = vld [vmem:[%s8 + $0x80] sm:$0xff]
        %v4245 = vld [vmem:[%s8 + $0x88] sm:$0xff]
        %v4246 = vld [vmem:[%s8 + $0x90] sm:$0xff]
        %v4247 = vld [vmem:[%s8 + $0x98] sm:$0xff]
        %v4248 = vld [vmem:[%s8 + $0xa0] sm:$0xff]
        %v4249 = vld [vmem:[%s8 + $0xa8] sm:$0xff]
        %v4250 = vld [vmem:[%s8 + $0xb0] sm:$0xff]
        %v4251 = vld [vmem:[%s8 + $0xb8] sm:$0xff]
        %v4252 = vld [vmem:[%s8 + $0xc0] sm:$0xff]
        %v4253 = vld [vmem:[%s8 + $0xc8] sm:$0xff]
        %v4254 = vld [vmem:[%s8 + $0xd0] sm:$0xff]
        %v4255 = vld [vmem:[%s8 + $0xd8] sm:$0xff]
        %v4256 = vld [vmem:[%s8 + $0xe0] sm:$0xff]
        %v4257 = vld [vmem:[%s8 + $0xe8] sm:$0xff]
        %v4258 = vld [vmem:[%s8 + $0xf0] sm:$0xff]
        %v4259 = vld [vmem:[%s8 + $0xf8] sm:$0xff]
        %v4260 = vld [vmem:[%s8 + $0x100] sm:$0xff]
        %v4261 = vld [vmem:[%s8 + $0x108] sm:$0xff]
        %v4262 = vld [vmem:[%s8 + $0x110] sm:$0xff]
        %v4263 = vld [vmem:[%s8 + $0x118] sm:$0xff]
        %v4264 = vld [vmem:[%s8 + $0x120] sm:$0xff]
        %v4265 = vld [vmem:[%s8 + $0x128] sm:$0xff]
        %v4266 = vld [vmem:[%s8 + $0x130] sm:$0xff]
        %v4267 = vld [vmem:[%s8 + $0x138] sm:$0xff]
        %v4268 = vld [vmem:[%s8 + $0x140] sm:$0xff]
        %v4269 = vld [vmem:[%s8 + $0x148] sm:$0xff]
        %v4270 = vld [vmem:[%s8 + $0x150] sm:$0xff]
        %v4271 = vld [vmem:[%s8 + $0x158] sm:$0xff]
        %v4272 = vld [vmem:[%s8 + $0x160] sm:$0xff]
        %v4273 = vld [vmem:[%s8 + $0x168] sm:$0xff]
        %v4274 = vld [vmem:[%s8 + $0x170] sm:$0xff]
        %v4275 = vld [vmem:[%s8 + $0x178] sm:$0xff]
        %v4276 = vld [vmem:[%s8 + $0x180] sm:$0xff]
        %v4277 = vld [vmem:[%s8 + $0x188] sm:$0xff]
        %v4278 = vld [vmem:[%s8 + $0x190] sm:$0xff]
        %v4279 = vld [vmem:[%s8 + $0x198] sm:$0xff]
        %v4280 = vld [vmem:[%s8 + $0x1a0] sm:$0xff]
        %v4281 = vld [vmem:[%s8 + $0x1a8] sm:$0xff]
        %v4282 = vld [vmem:[%s8 + $0x1b0] sm:$0xff]
        %v4283 = vld [vmem:[%s8 + $0x1b8] sm:$0xff]
        %v4284 = vld [vmem:[%s8 + $0x1c0] sm:$0xff]
        %v4285 = vld [vmem:[%s8 + $0x1c8] sm:$0xff]
        %v4286 = vld [vmem:[%s8 + $0x1d0] sm:$0xff]
        %v4287 = vld [vmem:[%s8 + $0x1d8] sm:$0xff]
        %v4288 = vld [vmem:[%s8 + $0x1e0] sm:$0xff]
        %v4289 = vld [vmem:[%s8 + $0x1e8] sm:$0xff]
        %v4290 = vld [vmem:[%s8 + $0x1f0] sm:$0xff]
        %v4291 = vld [vmem:[%s8 + $0x1f8] sm:$0xff]
        %v4292 = vld [vmem:[%s8 + $0x200] sm:$0xff]
        %v4293 = vld [vmem:[%s8 + $0x208] sm:$0xff]
        %v4294 = vld [vmem:[%s8 + $0x210] sm:$0xff]
        %v4295 = vld [vmem:[%s8 + $0x218] sm:$0xff]
        %v4296 = vld [vmem:[%s8 + $0x220] sm:$0xff]
        %v4297 = vld [vmem:[%s8 + $0x228] sm:$0xff]
        %v4298 = vld [vmem:[%s8 + $0x230] sm:$0xff]
        %v4299 = vld [vmem:[%s8 + $0x238] sm:$0xff]
        %v4300 = vld [vmem:[%s8 + $0x240] sm:$0xff]
        %v4301 = vld [vmem:[%s8 + $0x248] sm:$0xff]
        %v4302 = vld [vmem:[%s8 + $0x250] sm:$0xff]
        %v4303 = vld [vmem:[%s8 + $0x258] sm:$0xff]
        %v4304 = vld [vmem:[%s8 + $0x260] sm:$0xff]
        %v4305 = vld [vmem:[%s8 + $0x268] sm:$0xff]
        %v4306 = vld [vmem:[%s8 + $0x270] sm:$0xff]
        %v4307 = vld [vmem:[%s8 + $0x278] sm:$0xff]
        %v4308 = vld [vmem:[%s8 + $0x280] sm:$0xff]
        %v4309 = vld [vmem:[%s8 + $0x288] sm:$0xff]
        %v4310 = vld [vmem:[%s8 + $0x290] sm:$0xff]
        %v4311 = vld [vmem:[%s8 + $0x298] sm:$0xff]
        %v4312 = vld [vmem:[%s8 + $0x2a0] sm:$0xff]
        %v4313 = vld [vmem:[%s8 + $0x2a8] sm:$0xff]
        %v4314 = vld [vmem:[%s8 + $0x2b0] sm:$0xff]
        %v4315 = vld [vmem:[%s8 + $0x2b8] sm:$0xff]
        %v4316 = vld [vmem:[%s8 + $0x2c0] sm:$0xff]
        %v4317 = vld [vmem:[%s8 + $0x2c8] sm:$0xff]
        %v4318 = vld [vmem:[%s8 + $0x2d0] sm:$0xff]
        %v4319 = vld [vmem:[%s8 + $0x2d8] sm:$0xff]
        %v4320 = vld [vmem:[%s8 + $0x2e0] sm:$0xff]
        %v4321 = vld [vmem:[%s8 + $0x2e8] sm:$0xff]
        %v4322 = vld [vmem:[%s8 + $0x2f0] sm:$0xff]
        %v4323 = vld [vmem:[%s8 + $0x2f8] sm:$0xff]
        %v4324 = vld [vmem:[%s8 + $0x300] sm:$0xff]
        %v4325 = vld [vmem:[%s8 + $0x308] sm:$0xff]
        %v4326 = vld [vmem:[%s8 + $0x310] sm:$0xff]
        %v4327 = vld [vmem:[%s8 + $0x318] sm:$0xff]
        %v4328 = vld [vmem:[%s8 + $0x320] sm:$0xff]
        %v4329 = vld [vmem:[%s8 + $0x328] sm:$0xff]
        %v4330 = vld [vmem:[%s8 + $0x330] sm:$0xff]
        %v4331 = vld [vmem:[%s8 + $0x338] sm:$0xff]
        %v4332 = vld [vmem:[%s8 + $0x340] sm:$0xff]
        %v4333 = vld [vmem:[%s8 + $0x348] sm:$0xff]
        %v4334 = vld [vmem:[%s8 + $0x350] sm:$0xff]
        %v4335 = vld [vmem:[%s8 + $0x358] sm:$0xff]
        %v4336 = vld [vmem:[%s8 + $0x360] sm:$0xff]
        %v4337 = vld [vmem:[%s8 + $0x368] sm:$0xff]
        %v4338 = vld [vmem:[%s8 + $0x370] sm:$0xff]
        %v4339 = vld [vmem:[%s8 + $0x378] sm:$0xff]
        %v4340 = vld [vmem:[%s8 + $0x380] sm:$0xff]
        %v4341 = vld [vmem:[%s8 + $0x388] sm:$0xff]
        %v4342 = vld [vmem:[%s8 + $0x390] sm:$0xff]
        %v4343 = vld [vmem:[%s8 + $0x398] sm:$0xff]
        %v4344 = vld [vmem:[%s8 + $0x3a0] sm:$0xff]
        %v4345 = vld [vmem:[%s8 + $0x3a8] sm:$0xff]
        %v4346 = vld [vmem:[%s8 + $0x3b0] sm:$0xff]
        %v4347 = vld [vmem:[%s8 + $0x3b8] sm:$0xff]
        %v4348 = vld [vmem:[%s8 + $0x3c0] sm:$0xff]
        %v4349 = vld [vmem:[%s8 + $0x3c8] sm:$0xff]
        %v4350 = vld [vmem:[%s8 + $0x3d0] sm:$0xff]
        %v4351 = vld [vmem:[%s8 + $0x3d8] sm:$0xff]
        %v4352 = vld [vmem:[%s8 + $0x3e0] sm:$0xff]
        %vm4353 = vcmask 850944
        %v4355 = vsel %vm4353, %v4227, 0
        %4357 = vmatprep.subr.mxu0 0.0
        %4358 = vmatpush1.msra.mxu0 %v4243
        %4359 = vmatprep.subr.mxu0 0.0
        %4360 = vmatpush1.msra.mxu0 %v4242
        %4361 = vmatprep.subr.mxu0 0.0
        %4362 = vmatpush1.msra.mxu0 %v4241
        %4363 = vmatprep.subr.mxu0 0.0
        %4364 = vmatpush1.msra.mxu0 %v4240
        %4365 = vmatprep.subr.mxu0 0.0
        %4366 = vmatpush1.msra.mxu0 %v4239
        %4367 = vmatprep.subr.mxu0 0.0
        %4368 = vmatpush1.msra.mxu0 %v4238
        %4369 = vmatprep.subr.mxu0 0.0
        %4370 = vmatpush1.msra.mxu0 %v4237
        %4371 = vmatprep.subr.mxu0 0.0
        %4372 = vmatpush1.msra.mxu0 %v4236
        %4373 = vmatprep.subr.mxu0 0.0
        %4374 = vmatpush1.msra.mxu0 %v4235
        %4375 = vmatprep.subr.mxu0 0.0
        %4376 = vmatpush1.msra.mxu0 %v4234
        %4377 = vmatprep.subr.mxu0 0.0
        %4378 = vmatpush1.msra.mxu0 %v4233
        %4379 = vmatprep.subr.mxu0 0.0
        %4380 = vmatpush1.msra.mxu0 %v4232
        %4381 = vmatprep.subr.mxu0 0.0
        %4382 = vmatpush1.msra.mxu0 %v4231
        %4383 = vmatprep.subr.mxu0 0.0
        %4384 = vmatpush1.msra.mxu0 %v4230
        %4385 = vmatprep.subr.mxu0 0.0
        %4386 = vmatpush1.msra.mxu0 %v4229
        %4387 = vmatprep.subr.mxu0 0.0
        %4388 = vmatpush1.msra.mxu0 %v4228
        %4389 = vmatprep.subr.mxu0 0.0
        %4390 = vmatpush2.msra.mxu0 %v4259
        %4391 = vmatprep.subr.mxu0 0.0
        %4392 = vmatpush2.msra.mxu0 %v4258
        %4393 = vmatprep.subr.mxu0 0.0
        %4394 = vmatpush2.msra.mxu0 %v4257
        %4395 = vmatprep.subr.mxu0 0.0
        %4396 = vmatpush2.msra.mxu0 %v4256
        %4397 = vmatprep.subr.mxu0 0.0
        %4398 = vmatpush2.msra.mxu0 %v4255
        %4399 = vmatprep.subr.mxu0 0.0
        %4400 = vmatpush2.msra.mxu0 %v4254
        %4401 = vmatprep.subr.mxu0 0.0
        %4402 = vmatpush2.msra.mxu0 %v4253
        %4403 = vmatprep.subr.mxu0 0.0
        %4404 = vmatpush2.msra.mxu0 %v4252
        %4405 = vmatprep.subr.mxu0 0.0
        %4406 = vmatpush2.msra.mxu0 %v4251
        %4407 = vmatprep.subr.mxu0 0.0
        %4408 = vmatpush2.msra.mxu0 %v4250
        %4409 = vmatprep.subr.mxu0 0.0
        %4410 = vmatpush2.msra.mxu0 %v4249
        %4411 = vmatprep.subr.mxu0 0.0
        %4412 = vmatpush2.msra.mxu0 %v4248
        %4413 = vmatprep.subr.mxu0 0.0
        %4414 = vmatpush2.msra.mxu0 %v4247
        %4415 = vmatprep.subr.mxu0 0.0
        %4416 = vmatpush2.msra.mxu0 %v4246
        %4417 = vmatprep.subr.mxu0 0.0
        %4418 = vmatpush2.msra.mxu0 %v4245
        %4419 = vmatprep.subr.mxu0 0.0
        %4420 = vmatpush2.msra.mxu0 %v4244
        %4421 = vmatprep.mubr.f32.mxu0 %v4221
        %4422 = vmatmul.mubr.f32.gmra.mxu0 %v4220
        %v4423 = vpop.f32.mrf.mxu0
        %v4424 = vadd.f32 0.0, %v4423
        %v4425 = vpop.f32.mrf.mxu0
        %4426 = vdwg.mxu0
        %4427 = vmatprep.subr.mxu0 0.0
        %4428 = vmatpush1.msra.mxu0 %v4275
        %4429 = vmatprep.subr.mxu0 0.0
        %4430 = vmatpush1.msra.mxu0 %v4274
        %4431 = vmatprep.subr.mxu0 0.0
        %4432 = vmatpush1.msra.mxu0 %v4273
        %4433 = vmatprep.subr.mxu0 0.0
        %4434 = vmatpush1.msra.mxu0 %v4272
        %4435 = vmatprep.subr.mxu0 0.0
        %4436 = vmatpush1.msra.mxu0 %v4271
        %4437 = vmatprep.subr.mxu0 0.0
        %4438 = vmatpush1.msra.mxu0 %v4270
        %4439 = vmatprep.subr.mxu0 0.0
        %4440 = vmatpush1.msra.mxu0 %v4269
        %4441 = vmatprep.subr.mxu0 0.0
        %4442 = vmatpush1.msra.mxu0 %v4268
        %4443 = vmatprep.subr.mxu0 0.0
        %4444 = vmatpush1.msra.mxu0 %v4267
        %4445 = vmatprep.subr.mxu0 0.0
        %4446 = vmatpush1.msra.mxu0 %v4266
        %4447 = vmatprep.subr.mxu0 0.0
        %4448 = vmatpush1.msra.mxu0 %v4265
        %4449 = vmatprep.subr.mxu0 0.0
        %4450 = vmatpush1.msra.mxu0 %v4264
        %4451 = vmatprep.subr.mxu0 0.0
        %4452 = vmatpush1.msra.mxu0 %v4263
        %4453 = vmatprep.subr.mxu0 0.0
        %4454 = vmatpush1.msra.mxu0 %v4262
        %4455 = vmatprep.subr.mxu0 0.0
        %4456 = vmatpush1.msra.mxu0 %v4261
        %4457 = vmatprep.subr.mxu0 0.0
        %4458 = vmatpush1.msra.mxu0 %v4260
        %4459 = vmatprep.subr.mxu0 0.0
        %4460 = vmatpush2.msra.mxu0 %v4291
        %4461 = vmatprep.subr.mxu0 0.0
        %4462 = vmatpush2.msra.mxu0 %v4290
        %4463 = vmatprep.subr.mxu0 0.0
        %4464 = vmatpush2.msra.mxu0 %v4289
        %4465 = vmatprep.subr.mxu0 0.0
        %4466 = vmatpush2.msra.mxu0 %v4288
        %4467 = vmatprep.subr.mxu0 0.0
        %4468 = vmatpush2.msra.mxu0 %v4287
        %4469 = vmatprep.subr.mxu0 0.0
        %4470 = vmatpush2.msra.mxu0 %v4286
        %4471 = vmatprep.subr.mxu0 0.0
        %4472 = vmatpush2.msra.mxu0 %v4285
        %4473 = vmatprep.subr.mxu0 0.0
        %4474 = vmatpush2.msra.mxu0 %v4284
        %4475 = vmatprep.subr.mxu0 0.0
        %4476 = vmatpush2.msra.mxu0 %v4283
        %4477 = vmatprep.subr.mxu0 0.0
        %4478 = vmatpush2.msra.mxu0 %v4282
        %4479 = vmatprep.subr.mxu0 0.0
        %4480 = vmatpush2.msra.mxu0 %v4281
        %4481 = vmatprep.subr.mxu0 0.0
        %4482 = vmatpush2.msra.mxu0 %v4280
        %4483 = vmatprep.subr.mxu0 0.0
        %4484 = vmatpush2.msra.mxu0 %v4279
        %4485 = vmatprep.subr.mxu0 0.0
        %4486 = vmatpush2.msra.mxu0 %v4278
        %4487 = vmatprep.subr.mxu0 0.0
        %4488 = vmatpush2.msra.mxu0 %v4277
        %4489 = vmatprep.subr.mxu0 0.0
        %4490 = vmatpush2.msra.mxu0 %v4276
        %4491 = vmatprep.mubr.f32.mxu0 %v4223
        %4492 = vmatmul.mubr.f32.gmra.mxu0 %v4222
        %v4493 = vpop.f32.mrf.mxu0
        %v4494 = vadd.f32 %v4424, %v4493
        %v4495 = vpop.f32.mrf.mxu0
        %4496 = vdwg.mxu0
        %4497 = vmatprep.subr.mxu0 0.0
        %4498 = vmatpush1.msra.mxu0 %v4307
        %4499 = vmatprep.subr.mxu0 0.0
        %4500 = vmatpush1.msra.mxu0 %v4306
        %4501 = vmatprep.subr.mxu0 0.0
        %4502 = vmatpush1.msra.mxu0 %v4305
        %4503 = vmatprep.subr.mxu0 0.0
        %4504 = vmatpush1.msra.mxu0 %v4304
        %4505 = vmatprep.subr.mxu0 0.0
        %4506 = vmatpush1.msra.mxu0 %v4303
        %4507 = vmatprep.subr.mxu0 0.0
        %4508 = vmatpush1.msra.mxu0 %v4302
        %4509 = vmatprep.subr.mxu0 0.0
        %4510 = vmatpush1.msra.mxu0 %v4301
        %4511 = vmatprep.subr.mxu0 0.0
        %4512 = vmatpush1.msra.mxu0 %v4300
        %4513 = vmatprep.subr.mxu0 0.0
        %4514 = vmatpush1.msra.mxu0 %v4299
        %4515 = vmatprep.subr.mxu0 0.0
        %4516 = vmatpush1.msra.mxu0 %v4298
        %4517 = vmatprep.subr.mxu0 0.0
        %4518 = vmatpush1.msra.mxu0 %v4297
        %4519 = vmatprep.subr.mxu0 0.0
        %4520 = vmatpush1.msra.mxu0 %v4296
        %4521 = vmatprep.subr.mxu0 0.0
        %4522 = vmatpush1.msra.mxu0 %v4295
        %4523 = vmatprep.subr.mxu0 0.0
        %4524 = vmatpush1.msra.mxu0 %v4294
        %4525 = vmatprep.subr.mxu0 0.0
        %4526 = vmatpush1.msra.mxu0 %v4293
        %4527 = vmatprep.subr.mxu0 0.0
        %4528 = vmatpush1.msra.mxu0 %v4292
        %4529 = vmatprep.subr.mxu0 0.0
        %4530 = vmatpush2.msra.mxu0 %v4323
        %4531 = vmatprep.subr.mxu0 0.0
        %4532 = vmatpush2.msra.mxu0 %v4322
        %4533 = vmatprep.subr.mxu0 0.0
        %4534 = vmatpush2.msra.mxu0 %v4321
        %4535 = vmatprep.subr.mxu0 0.0
        %4536 = vmatpush2.msra.mxu0 %v4320
        %4537 = vmatprep.subr.mxu0 0.0
        %4538 = vmatpush2.msra.mxu0 %v4319
        %4539 = vmatprep.subr.mxu0 0.0
        %4540 = vmatpush2.msra.mxu0 %v4318
        %4541 = vmatprep.subr.mxu0 0.0
        %4542 = vmatpush2.msra.mxu0 %v4317
        %4543 = vmatprep.subr.mxu0 0.0
        %4544 = vmatpush2.msra.mxu0 %v4316
        %4545 = vmatprep.subr.mxu0 0.0
        %4546 = vmatpush2.msra.mxu0 %v4315
        %4547 = vmatprep.subr.mxu0 0.0
        %4548 = vmatpush2.msra.mxu0 %v4314
        %4549 = vmatprep.subr.mxu0 0.0
        %4550 = vmatpush2.msra.mxu0 %v4313
        %4551 = vmatprep.subr.mxu0 0.0
        %4552 = vmatpush2.msra.mxu0 %v4312
        %4553 = vmatprep.subr.mxu0 0.0
        %4554 = vmatpush2.msra.mxu0 %v4311
        %4555 = vmatprep.subr.mxu0 0.0
        %4556 = vmatpush2.msra.mxu0 %v4310
        %4557 = vmatprep.subr.mxu0 0.0
        %4558 = vmatpush2.msra.mxu0 %v4309
        %4559 = vmatprep.subr.mxu0 0.0
        %4560 = vmatpush2.msra.mxu0 %v4308
        %4561 = vmatprep.mubr.f32.mxu0 %v4225
        %4562 = vmatmul.mubr.f32.gmra.mxu0 %v4224
        %v4563 = vpop.f32.mrf.mxu0
        %v4564 = vadd.f32 %v4494, %v4563
        %v4565 = vpop.f32.mrf.mxu0
        %4566 = vdwg.mxu0
        %4567 = vmatprep.subr.mxu0 0.0
        %4568 = vmatpush1.msra.mxu0 %v4339
        %4569 = vmatprep.subr.mxu0 0.0
        %4570 = vmatpush1.msra.mxu0 %v4338
        %4571 = vmatprep.subr.mxu0 0.0
        %4572 = vmatpush1.msra.mxu0 %v4337
        %4573 = vmatprep.subr.mxu0 0.0
        %4574 = vmatpush1.msra.mxu0 %v4336
        %4575 = vmatprep.subr.mxu0 0.0
        %4576 = vmatpush1.msra.mxu0 %v4335
        %4577 = vmatprep.subr.mxu0 0.0
        %4578 = vmatpush1.msra.mxu0 %v4334
        %4579 = vmatprep.subr.mxu0 0.0
        %4580 = vmatpush1.msra.mxu0 %v4333
        %4581 = vmatprep.subr.mxu0 0.0
        %4582 = vmatpush1.msra.mxu0 %v4332
        %4583 = vmatprep.subr.mxu0 0.0
        %4584 = vmatpush1.msra.mxu0 %v4331
        %4585 = vmatprep.subr.mxu0 0.0
        %4586 = vmatpush1.msra.mxu0 %v4330
        %4587 = vmatprep.subr.mxu0 0.0
        %4588 = vmatpush1.msra.mxu0 %v4329
        %4589 = vmatprep.subr.mxu0 0.0
        %4590 = vmatpush1.msra.mxu0 %v4328
        %4591 = vmatprep.subr.mxu0 0.0
        %4592 = vmatpush1.msra.mxu0 %v4327
        %4593 = vmatprep.subr.mxu0 0.0
        %4594 = vmatpush1.msra.mxu0 %v4326
        %4595 = vmatprep.subr.mxu0 0.0
        %4596 = vmatpush1.msra.mxu0 %v4325
        %4597 = vmatprep.subr.mxu0 0.0
        %4598 = vmatpush1.msra.mxu0 %v4324
        %4599 = vmatprep.subr.mxu0 0.0
        %4600 = vmatpush2.msra.mxu0 0.0
        %4601 = vmatprep.subr.mxu0 0.0
        %4602 = vmatpush2.msra.mxu0 0.0
        %4603 = vmatprep.subr.mxu0 0.0
        %4604 = vmatpush2.msra.mxu0 0.0
        %4605 = vmatprep.subr.mxu0 0.0
        %4606 = vmatpush2.msra.mxu0 %v4352
        %4607 = vmatprep.subr.mxu0 0.0
        %4608 = vmatpush2.msra.mxu0 %v4351
        %4609 = vmatprep.subr.mxu0 0.0
        %4610 = vmatpush2.msra.mxu0 %v4350
        %4611 = vmatprep.subr.mxu0 0.0
        %4612 = vmatpush2.msra.mxu0 %v4349
        %4613 = vmatprep.subr.mxu0 0.0
        %4614 = vmatpush2.msra.mxu0 %v4348
        %4615 = vmatprep.subr.mxu0 0.0
        %4616 = vmatpush2.msra.mxu0 %v4347
        %4617 = vmatprep.subr.mxu0 0.0
        %4618 = vmatpush2.msra.mxu0 %v4346
        %4619 = vmatprep.subr.mxu0 0.0
        %4620 = vmatpush2.msra.mxu0 %v4345
        %4621 = vmatprep.subr.mxu0 0.0
        %4622 = vmatpush2.msra.mxu0 %v4344
        %4623 = vmatprep.subr.mxu0 0.0
        %4624 = vmatpush2.msra.mxu0 %v4343
        %4625 = vmatprep.subr.mxu0 0.0
        %4626 = vmatpush2.msra.mxu0 %v4342
        %4627 = vmatprep.subr.mxu0 0.0
        %4628 = vmatpush2.msra.mxu0 %v4341
        %4629 = vmatprep.subr.mxu0 0.0
        %4630 = vmatpush2.msra.mxu0 %v4340
        %4631 = vmatprep.mubr.f32.mxu0 %v4355
        %4632 = vmatmul.mubr.f32.gmra.mxu0 %v4226
        %v4633 = vpop.f32.mrf.mxu0
        %v4634 = vadd.f32 %v4564, %v4633
        %v4635 = vpop.f32.mrf.mxu0
        %4636 = vdwg.mxu0
        %4638 = vrot.lane.b32.xlu0 %v4634, 1
        %v4639 = vpop.permute.xlu0 %4638
        %v4641 = vsel %vm1053, 0.0, %v4639
        %4642 = vrot.lane.b32.xlu0 %v4634, 127
        %v4643 = vpop.permute.xlu0 %4642
        %vm4645 = vcmask 56320
        %v4646 = vsel %vm4645, %v4643, 0.0
        %v4647 = vrot.slane %v4634, 4
        %v4649 = vsel %vm343, %v4641, %v4647
        %v4650 = vld [vmem:[%s5] sm:$0xf]
        %v4651 = vld [vmem:[%s6] sm:$0xf]
        %4653 = vset.pattern.permute.xlu0 0
        %4654 = vperm.xlu0 %4653, %v4651
        %v4655 = vpop.permute.xlu0 %4654
        %vm4657 = vcmask 97280
        %v4659 = vsel %vm4657, %v4650, 0
        %v4662 = vsel %vm343, %v4646, 0
        %4664 = vmatprep.subr.mxu0 0.0
        %4665 = vmatpush1.msra.mxu0 0.0
        %4666 = vmatprep.subr.mxu0 0.0
        %4667 = vmatpush1.msra.mxu0 0.0
        %4668 = vmatprep.subr.mxu0 0.0
        %4669 = vmatpush1.msra.mxu0 0.0
        %4670 = vmatprep.subr.mxu0 0.0
        %4671 = vmatpush1.msra.mxu0 0.0
        %4672 = vmatprep.subr.mxu0 0.0
        %4673 = vmatpush1.msra.mxu0 0.0
        %4674 = vmatprep.subr.mxu0 0.0
        %4675 = vmatpush1.msra.mxu0 0.0
        %4676 = vmatprep.subr.mxu0 0.0
        %4677 = vmatpush1.msra.mxu0 0.0
        %4678 = vmatprep.subr.mxu0 0.0
        %4679 = vmatpush1.msra.mxu0 0.0
        %4680 = vmatprep.subr.mxu0 0.0
        %4681 = vmatpush1.msra.mxu0 0.0
        %4682 = vmatprep.subr.mxu0 0.0
        %4683 = vmatpush1.msra.mxu0 0.0
        %4684 = vmatprep.subr.mxu0 0.0
        %4685 = vmatpush1.msra.mxu0 0.0
        %4686 = vmatprep.subr.mxu0 0.0
        %4687 = vmatpush1.msra.mxu0 0.0
        %4688 = vmatprep.subr.mxu0 0.0
        %4689 = vmatpush1.msra.mxu0 0.0
        %4690 = vmatprep.subr.mxu0 0.0
        %4691 = vmatpush1.msra.mxu0 0.0
        %4692 = vmatprep.subr.mxu0 0.0
        %4693 = vmatpush1.msra.mxu0 %v4662
        %4694 = vmatprep.subr.mxu0 0.0
        %4695 = vmatpush1.msra.mxu0 %v4649
        %4696 = vmatprep.subr.mxu0 0.0
        %4697 = vmatpush2.msra.mxu0 0.0
        %4698 = vmatprep.subr.mxu0 0.0
        %4699 = vmatpush2.msra.mxu0 0.0
        %4700 = vmatprep.subr.mxu0 0.0
        %4701 = vmatpush2.msra.mxu0 0.0
        %4702 = vmatprep.subr.mxu0 0.0
        %4703 = vmatpush2.msra.mxu0 0.0
        %4704 = vmatprep.subr.mxu0 0.0
        %4705 = vmatpush2.msra.mxu0 0.0
        %4706 = vmatprep.subr.mxu0 0.0
        %4707 = vmatpush2.msra.mxu0 0.0
        %4708 = vmatprep.subr.mxu0 0.0
        %4709 = vmatpush2.msra.mxu0 0.0
        %4710 = vmatprep.subr.mxu0 0.0
        %4711 = vmatpush2.msra.mxu0 0.0
        %4712 = vmatprep.subr.mxu0 0.0
        %4713 = vmatpush2.msra.mxu0 0.0
        %4714 = vmatprep.subr.mxu0 0.0
        %4715 = vmatpush2.msra.mxu0 0.0
        %4716 = vmatprep.subr.mxu0 0.0
        %4717 = vmatpush2.msra.mxu0 0.0
        %4718 = vmatprep.subr.mxu0 0.0
        %4719 = vmatpush2.msra.mxu0 0.0
        %4720 = vmatprep.subr.mxu0 0.0
        %4721 = vmatpush2.msra.mxu0 0.0
        %4722 = vmatprep.subr.mxu0 0.0
        %4723 = vmatpush2.msra.mxu0 0.0
        %4724 = vmatprep.subr.mxu0 0.0
        %4725 = vmatpush2.msra.mxu0 0.0
        %4726 = vmatprep.subr.mxu0 0.0
        %4727 = vmatpush2.msra.mxu0 0.0
        %4728 = vmatprep.mubr.f32.mxu0 0.0
        %4729 = vmatmul.mubr.f32.gmra.mxu0 %v4659
        %v4730 = vpop.f32.mrf.mxu0
        %v4731 = vadd.f32 %v4655, %v4730
        %v4732 = vpop.f32.mrf.mxu0
        %4733 = vdwg.mxu0
        %vm4734 = vcmask 60416
        %v4735 = vsel %vm4734, %v4731, -inf
        %v4736 = vrot.slane %v4735, 4
        %v4737 = vmax.f32 %v4735, %v4736
        %v4738 = vrot.slane %v4737, 2
        %v4739 = vmax.f32 %v4737, %v4738
        %v4740 = vrot.slane %v4739, 1
        %v4741 = vmax.f32 %v4739, %v4740
        %v4742 = vsub.f32 %v4731, %v4741
        %v4743 = vmul.f32 %v4742, 1.442695
        %v4744 = vpow.pop %v4743
        %v4745 = vsel %vm4734, %v4744, 0.0
        %v4746 = vrot.slane %v4745, 4
        %v4747 = vadd.f32 %v4745, %v4746
        %v4748 = vrot.slane %v4747, 2
        %v4749 = vadd.f32 %v4747, %v4748
        %v4750 = vrot.slane %v4749, 1
        %v4751 = vadd.f32 %v4749, %v4750
        %v4752 = vrcp.pop %v4751
        %v4753 = vmul.f32 %v4751, %v4752
        %v4754 = vsub.f32 2.0, %v4753
        %v4755 = vmul.f32 %v4752, %v4754
        %v4756 = vmul.f32 %v4744, %v4755
        %4757 = vst.msk [vmem:[%s325] sm:$0xf] %vm4734, %v4756
        %s4758 = sand.u32 %s225, 1
        %s4759 = scalar_lea.sflag [#allocation5], %s4758
        %s4760 = sand.u32 %s225, 1
        %s4761 = smul.addr %s4760, 4
        %s4762 = scalar_lea.vmem [#allocation4], %s4761
        // Predicated region
        $region57: #{tpu_custom_call.1} parent=55 // pred_check
          %p4763 = pneg %p235
        $region58: #{tpu_custom_call.1} parent=55 // pred_check_branch
          %4765 = sbr.rel (%p4763) target = $region60
        $region59: #{tpu_custom_call.1} parent=55 // pred_region
          %s4767 = ssub.s32 64, 64
          %4768 = vsyncadd %s4759, %s4767
          %s4769 = smul.addr %s23, 64
          %s4770 = scalar_lea.hbm %s9, %s4769
          %s4772 = sshll.u32 %s4762, 4
          %s4773 = int_to_ptr.vmem [resolvable:$true] %s4772
          %4775 = dma.vmem_to_hbm [thread:$0]  %s4773, 64, %s4770, %s4759
        $region60: #{tpu_custom_call.1} parent=55 // pred_fallthru
          _
      $region56: #{tpu_custom_call.1} parent=5 // pred_fallthru
        _
      %p4776 = scmp.le.s32.totalorder 2, %s18
      // Predicated region
      $region61: #{tpu_custom_call.1} parent=5 // pred_check
        %p4777 = pneg %p4776
      $region62: #{tpu_custom_call.1} parent=5 // pred_check_branch
        %4779 = sbr.rel (%p4777) target = $region64
      $region63: #{tpu_custom_call.1} parent=5 // pred_region
        %s4780 = ssub.s32 %s18, 2
        // Predicated region
        $region65: #{tpu_custom_call.1} parent=63 // pred_check
          %p4781 = pneg %p241
        $region66: #{tpu_custom_call.1} parent=63 // pred_check_branch
          %4783 = sbr.rel (%p4781) target = $region68
        $region67: #{tpu_custom_call.1} parent=63 // pred_region
          %s4784 = sand.u32 %s226, 1
          %s4785 = scalar_lea.sflag [#allocation5], %s4784
          %s4786 = sand.u32 %s226, 1
          %s4787 = smul.addr %s4786, 4
          %s4788 = scalar_lea.vmem [#allocation4], %s4787
          %4789 = dma.done %s4785, 64
        $region68: #{tpu_custom_call.1} parent=63 // pred_fallthru
          _
      $region64: #{tpu_custom_call.1} parent=5 // pred_fallthru
        _
    $region6: #{tpu_custom_call.1} parent=1 // loop_footer
      %s22 = sadd.s32 1, %s18
    $region7: #{tpu_custom_call.1} parent=1 // loop_footer_branch
      %17 = sbr.rel target = $region3
    $region8: #{tpu_custom_call.1} parent=1 // loop_exit
      _
    %4790 = vsyncpa [#allocation5], 1
    %s4791 = scalar_lea.sflag [#allocation5], 1
    %4792 = vsyncpa %s4791, 1

</llo_original>
